<compile_context>
chip_gen: v7x
topology: tpu7x:2x2x1
jax: 0.10.0
libtpu: 0.0.40
codegen_flags: <defaults>
</compile_context>

<pallas_src>
import math
import numpy as np
import jax
import jax.numpy as jnp
from jax.experimental import pallas as pl
from jax.experimental.pallas import tpu as pltpu

# ---------------- problem sizes (consistent with the module) ----------------
N_PLAYERS = 4                                   # len(env.players_all)
N_SINS = 10
P2 = N_PLAYERS + 2                              # players + dribbler + receiver
N_IN_PPM = N_PLAYERS + 6 + N_SINS * 2 * 4       # 90
N_IN_MAIN = 5 + 10 * P2                         # 65
N_OUT_MAIN = 2 * N_PLAYERS                      # 8
LANES = 128

CONFIG = dict(shot_clock_max=24.0, n_offensive_players=2, n_defensive_players=2)


# ---------------------------- parameter init --------------------------------
def init_linear(key, n_in, n_out):
    # torch.nn.Linear-style uniform(-1/sqrt(fan_in), 1/sqrt(fan_in)); stored [in, out]
    bound = 1.0 / math.sqrt(n_in)
    kw, kb = jax.random.split(key)
    w = jax.random.uniform(kw, (n_in, n_out), jnp.float32, -bound, bound)
    b = jax.random.uniform(kb, (1, n_out), jnp.float32, -bound, bound)
    return w, b


def make_params(key):
    keys = jax.random.split(key, 7)
    w1, b1 = init_linear(keys[0], N_IN_PPM, 50)
    w2, b2 = init_linear(keys[1], 50, 32)
    w3, b3 = init_linear(keys[2], 32, 16)
    w4, b4 = init_linear(keys[3], 16, 10)
    wm1, bm1 = init_linear(keys[4], N_IN_MAIN, 50)
    wm2, bm2 = init_linear(keys[5], 50, 25)
    wm3, bm3 = init_linear(keys[6], 25, N_OUT_MAIN)
    return dict(w1=w1, b1=b1, w2=w2, b2=b2, w3=w3, b3=b3, w4=w4, b4=b4,
                wm1=wm1, bm1=bm1, wm2=wm2, bm2=bm2, wm3=wm3, bm3=bm3)


# ------------------- pack all weights into one VMEM slab ---------------------
def pack_slab(params):
    """Pack every weight/bias into a single [R, 128] bf16 slab (one DMA).

    Each block's row start is 8-aligned so in-kernel static slices stay
    sublane-aligned.  The final linear of ProcessPlayerModule (w4, b4) is
    algebraically folded into the per-player split of wm1 (no nonlinearity
    between them), and wm3/bm3 are read with the full 128-lane width so the
    output store is lane-dense.
    """
    w4 = np.asarray(params['w4'], np.float32)          # [16, 10]
    b4 = np.asarray(params['b4'], np.float32)          # [1, 10]
    wm1 = np.asarray(params['wm1'], np.float32)        # [65, 50]
    bm1 = np.asarray(params['bm1'], np.float32)        # [1, 50]

    entries = [('w1', params['w1']), ('b1', params['b1']),
               ('w2', params['w2']), ('b2', params['b2']),
               ('w3', params['w3']), ('b3', params['b3'])]
    bm1_merged = bm1.copy()
    for p in range(P2):
        wp = wm1[p * 10:(p + 1) * 10]                  # [10, 50]
        entries.append((f'wp{p}', w4 @ wp))            # folded [16, 50]
        bm1_merged = bm1_merged + b4 @ wp              # fold b4 into bm1
    entries += [('wo', wm1[P2 * 10:]), ('bm1', bm1_merged),
                ('wm2', params['wm2']), ('bm2', params['bm2']),
                ('wm3', params['wm3']), ('bm3', params['bm3'])]

    offsets, blocks, row = {}, [], 0
    for name, arr in entries:
        arr = np.asarray(arr, np.float32)
        r, c = arr.shape
        offsets[name] = (row, r, c)
        blocks.append((row, arr))
        row += ((r + 7) // 8) * 8                      # 8-align the next block
    total_rows = ((row + 7) // 8) * 8
    slab = np.zeros((total_rows, LANES), np.float32)
    for r0, arr in blocks:
        slab[r0:r0 + arr.shape[0], :arr.shape[1]] = arr

    # wm3 / bm3 are read lane-dense: full 128 columns (zeros past column 8),
    # so the kernel's final matmul + store are unmasked.
    r0, nr, _ = offsets['wm3']; offsets['wm3'] = (r0, nr, LANES)
    r0, nr, _ = offsets['bm3']; offsets['bm3'] = (r0, nr, LANES)
    return jnp.asarray(slab, dtype=jnp.bfloat16), offsets


# ---------------------------- Pallas kernel ----------------------------------
def build_offense_forward(offsets, slab_shape, tb):
    def W(w_ref, name):
        r, nr, nc = offsets[name]                      # static Python ints
        return w_ref[r:r + nr, 0:nc]

    def kernel(pi_ref, oi_ref, w_ref, out_ref):
        f32, bf16 = jnp.float32, jnp.bfloat16
        w1, b1 = W(w_ref, 'w1'), W(w_ref, 'b1')
        w2, b2 = W(w_ref, 'w2'), W(w_ref, 'b2')
        w3, b3 = W(w_ref, 'w3'), W(w_ref, 'b3')

        # Shared ProcessPlayer layers: stack P2 players along M (free
        # leading-dim collapse: [P2, tb, 90] -> [P2*tb, 90]) so each weight
        # is pushed to the MXU exactly once per tile.
        x = pi_ref[...].reshape(P2 * tb, N_IN_PPM)                    # bf16
        h = jnp.tanh(jnp.dot(x, w1, preferred_element_type=f32) + b1)
        h = jnp.tanh(jnp.dot(h.astype(bf16), w2,
                             preferred_element_type=f32) + b2)
        h = jnp.tanh(jnp.dot(h.astype(bf16), w3,
                             preferred_element_type=f32) + b3)
        h = h.astype(bf16).reshape(P2, tb, 16)

        # Main-MLP layer 1: other_info contribution + (folded) bias  [tb, 50]
        acc = jnp.dot(oi_ref[...], W(w_ref, 'wo'),
                      preferred_element_type=f32) + W(w_ref, 'bm1')
        # Folded per-player tails (w4 @ wm1_p), accumulated in f32.
        for p in range(P2):
            acc = acc + jnp.dot(h[p], W(w_ref, f'wp{p}'),
                                preferred_element_type=f32)           # [tb, 50]

        h2 = jnp.tanh(acc)
        h2 = jnp.tanh(jnp.dot(h2.astype(bf16), W(w_ref, 'wm2'),
                              preferred_element_type=f32) + W(w_ref, 'bm2'))
        # Lane-dense output: wm3/bm3 are full-128-lane (zero-padded) blocks.
        out_ref[...] = (jnp.dot(h2.astype(bf16), W(w_ref, 'wm3'),
                                preferred_element_type=f32) + W(w_ref, 'bm3'))

    def forward(pi_pm, oi, slab):
        # pi_pm: [P2, B, 90] bf16 (player-major), oi: [B, 5] bf16
        b_total = pi_pm.shape[1]
        pad = (-b_total) % tb
        if pad:   # TODO(synk): choose B divisible by tb to avoid this pad copy
            pi_pm = jnp.pad(pi_pm, ((0, 0), (0, pad), (0, 0)))
            oi = jnp.pad(oi, ((0, pad), (0, 0)))
        bp = b_total + pad
        grid = (bp // tb,)

        flops = bp * (2 * P2 * (N_IN_PPM * 50 + 50 * 32 + 32 * 16)
                      + 2 * P2 * 16 * 50 + 2 * 5 * 50
                      + 2 * 50 * 25 + 2 * 25 * LANES)
        transc = bp * (P2 * (50 + 32 + 16) + 50 + 25)
        bytes_acc = (pi_pm.size * 2 + oi.size * 2
                     + slab_shape[0] * slab_shape[1] * 2 * grid[0]
                     + bp * LANES * 4)

        out = pl.pallas_call(
            kernel,
            out_shape=jax.ShapeDtypeStruct((bp, LANES), jnp.float32),
            grid=grid,
            in_specs=[
                pl.BlockSpec((P2, tb, N_IN_PPM), lambda b: (0, b, 0)),
                pl.BlockSpec((tb, 5), lambda b: (b, 0)),
                pl.BlockSpec(slab_shape, lambda b: (0, 0)),   # weights resident
            ],
            out_specs=pl.BlockSpec((tb, LANES), lambda b: (b, 0)),
            compiler_params=pltpu.CompilerParams(
                dimension_semantics=("parallel",)),
            cost_estimate=pl.CostEstimate(flops=int(flops),
                                          transcendentals=int(transc),
                                          bytes_accessed=int(bytes_acc)),
        )(pi_pm, oi, slab)
        return out[:b_total, :N_OUT_MAIN]

    return forward


# ------------------ calc_nn_input (batched, jit-safe glue) -------------------
def calc_nn_input_batched(shot_clock, posvels, dribbling, dribbler, receiver,
                          has_receiver, pass_elapsed, pass_total):
    """Vectorised calc_nn_input, produced directly in player-major layout
    ([P2, B, 90]) so no full-feature-tensor transpose is needed before the
    kernel DMA.  All control flow is jnp.where, so it lives in the same jit
    as the pallas_call."""
    B = shot_clock.shape[0]
    scm = CONFIG['shot_clock_max']
    time_stamp = (shot_clock - scm / 2.0) / (scm / 2.0)                    # [B]

    p_team = jnp.zeros((N_PLAYERS, 2), jnp.float32)
    p_team = p_team.at[:CONFIG['n_offensive_players'], 0].set(1.0)
    p_team = p_team.at[CONFIG['n_defensive_players']:, 1].set(1.0)
    p_idx = jnp.eye(N_PLAYERS, dtype=jnp.float32)
    const = jnp.concatenate([p_team, p_idx], axis=1)                       # [N, 6]
    const_nm = jnp.broadcast_to(const[:, None, :], (N_PLAYERS, B, 6))

    pv_nm = jnp.transpose(posvels, (1, 0, 2, 3))                           # [N, B, 2, 2] (tiny)
    p_pos = (pv_nm[:, :, 0, :] / 7.5).astype(jnp.float32)                  # [N, B, 2]
    p_vel = (pv_nm[:, :, 1, :] / 2.95).astype(jnp.float32)
    coefs = jnp.arange(1, N_SINS + 1, dtype=jnp.float32)
    arg_pos = p_pos[..., None] * (jnp.pi / 2.0) * coefs                    # [N, B, 2, S]
    arg_vel = p_vel[..., None] * (jnp.pi / 2.0) * coefs
    sin_pos = jnp.sin(arg_pos).reshape(N_PLAYERS, B, 2 * N_SINS)
    cos_pos = jnp.cos(arg_pos).reshape(N_PLAYERS, B, 2 * N_SINS)
    # NOTE: original module uses .cos() for sin_vel as well (reproduced verbatim)
    sin_vel = jnp.cos(arg_vel).reshape(N_PLAYERS, B, 2 * N_SINS)
    cos_vel = jnp.cos(arg_vel).reshape(N_PLAYERS, B, 2 * N_SINS)

    player_info = jnp.concatenate(
        [const_nm, p_pos, p_vel, sin_pos, cos_pos, sin_vel, cos_vel], axis=-1)  # [N, B, 90]

    bidx = jnp.arange(B)
    v_dribbler = player_info[dribbler, bidx]                               # [B, 90]
    recv_safe = jnp.where(has_receiver, receiver, 0)
    v_receiver = jnp.where(has_receiver[:, None],
                           player_info[recv_safe, bidx], 0.0)              # [B, 90]
    player_full = jnp.concatenate(
        [player_info, v_dribbler[None], v_receiver[None]], axis=0)         # [P2, B, 90]

    drib_f = dribbling.astype(jnp.float32)
    safe_total = jnp.where(pass_total > 0, pass_total, 1.0)
    pass_progress = jnp.where(dribbling, 0.0, pass_elapsed / safe_total) * 2.0 - 1.0
    pass_total_o = jnp.where(dribbling, 0.0, pass_total)
    v_dribbling = jnp.stack([1.0 - drib_f, drib_f], axis=-1)               # eye(2)[int(d)]
    other_info = jnp.concatenate(
        [time_stamp[:, None], v_dribbling,
         pass_progress[:, None], pass_total_o[:, None]], axis=1)           # [B, 5]
    return player_full, other_info


def make_offense_net(params, tb=256):
    slab, offsets = pack_slab(params)
    pallas_forward = build_offense_forward(offsets, slab.shape, tb)

    @jax.jit
    def calc_action_batched(shot_clock, posvels, dribbling, dribbler,
                            receiver, has_receiver, pass_elapsed, pass_total):
        player_pm, other_info = calc_nn_input_batched(
            shot_clock, posvels, dribbling, dribbler, receiver,
            has_receiver, pass_elapsed, pass_total)
        out = pallas_forward(player_pm.astype(jnp.bfloat16),
                             other_info.astype(jnp.bfloat16), slab)        # [B, 8]
        return out.reshape(-1, N_PLAYERS, 2)                               # accs per state

    return calc_action_batched


# ------------------------------ reference ------------------------------------
def reference(player_info, other_info, params):
    # player_info: [B, P2, 90] f32, other_info: [B, 5] f32 (un-split wm1, f32)
    h = jnp.tanh(player_info @ params['w1'] + params['b1'])
    h = jnp.tanh(h @ params['w2'] + params['b2'])
    h = jnp.tanh(h @ params['w3'] + params['b3'])
    proc = h @ params['w4'] + params['b4']                                 # [B, P2, 10]
    info = jnp.concatenate([proc.reshape(proc.shape[0], -1), other_info], axis=1)
    h2 = jnp.tanh(info @ params['wm1'] + params['bm1'])
    h2 = jnp.tanh(h2 @ params['wm2'] + params['bm2'])
    out = h2 @ params['wm3'] + params['bm3']
    return out.reshape(-1, N_PLAYERS, 2)


# -------------------------------- main ----------------------------------------
if __name__ == "__main__":
    key = jax.random.PRNGKey(0)
    k_params, k_pos, k_vel, k_sc = jax.random.split(key, 4)

    params = make_params(k_params)
    B = 256                        # batch of environment states
    TB = 128                       # keeps grid=(2,) so both v7x TCs get work;
                                   # raise to 256-512 for larger B
    calc_action_batched = make_offense_net(params, tb=TB)

    # deterministic synthetic batched game state
    pos = jax.random.uniform(k_pos, (B, N_PLAYERS, 1, 2), jnp.float32, -7.5, 7.5)
    vel = jax.random.uniform(k_vel, (B, N_PLAYERS, 1, 2), jnp.float32, -2.95, 2.95)
    posvels = jnp.concatenate([pos, vel], axis=2)                          # [B, N, 2, 2]
    shot_clock = jax.random.uniform(k_sc, (B,), jnp.float32, 0.0, 24.0)
    idx = jnp.arange(B)
    dribbling = (idx % 2 == 0)
    dribbler = (idx % N_PLAYERS).astype(jnp.int32)
    receiver = ((idx + 1) % N_PLAYERS).astype(jnp.int32)
    has_receiver = ~dribbling                       # receiver only exists mid-pass
    pass_elapsed = jnp.where(dribbling, 0.0, 0.3).astype(jnp.float32)
    pass_total = jnp.where(dribbling, 1.0, 0.9).astype(jnp.float32)

    accs = calc_action_batched(shot_clock, posvels, dribbling, dribbler,
                               receiver, has_receiver, pass_elapsed, pass_total)
    accs = jax.block_until_ready(accs)

    # pure-JAX f32 reference over the identical feature path (un-split wm1)
    player_pm, other_info = calc_nn_input_batched(
        shot_clock, posvels, dribbling, dribbler, receiver, has_receiver,
        pass_elapsed, pass_total)
    player_bm = jnp.transpose(player_pm, (1, 0, 2))                        # [B, P2, 90]
    ref = reference(player_bm, other_info, params)

    assert accs.shape == (B, N_PLAYERS, 2)
    # tolerance covers bf16 matmul operands (accumulation is f32); structural
    # bugs would be orders of magnitude larger
    np.testing.assert_allclose(np.asarray(accs), np.asarray(ref),
                               atol=2e-2, rtol=2e-2)

    print("KERNEL_OK")
</pallas_src>

<mosaic_0001>
module attributes {stable_mosaic.version = 11 : i64} {
  func.func @kernel(%arg0: i32, %arg1: memref<6x128x90xbf16, #tpu.memory_space<vmem>>, %arg2: memref<128x5xbf16, #tpu.memory_space<vmem>>, %arg3: memref<424x128xbf16, #tpu.memory_space<vmem>>, %arg4: memref<128x128xf32, #tpu.memory_space<vmem>>) attributes {dimension_semantics = [#tpu.dimension_semantics<parallel>], iteration_bounds = array<i64: 2>, scalar_prefetch = 0 : i64, scratch_operands = 0 : i64, tpu.core_type = #tpu.core_type<tc>, window_params = [{transform_indices = @transform_0, window_bounds = array<i64: 6, 128, 90>}, {transform_indices = @transform_1, window_bounds = array<i64: 128, 5>}, {pipeline_mode = #tpu.pipeline_mode<synchronous>, transform_indices = @transform_2, window_bounds = array<i64: 424, 128>}, {transform_indices = @transform_3, window_bounds = array<i64: 128, 128>}]} {
    %c0 = arith.constant 0 : index
    %c0_0 = arith.constant 0 : index
    %0 = vector.load %arg3[%c0, %c0_0] : memref<424x128xbf16, #tpu.memory_space<vmem>>, vector<90x50xbf16>
    %c96 = arith.constant 96 : index
    %c0_1 = arith.constant 0 : index
    %1 = vector.load %arg3[%c96, %c0_1] : memref<424x128xbf16, #tpu.memory_space<vmem>>, vector<1x50xbf16>
    %c104 = arith.constant 104 : index
    %c0_2 = arith.constant 0 : index
    %2 = vector.load %arg3[%c104, %c0_2] : memref<424x128xbf16, #tpu.memory_space<vmem>>, vector<50x32xbf16>
    %c160 = arith.constant 160 : index
    %c0_3 = arith.constant 0 : index
    %3 = vector.load %arg3[%c160, %c0_3] : memref<424x128xbf16, #tpu.memory_space<vmem>>, vector<1x32xbf16>
    %c168 = arith.constant 168 : index
    %c0_4 = arith.constant 0 : index
    %4 = vector.load %arg3[%c168, %c0_4] : memref<424x128xbf16, #tpu.memory_space<vmem>>, vector<32x16xbf16>
    %c200 = arith.constant 200 : index
    %c0_5 = arith.constant 0 : index
    %5 = vector.load %arg3[%c200, %c0_5] : memref<424x128xbf16, #tpu.memory_space<vmem>>, vector<1x16xbf16>
    %c0_6 = arith.constant 0 : index
    %c0_7 = arith.constant 0 : index
    %c0_8 = arith.constant 0 : index
    %6 = vector.load %arg1[%c0_6, %c0_7, %c0_8] : memref<6x128x90xbf16, #tpu.memory_space<vmem>>, vector<6x128x90xbf16>
    %7 = vector.shape_cast %6 : vector<6x128x90xbf16> to vector<768x90xbf16>
    %cst = arith.constant dense<0.000000e+00> : vector<768x50xf32>
    %8 = tpu.matmul %7, %0, %cst {dimension_numbers = #tpu.dot_dimension_numbers<[1], [0], [0], [1], [0, 0, 1, 1], [], []>} : vector<768x90xbf16>, vector<90x50xbf16>, vector<768x50xf32> -> vector<768x50xf32>
    %9 = arith.extf %1 : vector<1x50xbf16> to vector<1x50xf32>
    %10 = vector.broadcast %9 : vector<1x50xf32> to vector<768x50xf32>
    %11 = arith.addf %8, %10 : vector<768x50xf32>
    %12 = math.tanh %11 : vector<768x50xf32>
    %13 = arith.truncf %12 : vector<768x50xf32> to vector<768x50xbf16>
    %cst_9 = arith.constant dense<0.000000e+00> : vector<768x32xf32>
    %14 = tpu.matmul %13, %2, %cst_9 {dimension_numbers = #tpu.dot_dimension_numbers<[1], [0], [0], [1], [0, 0, 1, 1], [], []>} : vector<768x50xbf16>, vector<50x32xbf16>, vector<768x32xf32> -> vector<768x32xf32>
    %15 = arith.extf %3 : vector<1x32xbf16> to vector<1x32xf32>
    %16 = vector.broadcast %15 : vector<1x32xf32> to vector<768x32xf32>
    %17 = arith.addf %14, %16 : vector<768x32xf32>
    %18 = math.tanh %17 : vector<768x32xf32>
    %19 = arith.truncf %18 : vector<768x32xf32> to vector<768x32xbf16>
    %cst_10 = arith.constant dense<0.000000e+00> : vector<768x16xf32>
    %20 = tpu.matmul %19, %4, %cst_10 {dimension_numbers = #tpu.dot_dimension_numbers<[1], [0], [0], [1], [0, 0, 1, 1], [], []>} : vector<768x32xbf16>, vector<32x16xbf16>, vector<768x16xf32> -> vector<768x16xf32>
    %21 = arith.extf %5 : vector<1x16xbf16> to vector<1x16xf32>
    %22 = vector.broadcast %21 : vector<1x16xf32> to vector<768x16xf32>
    %23 = arith.addf %20, %22 : vector<768x16xf32>
    %24 = math.tanh %23 : vector<768x16xf32>
    %25 = arith.truncf %24 : vector<768x16xf32> to vector<768x16xbf16>
    %26 = vector.shape_cast %25 : vector<768x16xbf16> to vector<6x128x16xbf16>
    %c0_11 = arith.constant 0 : index
    %c0_12 = arith.constant 0 : index
    %27 = vector.load %arg2[%c0_11, %c0_12] : memref<128x5xbf16, #tpu.memory_space<vmem>>, vector<128x5xbf16>
    %c304 = arith.constant 304 : index
    %c0_13 = arith.constant 0 : index
    %28 = vector.load %arg3[%c304, %c0_13] : memref<424x128xbf16, #tpu.memory_space<vmem>>, vector<5x50xbf16>
    %cst_14 = arith.constant dense<0.000000e+00> : vector<128x50xf32>
    %29 = tpu.matmul %27, %28, %cst_14 {dimension_numbers = #tpu.dot_dimension_numbers<[1], [0], [0], [1], [0, 0, 1, 1], [], []>} : vector<128x5xbf16>, vector<5x50xbf16>, vector<128x50xf32> -> vector<128x50xf32>
    %c312 = arith.constant 312 : index
    %c0_15 = arith.constant 0 : index
    %30 = vector.load %arg3[%c312, %c0_15] : memref<424x128xbf16, #tpu.memory_space<vmem>>, vector<1x50xbf16>
    %31 = arith.extf %30 : vector<1x50xbf16> to vector<1x50xf32>
    %32 = vector.broadcast %31 : vector<1x50xf32> to vector<128x50xf32>
    %33 = arith.addf %29, %32 : vector<128x50xf32>
    %34 = vector.extract_strided_slice %26 {offsets = [0, 0, 0], sizes = [1, 128, 16], strides = [1, 1, 1]} : vector<6x128x16xbf16> to vector<1x128x16xbf16>
    %35 = vector.shape_cast %34 : vector<1x128x16xbf16> to vector<128x16xbf16>
    %c208 = arith.constant 208 : index
    %c0_16 = arith.constant 0 : index
    %36 = vector.load %arg3[%c208, %c0_16] : memref<424x128xbf16, #tpu.memory_space<vmem>>, vector<16x50xbf16>
    %cst_17 = arith.constant dense<0.000000e+00> : vector<128x50xf32>
    %37 = tpu.matmul %35, %36, %cst_17 {dimension_numbers = #tpu.dot_dimension_numbers<[1], [0], [0], [1], [0, 0, 1, 1], [], []>} : vector<128x16xbf16>, vector<16x50xbf16>, vector<128x50xf32> -> vector<128x50xf32>
    %38 = arith.addf %33, %37 : vector<128x50xf32>
    %39 = vector.extract_strided_slice %26 {offsets = [1, 0, 0], sizes = [1, 128, 16], strides = [1, 1, 1]} : vector<6x128x16xbf16> to vector<1x128x16xbf16>
    %40 = vector.shape_cast %39 : vector<1x128x16xbf16> to vector<128x16xbf16>
    %c224 = arith.constant 224 : index
    %c0_18 = arith.constant 0 : index
    %41 = vector.load %arg3[%c224, %c0_18] : memref<424x128xbf16, #tpu.memory_space<vmem>>, vector<16x50xbf16>
    %cst_19 = arith.constant dense<0.000000e+00> : vector<128x50xf32>
    %42 = tpu.matmul %40, %41, %cst_19 {dimension_numbers = #tpu.dot_dimension_numbers<[1], [0], [0], [1], [0, 0, 1, 1], [], []>} : vector<128x16xbf16>, vector<16x50xbf16>, vector<128x50xf32> -> vector<128x50xf32>
    %43 = arith.addf %38, %42 : vector<128x50xf32>
    %44 = vector.extract_strided_slice %26 {offsets = [2, 0, 0], sizes = [1, 128, 16], strides = [1, 1, 1]} : vector<6x128x16xbf16> to vector<1x128x16xbf16>
    %45 = vector.shape_cast %44 : vector<1x128x16xbf16> to vector<128x16xbf16>
    %c240 = arith.constant 240 : index
    %c0_20 = arith.constant 0 : index
    %46 = vector.load %arg3[%c240, %c0_20] : memref<424x128xbf16, #tpu.memory_space<vmem>>, vector<16x50xbf16>
    %cst_21 = arith.constant dense<0.000000e+00> : vector<128x50xf32>
    %47 = tpu.matmul %45, %46, %cst_21 {dimension_numbers = #tpu.dot_dimension_numbers<[1], [0], [0], [1], [0, 0, 1, 1], [], []>} : vector<128x16xbf16>, vector<16x50xbf16>, vector<128x50xf32> -> vector<128x50xf32>
    %48 = arith.addf %43, %47 : vector<128x50xf32>
    %49 = vector.extract_strided_slice %26 {offsets = [3, 0, 0], sizes = [1, 128, 16], strides = [1, 1, 1]} : vector<6x128x16xbf16> to vector<1x128x16xbf16>
    %50 = vector.shape_cast %49 : vector<1x128x16xbf16> to vector<128x16xbf16>
    %c256 = arith.constant 256 : index
    %c0_22 = arith.constant 0 : index
    %51 = vector.load %arg3[%c256, %c0_22] : memref<424x128xbf16, #tpu.memory_space<vmem>>, vector<16x50xbf16>
    %cst_23 = arith.constant dense<0.000000e+00> : vector<128x50xf32>
    %52 = tpu.matmul %50, %51, %cst_23 {dimension_numbers = #tpu.dot_dimension_numbers<[1], [0], [0], [1], [0, 0, 1, 1], [], []>} : vector<128x16xbf16>, vector<16x50xbf16>, vector<128x50xf32> -> vector<128x50xf32>
    %53 = arith.addf %48, %52 : vector<128x50xf32>
    %54 = vector.extract_strided_slice %26 {offsets = [4, 0, 0], sizes = [1, 128, 16], strides = [1, 1, 1]} : vector<6x128x16xbf16> to vector<1x128x16xbf16>
    %55 = vector.shape_cast %54 : vector<1x128x16xbf16> to vector<128x16xbf16>
    %c272 = arith.constant 272 : index
    %c0_24 = arith.constant 0 : index
    %56 = vector.load %arg3[%c272, %c0_24] : memref<424x128xbf16, #tpu.memory_space<vmem>>, vector<16x50xbf16>
    %cst_25 = arith.constant dense<0.000000e+00> : vector<128x50xf32>
    %57 = tpu.matmul %55, %56, %cst_25 {dimension_numbers = #tpu.dot_dimension_numbers<[1], [0], [0], [1], [0, 0, 1, 1], [], []>} : vector<128x16xbf16>, vector<16x50xbf16>, vector<128x50xf32> -> vector<128x50xf32>
    %58 = arith.addf %53, %57 : vector<128x50xf32>
    %59 = vector.extract_strided_slice %26 {offsets = [5, 0, 0], sizes = [1, 128, 16], strides = [1, 1, 1]} : vector<6x128x16xbf16> to vector<1x128x16xbf16>
    %60 = vector.shape_cast %59 : vector<1x128x16xbf16> to vector<128x16xbf16>
    %c288 = arith.constant 288 : index
    %c0_26 = arith.constant 0 : index
    %61 = vector.load %arg3[%c288, %c0_26] : memref<424x128xbf16, #tpu.memory_space<vmem>>, vector<16x50xbf16>
    %cst_27 = arith.constant dense<0.000000e+00> : vector<128x50xf32>
    %62 = tpu.matmul %60, %61, %cst_27 {dimension_numbers = #tpu.dot_dimension_numbers<[1], [0], [0], [1], [0, 0, 1, 1], [], []>} : vector<128x16xbf16>, vector<16x50xbf16>, vector<128x50xf32> -> vector<128x50xf32>
    %63 = arith.addf %58, %62 : vector<128x50xf32>
    %64 = math.tanh %63 : vector<128x50xf32>
    %65 = arith.truncf %64 : vector<128x50xf32> to vector<128x50xbf16>
    %c320 = arith.constant 320 : index
    %c0_28 = arith.constant 0 : index
    %66 = vector.load %arg3[%c320, %c0_28] : memref<424x128xbf16, #tpu.memory_space<vmem>>, vector<50x25xbf16>
    %cst_29 = arith.constant dense<0.000000e+00> : vector<128x25xf32>
    %67 = tpu.matmul %65, %66, %cst_29 {dimension_numbers = #tpu.dot_dimension_numbers<[1], [0], [0], [1], [0, 0, 1, 1], [], []>} : vector<128x50xbf16>, vector<50x25xbf16>, vector<128x25xf32> -> vector<128x25xf32>
    %c376 = arith.constant 376 : index
    %c0_30 = arith.constant 0 : index
    %68 = vector.load %arg3[%c376, %c0_30] : memref<424x128xbf16, #tpu.memory_space<vmem>>, vector<1x25xbf16>
    %69 = arith.extf %68 : vector<1x25xbf16> to vector<1x25xf32>
    %70 = vector.broadcast %69 : vector<1x25xf32> to vector<128x25xf32>
    %71 = arith.addf %67, %70 : vector<128x25xf32>
    %72 = math.tanh %71 : vector<128x25xf32>
    %73 = arith.truncf %72 : vector<128x25xf32> to vector<128x25xbf16>
    %c384 = arith.constant 384 : index
    %c0_31 = arith.constant 0 : index
    %74 = vector.load %arg3[%c384, %c0_31] : memref<424x128xbf16, #tpu.memory_space<vmem>>, vector<25x128xbf16>
    %cst_32 = arith.constant dense<0.000000e+00> : vector<128x128xf32>
    %75 = tpu.matmul %73, %74, %cst_32 {dimension_numbers = #tpu.dot_dimension_numbers<[1], [0], [0], [1], [0, 0, 1, 1], [], []>} : vector<128x25xbf16>, vector<25x128xbf16>, vector<128x128xf32> -> vector<128x128xf32>
    %c416 = arith.constant 416 : index
    %c0_33 = arith.constant 0 : index
    %76 = vector.load %arg3[%c416, %c0_33] : memref<424x128xbf16, #tpu.memory_space<vmem>>, vector<1x128xbf16>
    %77 = arith.extf %76 : vector<1x128xbf16> to vector<1x128xf32>
    %78 = vector.broadcast %77 : vector<1x128xf32> to vector<128x128xf32>
    %79 = arith.addf %75, %78 : vector<128x128xf32>
    %c0_34 = arith.constant 0 : index
    %c0_35 = arith.constant 0 : index
    %80 = vector.load %arg4[%c0_34, %c0_35] : memref<128x128xf32, #tpu.memory_space<vmem>>, vector<128x128xf32>
    tpu.vector_store %arg4[%c0_34, %c0_35], %79 {strides = array<i32>} : memref<128x128xf32, #tpu.memory_space<vmem>>, vector<128x128xf32>,
    return
  }
  func.func @transform_0(%arg0: i32) -> (i32, i32, i32) {
    %c0_i32 = arith.constant 0 : i32
    %c0_i32_0 = arith.constant 0 : i32
    %c0_i32_1 = arith.constant 0 : i32
    return %c0_i32, %arg0, %c0_i32_0 : i32, i32, i32
  }
  func.func @transform_1(%arg0: i32) -> (i32, i32) {
    %c0_i32 = arith.constant 0 : i32
    %c0_i32_0 = arith.constant 0 : i32
    return %arg0, %c0_i32 : i32, i32
  }
  func.func @transform_2(%arg0: i32) -> (i32, i32) {
    %c0_i32 = arith.constant 0 : i32
    %c0_i32_0 = arith.constant 0 : i32
    %c0_i32_1 = arith.constant 0 : i32
    return %c0_i32, %c0_i32_0 : i32, i32
  }
  func.func @transform_3(%arg0: i32) -> (i32, i32) {
    %c0_i32 = arith.constant 0 : i32
    %c0_i32_0 = arith.constant 0 : i32
    return %arg0, %c0_i32 : i32, i32
  }
}

</mosaic_0001>

<llo_original>
// kernel: calc_action_batched.1
$region0: #{calc_action_batched.1}
  #allocation0 [shape = 'u32[]', space=smem, size = 0x4, offset = 0x4, fixed_abs, tag = 'smem constant byte address 0x4 - core index']
  #allocation1 [shape = 'u32[144,128]{1,0:T(1,128)}', space=vmem, size = 0x12000, scoped, tag = 'internal scratch']
  %s0 = inlined_call_operand.vmem [shape: bf16[6,256,90], index: 0, kind: input, shape index: {}]
  %s1 = inlined_call_operand.vmem [shape: bf16[256,5], index: 1, kind: input, shape index: {}]
  %s2 = inlined_call_operand.vmem [shape: bf16[424,128], index: 2, kind: input, shape index: {}]
  %s3 = inlined_call_operand.vmem [shape: f32[256,128], index: 3, kind: output, shape index: {}]
  %s4 = sld [smem:[#allocation0]]
  $region86: #{calc_action_batched.1} parent=0
    _
  %s6 = ssub.s32 1, %s4
  %s7 = scalar_select 0, %s6, %s4
  $region1: #{calc_action_batched.1} parent=0
    #allocation2 [shape = 'u8[393216]{0}', space=vmem, size = 0x60000, scoped, tag = 'input window, operand 0']
    loop: start=0, step=1, limit=4
    $region2: #{calc_action_batched.1} parent=1 // loop_pre_header
      _
    $region3: #{calc_action_batched.1} parent=1 // loop_header
      %s9 = sphi 0, %s13
      %p10 = scmp.ge.s32.totalorder %s9, 4
      %s19 = sphi 0, %s21
      %s22 = sphi 0, %s19
      %s23 = sphi 0, %s22
      %s39 = sphi 0, %s23
      %s45 = sphi 0, %s47
      %s48 = sphi 0, %s45
      %s49 = sphi 0, %s48
      %s65 = sphi 0, %s49
      %s69 = sphi 0, %s69
      %s71 = sphi 0, %s69
      %s72 = sphi 0, %s71
      %s86 = sphi 0, %s72
      %s92 = sphi 0, %s94
      %s95 = sphi 0, %s92
      %s96 = sphi 0, %s95
      %s112 = sphi 0, %s96
    $region4: #{calc_action_batched.1} parent=1 // loop_header_branch
      %12 = sbr.rel (%p10) target = $region8
    $region5: #{calc_action_batched.1} parent=1 // loop_body
      %s14 = ssub.s32 %s9, 1
      %s15 = ssub.s32 %s9, 2
      %s16 = sadd.s32 %s9, 1
      %s17 = ssub.s32 %s9, %s16
      %p18 = scmp.eq.s32.totalorder %s17, 0
      %s20 = sadd.s32 %s19, 1
      %s21 = scalar_select %p18, %s19, %s20
      %p24 = pneg %p18
      %p25 = scmp.eq.s32.totalorder %s9, 1
      %p26 = por %p24, %p25
      %p27 = scmp.ne.s32.totalorder %s19, %s22
      %p28 = scmp.eq.s32.totalorder %s9, 0
      %p29 = por %p27, %p28
      %p30 = scmp.ne.s32.totalorder %s19, %s22
      %p31 = scmp.eq.s32.totalorder %s14, 1
      %p32 = por %p30, %p31
      %p33 = scmp.ne.s32.totalorder %s22, %s23
      %p34 = scmp.eq.s32.totalorder %s14, 0
      %p35 = por %p33, %p34
      %p36 = scmp.ne.s32.totalorder %s22, %s23
      %p37 = scmp.eq.s32.totalorder %s15, 1
      %p38 = por %p36, %p37
      %p40 = scmp.ne.s32.totalorder %s23, %s39
      %p41 = scmp.eq.s32.totalorder %s15, 0
      %p42 = por %p40, %p41
      %s43 = ssub.s32 %s9, %s16
      %p44 = scmp.eq.s32.totalorder %s43, 0
      %s46 = sadd.s32 %s45, 1
      %s47 = scalar_select %p44, %s45, %s46
      %p50 = pneg %p44
      %p51 = scmp.eq.s32.totalorder %s9, 1
      %p52 = por %p50, %p51
      %p53 = scmp.ne.s32.totalorder %s45, %s48
      %p54 = scmp.eq.s32.totalorder %s9, 0
      %p55 = por %p53, %p54
      %p56 = scmp.ne.s32.totalorder %s45, %s48
      %p57 = scmp.eq.s32.totalorder %s14, 1
      %p58 = por %p56, %p57
      %p59 = scmp.ne.s32.totalorder %s48, %s49
      %p60 = scmp.eq.s32.totalorder %s14, 0
      %p61 = por %p59, %p60
      %p62 = scmp.ne.s32.totalorder %s48, %s49
      %p63 = scmp.eq.s32.totalorder %s15, 1
      %p64 = por %p62, %p63
      %p66 = scmp.ne.s32.totalorder %s49, %s65
      %p67 = scmp.eq.s32.totalorder %s15, 0
      %p68 = por %p66, %p67
      %s70 = sadd.s32 %s69, 1
      %p73 = scmp.eq.s32.totalorder %s9, 1
      %p74 = scmp.ne.s32.totalorder %s69, %s71
      %p75 = scmp.eq.s32.totalorder %s9, 0
      %p76 = por %p74, %p75
      %p77 = scmp.ne.s32.totalorder %s69, %s71
      %p78 = scmp.eq.s32.totalorder %s14, 1
      %p79 = por %p77, %p78
      %p80 = scmp.ne.s32.totalorder %s71, %s72
      %p81 = scmp.eq.s32.totalorder %s14, 0
      %p82 = por %p80, %p81
      %p83 = scmp.ne.s32.totalorder %s71, %s72
      %p84 = scmp.eq.s32.totalorder %s15, 1
      %p85 = por %p83, %p84
      %p87 = scmp.ne.s32.totalorder %s72, %s86
      %p88 = scmp.eq.s32.totalorder %s15, 0
      %p89 = por %p87, %p88
      %s90 = ssub.s32 %s9, %s16
      %p91 = scmp.eq.s32.totalorder %s90, 0
      %s93 = sadd.s32 %s92, 1
      %s94 = scalar_select %p91, %s92, %s93
      %p97 = pneg %p91
      %p98 = scmp.eq.s32.totalorder %s9, 1
      %p99 = por %p97, %p98
      %p100 = scmp.ne.s32.totalorder %s92, %s95
      %p101 = scmp.eq.s32.totalorder %s9, 0
      %p102 = por %p100, %p101
      %p103 = scmp.ne.s32.totalorder %s92, %s95
      %p104 = scmp.eq.s32.totalorder %s14, 1
      %p105 = por %p103, %p104
      %p106 = scmp.ne.s32.totalorder %s95, %s96
      %p107 = scmp.eq.s32.totalorder %s14, 0
      %p108 = por %p106, %p107
      %p109 = scmp.ne.s32.totalorder %s95, %s96
      %p110 = scmp.eq.s32.totalorder %s15, 1
      %p111 = por %p109, %p110
      %p113 = scmp.ne.s32.totalorder %s96, %s112
      %p114 = scmp.eq.s32.totalorder %s15, 0
      %p115 = por %p113, %p114
      %p116 = scmp.le.s32.totalorder 1, %s9
      %p117 = scmp.lt.s32.totalorder %s9, 3
      %p118 = pnand %p116, %p117
      %p119 = pneg %p118
      // Predicated region
      $region9: #{calc_action_batched.1} parent=5 // pred_check
        _
      $region10: #{calc_action_batched.1} parent=5 // pred_check_branch
        %121 = sbr.rel (%p118) target = $region12
      $region11: #{calc_action_batched.1} parent=5 // pred_region
        %s122 = ssub.s32 %s9, 1
        // Predicated region
        $region13: #{calc_action_batched.1} parent=11 // pred_check
          %p123 = pneg %p82
        $region14: #{calc_action_batched.1} parent=11 // pred_check_branch
          %125 = sbr.rel (%p123) target = $region16
        $region15: #{calc_action_batched.1} parent=11 // pred_region
          _
        $region16: #{calc_action_batched.1} parent=11 // pred_fallthru
          _
      $region12: #{calc_action_batched.1} parent=5 // pred_fallthru
        _
      %p126 = scmp.lt.s32.totalorder %s9, 2
      // Predicated region
      $region17: #{calc_action_batched.1} parent=5 // pred_check
        %p127 = pneg %p126
      $region18: #{calc_action_batched.1} parent=5 // pred_check_branch
        %129 = sbr.rel (%p127) target = $region20
      $region19: #{calc_action_batched.1} parent=5 // pred_region
        // Predicated region
        $region21: #{calc_action_batched.1} parent=19 // pred_check
          %p130 = pneg %p29
        $region22: #{calc_action_batched.1} parent=19 // pred_check_branch
          %132 = sbr.rel (%p130) target = $region24
        $region23: #{calc_action_batched.1} parent=19 // pred_region
          %s133 = sand.u32 %s19, 1
          %s134 = sand.u32 %s19, 1
          %s135 = smul.addr %s134, 384
          %s136 = scalar_lea.vmem [#allocation2], %s135
          %s137 = smul.u32 16, %s9
          %s138 = smul.addr %s137, 4
          %s139 = scalar_lea.vmem %s0, %s138
          // Predicated region
          $region25: #{calc_action_batched.1} parent=23 // pred_check
            _
          $region26: #{calc_action_batched.1} parent=23 // pred_check_branch
            %141 = sbr.rel (0) target = $region28
          $region27: #{calc_action_batched.1} parent=23 // pred_region
            // Predicated region
            $region29: #{calc_action_batched.1} parent=27 // pred_check
              _
            $region30: #{calc_action_batched.1} parent=27 // pred_check_branch
              %143 = sbr.rel target = $region32
            $region31: #{calc_action_batched.1} parent=27 // pred_region
              // Predicated region
              $region44: #{calc_action_batched.1} parent=31 // pred_check
                _
              $region45: #{calc_action_batched.1} parent=31 // pred_check_branch
                %348 = sbr.rel (0) target = $region47
              $region46: #{calc_action_batched.1} parent=31 // pred_region
                loop: start=0, step=1, limit=1
                $region48: #{calc_action_batched.1} parent=46 // loop_pre_header
                  _
                $region49: #{calc_action_batched.1} parent=46 // loop_header
                  %s350 = sphi 0, %s354
                  %p351 = scmp.ge.s32.totalorder %s350, 1
                  %s355 = sphi %s139, %s139
                  %s356 = sphi %s136, %s136
                $region50: #{calc_action_batched.1} parent=46 // loop_header_branch
                  %353 = sbr.rel (%p351) target = $region54
                $region51: #{calc_action_batched.1} parent=46 // loop_body
                  _
                $region52: #{calc_action_batched.1} parent=46 // loop_footer
                  %s354 = sadd.s32 1, %s350
                $region53: #{calc_action_batched.1} parent=46 // loop_footer_branch
                  %349 = sbr.rel target = $region49
                $region54: #{calc_action_batched.1} parent=46 // loop_exit
                  _
                loop: start=0, step=1, limit=1
                $region55: #{calc_action_batched.1} parent=46 // loop_pre_header
                  _
                $region56: #{calc_action_batched.1} parent=46 // loop_header
                  %s359 = sphi 0, %s363
                  %p360 = scmp.ge.s32.totalorder %s359, 1
                  %s364 = sphi %s139, %s139
                  %s365 = sphi %s136, %s136
                $region57: #{calc_action_batched.1} parent=46 // loop_header_branch
                  %362 = sbr.rel (%p360) target = $region61
                $region58: #{calc_action_batched.1} parent=46 // loop_body
                  %v366 = vld [vmem:[%s364] sm:$0xf]
                  %367 = vst [vmem:[%s365] sm:$0xf] %v366
                  %v368 = vld [vmem:[%s364 + $0x4] sm:$0xf]
                  %369 = vst [vmem:[%s365 + $0x4] sm:$0xf] %v368
                  %v370 = vld [vmem:[%s364 + $0x8] sm:$0xf]
                  %371 = vst [vmem:[%s365 + $0x8] sm:$0xf] %v370
                  %v372 = vld [vmem:[%s364 + $0xc] sm:$0xf]
                  %373 = vst [vmem:[%s365 + $0xc] sm:$0xf] %v372
                  %v374 = vld [vmem:[%s364 + $0x10] sm:$0xf]
                  %375 = vst [vmem:[%s365 + $0x10] sm:$0xf] %v374
                  %v376 = vld [vmem:[%s364 + $0x14] sm:$0xf]
                  %377 = vst [vmem:[%s365 + $0x14] sm:$0xf] %v376
                  %v378 = vld [vmem:[%s364 + $0x18] sm:$0xf]
                  %379 = vst [vmem:[%s365 + $0x18] sm:$0xf] %v378
                  %v380 = vld [vmem:[%s364 + $0x1c] sm:$0xf]
                  %381 = vst [vmem:[%s365 + $0x1c] sm:$0xf] %v380
                  %v382 = vld [vmem:[%s364 + $0x20] sm:$0xf]
                  %383 = vst [vmem:[%s365 + $0x20] sm:$0xf] %v382
                  %v384 = vld [vmem:[%s364 + $0x24] sm:$0xf]
                  %385 = vst [vmem:[%s365 + $0x24] sm:$0xf] %v384
                  %v386 = vld [vmem:[%s364 + $0x28] sm:$0xf]
                  %387 = vst [vmem:[%s365 + $0x28] sm:$0xf] %v386
                  %v388 = vld [vmem:[%s364 + $0x2c] sm:$0xf]
                  %389 = vst [vmem:[%s365 + $0x2c] sm:$0xf] %v388
                  %v390 = vld [vmem:[%s364 + $0x30] sm:$0xf]
                  %391 = vst [vmem:[%s365 + $0x30] sm:$0xf] %v390
                  %v392 = vld [vmem:[%s364 + $0x34] sm:$0xf]
                  %393 = vst [vmem:[%s365 + $0x34] sm:$0xf] %v392
                  %v394 = vld [vmem:[%s364 + $0x38] sm:$0xf]
                  %395 = vst [vmem:[%s365 + $0x38] sm:$0xf] %v394
                  %v396 = vld [vmem:[%s364 + $0x3c] sm:$0xf]
                  %397 = vst [vmem:[%s365 + $0x3c] sm:$0xf] %v396
                  %v398 = vld [vmem:[%s364 + $0x80] sm:$0xf]
                  %399 = vst [vmem:[%s365 + $0x40] sm:$0xf] %v398
                  %v400 = vld [vmem:[%s364 + $0x84] sm:$0xf]
                  %401 = vst [vmem:[%s365 + $0x44] sm:$0xf] %v400
                  %v402 = vld [vmem:[%s364 + $0x88] sm:$0xf]
                  %403 = vst [vmem:[%s365 + $0x48] sm:$0xf] %v402
                  %v404 = vld [vmem:[%s364 + $0x8c] sm:$0xf]
                  %405 = vst [vmem:[%s365 + $0x4c] sm:$0xf] %v404
                  %v406 = vld [vmem:[%s364 + $0x90] sm:$0xf]
                  %407 = vst [vmem:[%s365 + $0x50] sm:$0xf] %v406
                  %v408 = vld [vmem:[%s364 + $0x94] sm:$0xf]
                  %409 = vst [vmem:[%s365 + $0x54] sm:$0xf] %v408
                  %v410 = vld [vmem:[%s364 + $0x98] sm:$0xf]
                  %411 = vst [vmem:[%s365 + $0x58] sm:$0xf] %v410
                  %v412 = vld [vmem:[%s364 + $0x9c] sm:$0xf]
                  %413 = vst [vmem:[%s365 + $0x5c] sm:$0xf] %v412
                  %v414 = vld [vmem:[%s364 + $0xa0] sm:$0xf]
                  %415 = vst [vmem:[%s365 + $0x60] sm:$0xf] %v414
                  %v416 = vld [vmem:[%s364 + $0xa4] sm:$0xf]
                  %417 = vst [vmem:[%s365 + $0x64] sm:$0xf] %v416
                  %v418 = vld [vmem:[%s364 + $0xa8] sm:$0xf]
                  %419 = vst [vmem:[%s365 + $0x68] sm:$0xf] %v418
                  %v420 = vld [vmem:[%s364 + $0xac] sm:$0xf]
                  %421 = vst [vmem:[%s365 + $0x6c] sm:$0xf] %v420
                  %v422 = vld [vmem:[%s364 + $0xb0] sm:$0xf]
                  %423 = vst [vmem:[%s365 + $0x70] sm:$0xf] %v422
                  %v424 = vld [vmem:[%s364 + $0xb4] sm:$0xf]
                  %425 = vst [vmem:[%s365 + $0x74] sm:$0xf] %v424
                  %v426 = vld [vmem:[%s364 + $0xb8] sm:$0xf]
                  %427 = vst [vmem:[%s365 + $0x78] sm:$0xf] %v426
                  %v428 = vld [vmem:[%s364 + $0xbc] sm:$0xf]
                  %429 = vst [vmem:[%s365 + $0x7c] sm:$0xf] %v428
                  %v430 = vld [vmem:[%s364 + $0x100] sm:$0xf]
                  %431 = vst [vmem:[%s365 + $0x80] sm:$0xf] %v430
                  %v432 = vld [vmem:[%s364 + $0x104] sm:$0xf]
                  %433 = vst [vmem:[%s365 + $0x84] sm:$0xf] %v432
                  %v434 = vld [vmem:[%s364 + $0x108] sm:$0xf]
                  %435 = vst [vmem:[%s365 + $0x88] sm:$0xf] %v434
                  %v436 = vld [vmem:[%s364 + $0x10c] sm:$0xf]
                  %437 = vst [vmem:[%s365 + $0x8c] sm:$0xf] %v436
                  %v438 = vld [vmem:[%s364 + $0x110] sm:$0xf]
                  %439 = vst [vmem:[%s365 + $0x90] sm:$0xf] %v438
                  %v440 = vld [vmem:[%s364 + $0x114] sm:$0xf]
                  %441 = vst [vmem:[%s365 + $0x94] sm:$0xf] %v440
                  %v442 = vld [vmem:[%s364 + $0x118] sm:$0xf]
                  %443 = vst [vmem:[%s365 + $0x98] sm:$0xf] %v442
                  %v444 = vld [vmem:[%s364 + $0x11c] sm:$0xf]
                  %445 = vst [vmem:[%s365 + $0x9c] sm:$0xf] %v444
                  %v446 = vld [vmem:[%s364 + $0x120] sm:$0xf]
                  %447 = vst [vmem:[%s365 + $0xa0] sm:$0xf] %v446
                  %v448 = vld [vmem:[%s364 + $0x124] sm:$0xf]
                  %449 = vst [vmem:[%s365 + $0xa4] sm:$0xf] %v448
                  %v450 = vld [vmem:[%s364 + $0x128] sm:$0xf]
                  %451 = vst [vmem:[%s365 + $0xa8] sm:$0xf] %v450
                  %v452 = vld [vmem:[%s364 + $0x12c] sm:$0xf]
                  %453 = vst [vmem:[%s365 + $0xac] sm:$0xf] %v452
                  %v454 = vld [vmem:[%s364 + $0x130] sm:$0xf]
                  %455 = vst [vmem:[%s365 + $0xb0] sm:$0xf] %v454
                  %v456 = vld [vmem:[%s364 + $0x134] sm:$0xf]
                  %457 = vst [vmem:[%s365 + $0xb4] sm:$0xf] %v456
                  %v458 = vld [vmem:[%s364 + $0x138] sm:$0xf]
                  %459 = vst [vmem:[%s365 + $0xb8] sm:$0xf] %v458
                  %v460 = vld [vmem:[%s364 + $0x13c] sm:$0xf]
                  %461 = vst [vmem:[%s365 + $0xbc] sm:$0xf] %v460
                  %v462 = vld [vmem:[%s364 + $0x180] sm:$0xf]
                  %463 = vst [vmem:[%s365 + $0xc0] sm:$0xf] %v462
                  %v464 = vld [vmem:[%s364 + $0x184] sm:$0xf]
                  %465 = vst [vmem:[%s365 + $0xc4] sm:$0xf] %v464
                  %v466 = vld [vmem:[%s364 + $0x188] sm:$0xf]
                  %467 = vst [vmem:[%s365 + $0xc8] sm:$0xf] %v466
                  %v468 = vld [vmem:[%s364 + $0x18c] sm:$0xf]
                  %469 = vst [vmem:[%s365 + $0xcc] sm:$0xf] %v468
                  %v470 = vld [vmem:[%s364 + $0x190] sm:$0xf]
                  %471 = vst [vmem:[%s365 + $0xd0] sm:$0xf] %v470
                  %v472 = vld [vmem:[%s364 + $0x194] sm:$0xf]
                  %473 = vst [vmem:[%s365 + $0xd4] sm:$0xf] %v472
                  %v474 = vld [vmem:[%s364 + $0x198] sm:$0xf]
                  %475 = vst [vmem:[%s365 + $0xd8] sm:$0xf] %v474
                  %v476 = vld [vmem:[%s364 + $0x19c] sm:$0xf]
                  %477 = vst [vmem:[%s365 + $0xdc] sm:$0xf] %v476
                  %v478 = vld [vmem:[%s364 + $0x1a0] sm:$0xf]
                  %479 = vst [vmem:[%s365 + $0xe0] sm:$0xf] %v478
                  %v480 = vld [vmem:[%s364 + $0x1a4] sm:$0xf]
                  %481 = vst [vmem:[%s365 + $0xe4] sm:$0xf] %v480
                  %v482 = vld [vmem:[%s364 + $0x1a8] sm:$0xf]
                  %483 = vst [vmem:[%s365 + $0xe8] sm:$0xf] %v482
                  %v484 = vld [vmem:[%s364 + $0x1ac] sm:$0xf]
                  %485 = vst [vmem:[%s365 + $0xec] sm:$0xf] %v484
                  %v486 = vld [vmem:[%s364 + $0x1b0] sm:$0xf]
                  %487 = vst [vmem:[%s365 + $0xf0] sm:$0xf] %v486
                  %v488 = vld [vmem:[%s364 + $0x1b4] sm:$0xf]
                  %489 = vst [vmem:[%s365 + $0xf4] sm:$0xf] %v488
                  %v490 = vld [vmem:[%s364 + $0x1b8] sm:$0xf]
                  %491 = vst [vmem:[%s365 + $0xf8] sm:$0xf] %v490
                  %v492 = vld [vmem:[%s364 + $0x1bc] sm:$0xf]
                  %493 = vst [vmem:[%s365 + $0xfc] sm:$0xf] %v492
                  %v494 = vld [vmem:[%s364 + $0x200] sm:$0xf]
                  %495 = vst [vmem:[%s365 + $0x100] sm:$0xf] %v494
                  %v496 = vld [vmem:[%s364 + $0x204] sm:$0xf]
                  %497 = vst [vmem:[%s365 + $0x104] sm:$0xf] %v496
                  %v498 = vld [vmem:[%s364 + $0x208] sm:$0xf]
                  %499 = vst [vmem:[%s365 + $0x108] sm:$0xf] %v498
                  %v500 = vld [vmem:[%s364 + $0x20c] sm:$0xf]
                  %501 = vst [vmem:[%s365 + $0x10c] sm:$0xf] %v500
                  %v502 = vld [vmem:[%s364 + $0x210] sm:$0xf]
                  %503 = vst [vmem:[%s365 + $0x110] sm:$0xf] %v502
                  %v504 = vld [vmem:[%s364 + $0x214] sm:$0xf]
                  %505 = vst [vmem:[%s365 + $0x114] sm:$0xf] %v504
                  %v506 = vld [vmem:[%s364 + $0x218] sm:$0xf]
                  %507 = vst [vmem:[%s365 + $0x118] sm:$0xf] %v506
                  %v508 = vld [vmem:[%s364 + $0x21c] sm:$0xf]
                  %509 = vst [vmem:[%s365 + $0x11c] sm:$0xf] %v508
                  %v510 = vld [vmem:[%s364 + $0x220] sm:$0xf]
                  %511 = vst [vmem:[%s365 + $0x120] sm:$0xf] %v510
                  %v512 = vld [vmem:[%s364 + $0x224] sm:$0xf]
                  %513 = vst [vmem:[%s365 + $0x124] sm:$0xf] %v512
                  %v514 = vld [vmem:[%s364 + $0x228] sm:$0xf]
                  %515 = vst [vmem:[%s365 + $0x128] sm:$0xf] %v514
                  %v516 = vld [vmem:[%s364 + $0x22c] sm:$0xf]
                  %517 = vst [vmem:[%s365 + $0x12c] sm:$0xf] %v516
                  %v518 = vld [vmem:[%s364 + $0x230] sm:$0xf]
                  %519 = vst [vmem:[%s365 + $0x130] sm:$0xf] %v518
                  %v520 = vld [vmem:[%s364 + $0x234] sm:$0xf]
                  %521 = vst [vmem:[%s365 + $0x134] sm:$0xf] %v520
                  %v522 = vld [vmem:[%s364 + $0x238] sm:$0xf]
                  %523 = vst [vmem:[%s365 + $0x138] sm:$0xf] %v522
                  %v524 = vld [vmem:[%s364 + $0x23c] sm:$0xf]
                  %525 = vst [vmem:[%s365 + $0x13c] sm:$0xf] %v524
                  %v526 = vld [vmem:[%s364 + $0x280] sm:$0xf]
                  %527 = vst [vmem:[%s365 + $0x140] sm:$0xf] %v526
                  %v528 = vld [vmem:[%s364 + $0x284] sm:$0xf]
                  %529 = vst [vmem:[%s365 + $0x144] sm:$0xf] %v528
                  %v530 = vld [vmem:[%s364 + $0x288] sm:$0xf]
                  %531 = vst [vmem:[%s365 + $0x148] sm:$0xf] %v530
                  %v532 = vld [vmem:[%s364 + $0x28c] sm:$0xf]
                  %533 = vst [vmem:[%s365 + $0x14c] sm:$0xf] %v532
                  %v534 = vld [vmem:[%s364 + $0x290] sm:$0xf]
                  %535 = vst [vmem:[%s365 + $0x150] sm:$0xf] %v534
                  %v536 = vld [vmem:[%s364 + $0x294] sm:$0xf]
                  %537 = vst [vmem:[%s365 + $0x154] sm:$0xf] %v536
                  %v538 = vld [vmem:[%s364 + $0x298] sm:$0xf]
                  %539 = vst [vmem:[%s365 + $0x158] sm:$0xf] %v538
                  %v540 = vld [vmem:[%s364 + $0x29c] sm:$0xf]
                  %541 = vst [vmem:[%s365 + $0x15c] sm:$0xf] %v540
                  %v542 = vld [vmem:[%s364 + $0x2a0] sm:$0xf]
                  %543 = vst [vmem:[%s365 + $0x160] sm:$0xf] %v542
                  %v544 = vld [vmem:[%s364 + $0x2a4] sm:$0xf]
                  %545 = vst [vmem:[%s365 + $0x164] sm:$0xf] %v544
                  %v546 = vld [vmem:[%s364 + $0x2a8] sm:$0xf]
                  %547 = vst [vmem:[%s365 + $0x168] sm:$0xf] %v546
                  %v548 = vld [vmem:[%s364 + $0x2ac] sm:$0xf]
                  %549 = vst [vmem:[%s365 + $0x16c] sm:$0xf] %v548
                  %v550 = vld [vmem:[%s364 + $0x2b0] sm:$0xf]
                  %551 = vst [vmem:[%s365 + $0x170] sm:$0xf] %v550
                  %v552 = vld [vmem:[%s364 + $0x2b4] sm:$0xf]
                  %553 = vst [vmem:[%s365 + $0x174] sm:$0xf] %v552
                  %v554 = vld [vmem:[%s364 + $0x2b8] sm:$0xf]
                  %555 = vst [vmem:[%s365 + $0x178] sm:$0xf] %v554
                  %v556 = vld [vmem:[%s364 + $0x2bc] sm:$0xf]
                  %557 = vst [vmem:[%s365 + $0x17c] sm:$0xf] %v556
                $region59: #{calc_action_batched.1} parent=46 // loop_footer
                  %s363 = sadd.s32 1, %s359
                $region60: #{calc_action_batched.1} parent=46 // loop_footer_branch
                  %358 = sbr.rel target = $region56
                $region61: #{calc_action_batched.1} parent=46 // loop_exit
                  _
              $region47: #{calc_action_batched.1} parent=31 // pred_fallthru
                _
            $region32: #{calc_action_batched.1} parent=27 // pred_fallthru
              _
            // Predicated region
            $region33: #{calc_action_batched.1} parent=27 // pred_check
              _
            $region34: #{calc_action_batched.1} parent=27 // pred_check_branch
              %145 = sbr.rel (0) target = $region36
            $region35: #{calc_action_batched.1} parent=27 // pred_region
              loop: start=0, step=1, limit=1
              $region37: #{calc_action_batched.1} parent=35 // loop_pre_header
                _
              $region38: #{calc_action_batched.1} parent=35 // loop_header
                %s148 = sphi 0, %s152
                %p149 = scmp.ge.s32.totalorder %s148, 1
                %s153 = sphi %s139, %s139
                %s154 = sphi %s136, %s136
              $region39: #{calc_action_batched.1} parent=35 // loop_header_branch
                %151 = sbr.rel (%p149) target = $region43
              $region40: #{calc_action_batched.1} parent=35 // loop_body
                %v155 = vld [vmem:[%s153] sm:$0xf]
                %156 = vst [vmem:[%s154] sm:$0xf] %v155
                %v157 = vld [vmem:[%s153 + $0x4] sm:$0xf]
                %158 = vst [vmem:[%s154 + $0x4] sm:$0xf] %v157
                %v159 = vld [vmem:[%s153 + $0x8] sm:$0xf]
                %160 = vst [vmem:[%s154 + $0x8] sm:$0xf] %v159
                %v161 = vld [vmem:[%s153 + $0xc] sm:$0xf]
                %162 = vst [vmem:[%s154 + $0xc] sm:$0xf] %v161
                %v163 = vld [vmem:[%s153 + $0x10] sm:$0xf]
                %164 = vst [vmem:[%s154 + $0x10] sm:$0xf] %v163
                %v165 = vld [vmem:[%s153 + $0x14] sm:$0xf]
                %166 = vst [vmem:[%s154 + $0x14] sm:$0xf] %v165
                %v167 = vld [vmem:[%s153 + $0x18] sm:$0xf]
                %168 = vst [vmem:[%s154 + $0x18] sm:$0xf] %v167
                %v169 = vld [vmem:[%s153 + $0x1c] sm:$0xf]
                %170 = vst [vmem:[%s154 + $0x1c] sm:$0xf] %v169
                %v171 = vld [vmem:[%s153 + $0x20] sm:$0xf]
                %172 = vst [vmem:[%s154 + $0x20] sm:$0xf] %v171
                %v173 = vld [vmem:[%s153 + $0x24] sm:$0xf]
                %174 = vst [vmem:[%s154 + $0x24] sm:$0xf] %v173
                %v175 = vld [vmem:[%s153 + $0x28] sm:$0xf]
                %176 = vst [vmem:[%s154 + $0x28] sm:$0xf] %v175
                %v177 = vld [vmem:[%s153 + $0x2c] sm:$0xf]
                %178 = vst [vmem:[%s154 + $0x2c] sm:$0xf] %v177
                %v179 = vld [vmem:[%s153 + $0x30] sm:$0xf]
                %180 = vst [vmem:[%s154 + $0x30] sm:$0xf] %v179
                %v181 = vld [vmem:[%s153 + $0x34] sm:$0xf]
                %182 = vst [vmem:[%s154 + $0x34] sm:$0xf] %v181
                %v183 = vld [vmem:[%s153 + $0x38] sm:$0xf]
                %184 = vst [vmem:[%s154 + $0x38] sm:$0xf] %v183
                %v185 = vld [vmem:[%s153 + $0x3c] sm:$0xf]
                %186 = vst [vmem:[%s154 + $0x3c] sm:$0xf] %v185
                %v187 = vld [vmem:[%s153 + $0x80] sm:$0xf]
                %188 = vst [vmem:[%s154 + $0x40] sm:$0xf] %v187
                %v189 = vld [vmem:[%s153 + $0x84] sm:$0xf]
                %190 = vst [vmem:[%s154 + $0x44] sm:$0xf] %v189
                %v191 = vld [vmem:[%s153 + $0x88] sm:$0xf]
                %192 = vst [vmem:[%s154 + $0x48] sm:$0xf] %v191
                %v193 = vld [vmem:[%s153 + $0x8c] sm:$0xf]
                %194 = vst [vmem:[%s154 + $0x4c] sm:$0xf] %v193
                %v195 = vld [vmem:[%s153 + $0x90] sm:$0xf]
                %196 = vst [vmem:[%s154 + $0x50] sm:$0xf] %v195
                %v197 = vld [vmem:[%s153 + $0x94] sm:$0xf]
                %198 = vst [vmem:[%s154 + $0x54] sm:$0xf] %v197
                %v199 = vld [vmem:[%s153 + $0x98] sm:$0xf]
                %200 = vst [vmem:[%s154 + $0x58] sm:$0xf] %v199
                %v201 = vld [vmem:[%s153 + $0x9c] sm:$0xf]
                %202 = vst [vmem:[%s154 + $0x5c] sm:$0xf] %v201
                %v203 = vld [vmem:[%s153 + $0xa0] sm:$0xf]
                %204 = vst [vmem:[%s154 + $0x60] sm:$0xf] %v203
                %v205 = vld [vmem:[%s153 + $0xa4] sm:$0xf]
                %206 = vst [vmem:[%s154 + $0x64] sm:$0xf] %v205
                %v207 = vld [vmem:[%s153 + $0xa8] sm:$0xf]
                %208 = vst [vmem:[%s154 + $0x68] sm:$0xf] %v207
                %v209 = vld [vmem:[%s153 + $0xac] sm:$0xf]
                %210 = vst [vmem:[%s154 + $0x6c] sm:$0xf] %v209
                %v211 = vld [vmem:[%s153 + $0xb0] sm:$0xf]
                %212 = vst [vmem:[%s154 + $0x70] sm:$0xf] %v211
                %v213 = vld [vmem:[%s153 + $0xb4] sm:$0xf]
                %214 = vst [vmem:[%s154 + $0x74] sm:$0xf] %v213
                %v215 = vld [vmem:[%s153 + $0xb8] sm:$0xf]
                %216 = vst [vmem:[%s154 + $0x78] sm:$0xf] %v215
                %v217 = vld [vmem:[%s153 + $0xbc] sm:$0xf]
                %218 = vst [vmem:[%s154 + $0x7c] sm:$0xf] %v217
                %v219 = vld [vmem:[%s153 + $0x100] sm:$0xf]
                %220 = vst [vmem:[%s154 + $0x80] sm:$0xf] %v219
                %v221 = vld [vmem:[%s153 + $0x104] sm:$0xf]
                %222 = vst [vmem:[%s154 + $0x84] sm:$0xf] %v221
                %v223 = vld [vmem:[%s153 + $0x108] sm:$0xf]
                %224 = vst [vmem:[%s154 + $0x88] sm:$0xf] %v223
                %v225 = vld [vmem:[%s153 + $0x10c] sm:$0xf]
                %226 = vst [vmem:[%s154 + $0x8c] sm:$0xf] %v225
                %v227 = vld [vmem:[%s153 + $0x110] sm:$0xf]
                %228 = vst [vmem:[%s154 + $0x90] sm:$0xf] %v227
                %v229 = vld [vmem:[%s153 + $0x114] sm:$0xf]
                %230 = vst [vmem:[%s154 + $0x94] sm:$0xf] %v229
                %v231 = vld [vmem:[%s153 + $0x118] sm:$0xf]
                %232 = vst [vmem:[%s154 + $0x98] sm:$0xf] %v231
                %v233 = vld [vmem:[%s153 + $0x11c] sm:$0xf]
                %234 = vst [vmem:[%s154 + $0x9c] sm:$0xf] %v233
                %v235 = vld [vmem:[%s153 + $0x120] sm:$0xf]
                %236 = vst [vmem:[%s154 + $0xa0] sm:$0xf] %v235
                %v237 = vld [vmem:[%s153 + $0x124] sm:$0xf]
                %238 = vst [vmem:[%s154 + $0xa4] sm:$0xf] %v237
                %v239 = vld [vmem:[%s153 + $0x128] sm:$0xf]
                %240 = vst [vmem:[%s154 + $0xa8] sm:$0xf] %v239
                %v241 = vld [vmem:[%s153 + $0x12c] sm:$0xf]
                %242 = vst [vmem:[%s154 + $0xac] sm:$0xf] %v241
                %v243 = vld [vmem:[%s153 + $0x130] sm:$0xf]
                %244 = vst [vmem:[%s154 + $0xb0] sm:$0xf] %v243
                %v245 = vld [vmem:[%s153 + $0x134] sm:$0xf]
                %246 = vst [vmem:[%s154 + $0xb4] sm:$0xf] %v245
                %v247 = vld [vmem:[%s153 + $0x138] sm:$0xf]
                %248 = vst [vmem:[%s154 + $0xb8] sm:$0xf] %v247
                %v249 = vld [vmem:[%s153 + $0x13c] sm:$0xf]
                %250 = vst [vmem:[%s154 + $0xbc] sm:$0xf] %v249
                %v251 = vld [vmem:[%s153 + $0x180] sm:$0xf]
                %252 = vst [vmem:[%s154 + $0xc0] sm:$0xf] %v251
                %v253 = vld [vmem:[%s153 + $0x184] sm:$0xf]
                %254 = vst [vmem:[%s154 + $0xc4] sm:$0xf] %v253
                %v255 = vld [vmem:[%s153 + $0x188] sm:$0xf]
                %256 = vst [vmem:[%s154 + $0xc8] sm:$0xf] %v255
                %v257 = vld [vmem:[%s153 + $0x18c] sm:$0xf]
                %258 = vst [vmem:[%s154 + $0xcc] sm:$0xf] %v257
                %v259 = vld [vmem:[%s153 + $0x190] sm:$0xf]
                %260 = vst [vmem:[%s154 + $0xd0] sm:$0xf] %v259
                %v261 = vld [vmem:[%s153 + $0x194] sm:$0xf]
                %262 = vst [vmem:[%s154 + $0xd4] sm:$0xf] %v261
                %v263 = vld [vmem:[%s153 + $0x198] sm:$0xf]
                %264 = vst [vmem:[%s154 + $0xd8] sm:$0xf] %v263
                %v265 = vld [vmem:[%s153 + $0x19c] sm:$0xf]
                %266 = vst [vmem:[%s154 + $0xdc] sm:$0xf] %v265
                %v267 = vld [vmem:[%s153 + $0x1a0] sm:$0xf]
                %268 = vst [vmem:[%s154 + $0xe0] sm:$0xf] %v267
                %v269 = vld [vmem:[%s153 + $0x1a4] sm:$0xf]
                %270 = vst [vmem:[%s154 + $0xe4] sm:$0xf] %v269
                %v271 = vld [vmem:[%s153 + $0x1a8] sm:$0xf]
                %272 = vst [vmem:[%s154 + $0xe8] sm:$0xf] %v271
                %v273 = vld [vmem:[%s153 + $0x1ac] sm:$0xf]
                %274 = vst [vmem:[%s154 + $0xec] sm:$0xf] %v273
                %v275 = vld [vmem:[%s153 + $0x1b0] sm:$0xf]
                %276 = vst [vmem:[%s154 + $0xf0] sm:$0xf] %v275
                %v277 = vld [vmem:[%s153 + $0x1b4] sm:$0xf]
                %278 = vst [vmem:[%s154 + $0xf4] sm:$0xf] %v277
                %v279 = vld [vmem:[%s153 + $0x1b8] sm:$0xf]
                %280 = vst [vmem:[%s154 + $0xf8] sm:$0xf] %v279
                %v281 = vld [vmem:[%s153 + $0x1bc] sm:$0xf]
                %282 = vst [vmem:[%s154 + $0xfc] sm:$0xf] %v281
                %v283 = vld [vmem:[%s153 + $0x200] sm:$0xf]
                %284 = vst [vmem:[%s154 + $0x100] sm:$0xf] %v283
                %v285 = vld [vmem:[%s153 + $0x204] sm:$0xf]
                %286 = vst [vmem:[%s154 + $0x104] sm:$0xf] %v285
                %v287 = vld [vmem:[%s153 + $0x208] sm:$0xf]
                %288 = vst [vmem:[%s154 + $0x108] sm:$0xf] %v287
                %v289 = vld [vmem:[%s153 + $0x20c] sm:$0xf]
                %290 = vst [vmem:[%s154 + $0x10c] sm:$0xf] %v289
                %v291 = vld [vmem:[%s153 + $0x210] sm:$0xf]
                %292 = vst [vmem:[%s154 + $0x110] sm:$0xf] %v291
                %v293 = vld [vmem:[%s153 + $0x214] sm:$0xf]
                %294 = vst [vmem:[%s154 + $0x114] sm:$0xf] %v293
                %v295 = vld [vmem:[%s153 + $0x218] sm:$0xf]
                %296 = vst [vmem:[%s154 + $0x118] sm:$0xf] %v295
                %v297 = vld [vmem:[%s153 + $0x21c] sm:$0xf]
                %298 = vst [vmem:[%s154 + $0x11c] sm:$0xf] %v297
                %v299 = vld [vmem:[%s153 + $0x220] sm:$0xf]
                %300 = vst [vmem:[%s154 + $0x120] sm:$0xf] %v299
                %v301 = vld [vmem:[%s153 + $0x224] sm:$0xf]
                %302 = vst [vmem:[%s154 + $0x124] sm:$0xf] %v301
                %v303 = vld [vmem:[%s153 + $0x228] sm:$0xf]
                %304 = vst [vmem:[%s154 + $0x128] sm:$0xf] %v303
                %v305 = vld [vmem:[%s153 + $0x22c] sm:$0xf]
                %306 = vst [vmem:[%s154 + $0x12c] sm:$0xf] %v305
                %v307 = vld [vmem:[%s153 + $0x230] sm:$0xf]
                %308 = vst [vmem:[%s154 + $0x130] sm:$0xf] %v307
                %v309 = vld [vmem:[%s153 + $0x234] sm:$0xf]
                %310 = vst [vmem:[%s154 + $0x134] sm:$0xf] %v309
                %v311 = vld [vmem:[%s153 + $0x238] sm:$0xf]
                %312 = vst [vmem:[%s154 + $0x138] sm:$0xf] %v311
                %v313 = vld [vmem:[%s153 + $0x23c] sm:$0xf]
                %314 = vst [vmem:[%s154 + $0x13c] sm:$0xf] %v313
                %v315 = vld [vmem:[%s153 + $0x280] sm:$0xf]
                %316 = vst [vmem:[%s154 + $0x140] sm:$0xf] %v315
                %v317 = vld [vmem:[%s153 + $0x284] sm:$0xf]
                %318 = vst [vmem:[%s154 + $0x144] sm:$0xf] %v317
                %v319 = vld [vmem:[%s153 + $0x288] sm:$0xf]
                %320 = vst [vmem:[%s154 + $0x148] sm:$0xf] %v319
                %v321 = vld [vmem:[%s153 + $0x28c] sm:$0xf]
                %322 = vst [vmem:[%s154 + $0x14c] sm:$0xf] %v321
                %v323 = vld [vmem:[%s153 + $0x290] sm:$0xf]
                %324 = vst [vmem:[%s154 + $0x150] sm:$0xf] %v323
                %v325 = vld [vmem:[%s153 + $0x294] sm:$0xf]
                %326 = vst [vmem:[%s154 + $0x154] sm:$0xf] %v325
                %v327 = vld [vmem:[%s153 + $0x298] sm:$0xf]
                %328 = vst [vmem:[%s154 + $0x158] sm:$0xf] %v327
                %v329 = vld [vmem:[%s153 + $0x29c] sm:$0xf]
                %330 = vst [vmem:[%s154 + $0x15c] sm:$0xf] %v329
                %v331 = vld [vmem:[%s153 + $0x2a0] sm:$0xf]
                %332 = vst [vmem:[%s154 + $0x160] sm:$0xf] %v331
                %v333 = vld [vmem:[%s153 + $0x2a4] sm:$0xf]
                %334 = vst [vmem:[%s154 + $0x164] sm:$0xf] %v333
                %v335 = vld [vmem:[%s153 + $0x2a8] sm:$0xf]
                %336 = vst [vmem:[%s154 + $0x168] sm:$0xf] %v335
                %v337 = vld [vmem:[%s153 + $0x2ac] sm:$0xf]
                %338 = vst [vmem:[%s154 + $0x16c] sm:$0xf] %v337
                %v339 = vld [vmem:[%s153 + $0x2b0] sm:$0xf]
                %340 = vst [vmem:[%s154 + $0x170] sm:$0xf] %v339
                %v341 = vld [vmem:[%s153 + $0x2b4] sm:$0xf]
                %342 = vst [vmem:[%s154 + $0x174] sm:$0xf] %v341
                %v343 = vld [vmem:[%s153 + $0x2b8] sm:$0xf]
                %344 = vst [vmem:[%s154 + $0x178] sm:$0xf] %v343
                %v345 = vld [vmem:[%s153 + $0x2bc] sm:$0xf]
                %346 = vst [vmem:[%s154 + $0x17c] sm:$0xf] %v345
              $region41: #{calc_action_batched.1} parent=35 // loop_footer
                %s152 = sadd.s32 1, %s148
              $region42: #{calc_action_batched.1} parent=35 // loop_footer_branch
                %147 = sbr.rel target = $region38
              $region43: #{calc_action_batched.1} parent=35 // loop_exit
                _
            $region36: #{calc_action_batched.1} parent=27 // pred_fallthru
              _
          $region28: #{calc_action_batched.1} parent=23 // pred_fallthru
            _
          %558 = vnop
        $region24: #{calc_action_batched.1} parent=19 // pred_fallthru
          _
        // Predicated region
        $region62: #{calc_action_batched.1} parent=19 // pred_check
          %p559 = pneg %p55
        $region63: #{calc_action_batched.1} parent=19 // pred_check_branch
          %561 = sbr.rel (%p559) target = $region65
        $region64: #{calc_action_batched.1} parent=19 // pred_region
          %s562 = smul.u32 16, %s9
          %p563 = scmp.lt.s32.totalorder %s562, 31
          %s564 = scalar_select %p563, %s562, 31
          %s565 = smul.addr %s564, 4
          %s566 = scalar_lea.vmem %s1, %s565
          %s567 = smul.u32 16, %s9
        $region65: #{calc_action_batched.1} parent=19 // pred_fallthru
          _
      $region20: #{calc_action_batched.1} parent=5 // pred_fallthru
        _
      %p568 = scmp.le.s32.totalorder 1, %s9
      %p569 = scmp.lt.s32.totalorder %s9, 3
      %p570 = pnand %p568, %p569
      %p571 = pneg %p570
      // Predicated region
      $region66: #{calc_action_batched.1} parent=5 // pred_check
        _
      $region67: #{calc_action_batched.1} parent=5 // pred_check_branch
        %573 = sbr.rel (%p570) target = $region69
      $region68: #{calc_action_batched.1} parent=5 // pred_region
        %s574 = ssub.s32 %s9, 1
        %s575 = sand.u32 %s22, 1
        %s576 = sand.u32 %s22, 1
        %s577 = smul.addr %s576, 384
        %s578 = scalar_lea.vmem [#allocation2], %s577
        // Predicated region
        $region70: #{calc_action_batched.1} parent=68 // pred_check
          %p579 = pneg %p35
        $region71: #{calc_action_batched.1} parent=68 // pred_check_branch
          %581 = sbr.rel (%p579) target = $region73
        $region72: #{calc_action_batched.1} parent=68 // pred_region
          _
        $region73: #{calc_action_batched.1} parent=68 // pred_fallthru
          _
        %s582 = sand.u32 %s22, 1
        %s583 = sand.u32 %s22, 1
        %s584 = smul.addr %s583, 384
        %s585 = scalar_lea.vmem [#allocation2], %s584
        %p586 = pneg %p35
        %p587 = pneg %p32
        %s588 = smul.u32 16, %s14
        %p589 = scmp.lt.s32.totalorder %s588, 31
        %s590 = scalar_select %p589, %s588, 31
        %s591 = smul.addr %s590, 4
        %s592 = scalar_lea.vmem %s1, %s591
        %p593 = pneg %p61
        %p594 = pneg %p58
        %p595 = pneg %p82
        %p596 = pneg %p79
        %p597 = pneg %p108
        %p598 = pneg %p105
        %s599 = smul.u32 16, %s14
        %p600 = scmp.lt.s32.totalorder %s599, 31
        %s601 = scalar_select %p600, %s599, 31
        %s602 = smul.addr %s601, 8
        %s603 = scalar_lea.vmem %s3, %s602
        %s604 = smul.u32 16, %s14
        %s605 = smul.u32 16, %s14
        %p606 = scmp.lt.s32.totalorder %s605, 31
        %s607 = scalar_select %p606, %s605, 31
        %s608 = smul.addr %s607, 4
        %s609 = scalar_lea.vmem %s1, %s608
        %s610 = smul.u32 16, %s14
        %s611 = smul.u32 16, %s14
        %p612 = scmp.lt.s32.totalorder %s611, 31
        %s613 = scalar_select %p612, %s611, 31
        %s614 = smul.addr %s613, 8
        %s615 = scalar_lea.vmem %s3, %s614
        %s616 = smul.u32 16, %s14
        %v618 = vld [vmem:[%s2] sm:$0xf]
        %v619 = vld [vmem:[%s2 + $0x4] sm:$0xf]
        %v620 = vld [vmem:[%s2 + $0x8] sm:$0xf]
        %v621 = vld [vmem:[%s2 + $0xc] sm:$0xf]
        %v622 = vld [vmem:[%s2 + $0x10] sm:$0xf]
        %v623 = vld [vmem:[%s2 + $0x14] sm:$0xf]
        %v624 = vld [vmem:[%s2 + $0x18] sm:$0xf]
        %v625 = vld [vmem:[%s2 + $0x1c] sm:$0xf]
        %v626 = vld [vmem:[%s2 + $0x20] sm:$0xf]
        %v627 = vld [vmem:[%s2 + $0x24] sm:$0xf]
        %v628 = vld [vmem:[%s2 + $0x28] sm:$0xf]
        %v629 = vld [vmem:[%s2 + $0x2c] sm:$0x1]
        %v630 = vld [vmem:[%s2 + $0x30] sm:$0x1]
        %v631 = vld [vmem:[%s2 + $0x34] sm:$0xf]
        %v632 = vld [vmem:[%s2 + $0x38] sm:$0xf]
        %v633 = vld [vmem:[%s2 + $0x3c] sm:$0xf]
        %v634 = vld [vmem:[%s2 + $0x40] sm:$0xf]
        %v635 = vld [vmem:[%s2 + $0x44] sm:$0xf]
        %v636 = vld [vmem:[%s2 + $0x48] sm:$0xf]
        %v637 = vld [vmem:[%s2 + $0x4c] sm:$0x1]
        %v638 = vld [vmem:[%s2 + $0x50] sm:$0x1]
        %v639 = vld [vmem:[%s2 + $0x54] sm:$0xf]
        %v640 = vld [vmem:[%s2 + $0x58] sm:$0xf]
        %v641 = vld [vmem:[%s2 + $0x5c] sm:$0xf]
        %v642 = vld [vmem:[%s2 + $0x60] sm:$0xf]
        %v643 = vld [vmem:[%s2 + $0x64] sm:$0x1]
        %v644 = vld [vmem:[%s578] sm:$0xf]
        %v645 = vld [vmem:[%s578 + $0x4] sm:$0xf]
        %v646 = vld [vmem:[%s578 + $0x8] sm:$0xf]
        %v647 = vld [vmem:[%s578 + $0xc] sm:$0xf]
        %v648 = vld [vmem:[%s578 + $0x10] sm:$0xf]
        %v649 = vld [vmem:[%s578 + $0x14] sm:$0xf]
        %v650 = vld [vmem:[%s578 + $0x18] sm:$0xf]
        %v651 = vld [vmem:[%s578 + $0x1c] sm:$0xf]
        %v652 = vld [vmem:[%s578 + $0x20] sm:$0xf]
        %v653 = vld [vmem:[%s578 + $0x24] sm:$0xf]
        %v654 = vld [vmem:[%s578 + $0x28] sm:$0xf]
        %v655 = vld [vmem:[%s578 + $0x2c] sm:$0xf]
        %v656 = vld [vmem:[%s578 + $0x30] sm:$0xf]
        %v657 = vld [vmem:[%s578 + $0x34] sm:$0xf]
        %v658 = vld [vmem:[%s578 + $0x38] sm:$0xf]
        %v659 = vld [vmem:[%s578 + $0x3c] sm:$0xf]
        %v660 = vld [vmem:[%s578 + $0x40] sm:$0xf]
        %v661 = vld [vmem:[%s578 + $0x44] sm:$0xf]
        %v662 = vld [vmem:[%s578 + $0x48] sm:$0xf]
        %v663 = vld [vmem:[%s578 + $0x4c] sm:$0xf]
        %v664 = vld [vmem:[%s578 + $0x50] sm:$0xf]
        %v665 = vld [vmem:[%s578 + $0x54] sm:$0xf]
        %v666 = vld [vmem:[%s578 + $0x58] sm:$0xf]
        %v667 = vld [vmem:[%s578 + $0x5c] sm:$0xf]
        %v668 = vld [vmem:[%s578 + $0x60] sm:$0xf]
        %v669 = vld [vmem:[%s578 + $0x64] sm:$0xf]
        %v670 = vld [vmem:[%s578 + $0x68] sm:$0xf]
        %v671 = vld [vmem:[%s578 + $0x6c] sm:$0xf]
        %v672 = vld [vmem:[%s578 + $0x70] sm:$0xf]
        %v673 = vld [vmem:[%s578 + $0x74] sm:$0xf]
        %v674 = vld [vmem:[%s578 + $0x78] sm:$0xf]
        %v675 = vld [vmem:[%s578 + $0x7c] sm:$0xf]
        %v676 = vld [vmem:[%s578 + $0x80] sm:$0xf]
        %v677 = vld [vmem:[%s578 + $0x84] sm:$0xf]
        %v678 = vld [vmem:[%s578 + $0x88] sm:$0xf]
        %v679 = vld [vmem:[%s578 + $0x8c] sm:$0xf]
        %v680 = vld [vmem:[%s578 + $0x90] sm:$0xf]
        %v681 = vld [vmem:[%s578 + $0x94] sm:$0xf]
        %v682 = vld [vmem:[%s578 + $0x98] sm:$0xf]
        %v683 = vld [vmem:[%s578 + $0x9c] sm:$0xf]
        %v684 = vld [vmem:[%s578 + $0xa0] sm:$0xf]
        %v685 = vld [vmem:[%s578 + $0xa4] sm:$0xf]
        %v686 = vld [vmem:[%s578 + $0xa8] sm:$0xf]
        %v687 = vld [vmem:[%s578 + $0xac] sm:$0xf]
        %v688 = vld [vmem:[%s578 + $0xb0] sm:$0xf]
        %v689 = vld [vmem:[%s578 + $0xb4] sm:$0xf]
        %v690 = vld [vmem:[%s578 + $0xb8] sm:$0xf]
        %v691 = vld [vmem:[%s578 + $0xbc] sm:$0xf]
        %v692 = vld [vmem:[%s578 + $0xc0] sm:$0xf]
        %v693 = vld [vmem:[%s578 + $0xc4] sm:$0xf]
        %v694 = vld [vmem:[%s578 + $0xc8] sm:$0xf]
        %v695 = vld [vmem:[%s578 + $0xcc] sm:$0xf]
        %v696 = vld [vmem:[%s578 + $0xd0] sm:$0xf]
        %v697 = vld [vmem:[%s578 + $0xd4] sm:$0xf]
        %v698 = vld [vmem:[%s578 + $0xd8] sm:$0xf]
        %v699 = vld [vmem:[%s578 + $0xdc] sm:$0xf]
        %v700 = vld [vmem:[%s578 + $0xe0] sm:$0xf]
        %v701 = vld [vmem:[%s578 + $0xe4] sm:$0xf]
        %v702 = vld [vmem:[%s578 + $0xe8] sm:$0xf]
        %v703 = vld [vmem:[%s578 + $0xec] sm:$0xf]
        %v704 = vld [vmem:[%s578 + $0xf0] sm:$0xf]
        %v705 = vld [vmem:[%s578 + $0xf4] sm:$0xf]
        %v706 = vld [vmem:[%s578 + $0xf8] sm:$0xf]
        %v707 = vld [vmem:[%s578 + $0xfc] sm:$0xf]
        %v708 = vld [vmem:[%s578 + $0x100] sm:$0xf]
        %v709 = vld [vmem:[%s578 + $0x104] sm:$0xf]
        %v710 = vld [vmem:[%s578 + $0x108] sm:$0xf]
        %v711 = vld [vmem:[%s578 + $0x10c] sm:$0xf]
        %v712 = vld [vmem:[%s578 + $0x110] sm:$0xf]
        %v713 = vld [vmem:[%s578 + $0x114] sm:$0xf]
        %v714 = vld [vmem:[%s578 + $0x118] sm:$0xf]
        %v715 = vld [vmem:[%s578 + $0x11c] sm:$0xf]
        %v716 = vld [vmem:[%s578 + $0x120] sm:$0xf]
        %v717 = vld [vmem:[%s578 + $0x124] sm:$0xf]
        %v718 = vld [vmem:[%s578 + $0x128] sm:$0xf]
        %v719 = vld [vmem:[%s578 + $0x12c] sm:$0xf]
        %v720 = vld [vmem:[%s578 + $0x130] sm:$0xf]
        %v721 = vld [vmem:[%s578 + $0x134] sm:$0xf]
        %v722 = vld [vmem:[%s578 + $0x138] sm:$0xf]
        %v723 = vld [vmem:[%s578 + $0x13c] sm:$0xf]
        %v724 = vld [vmem:[%s578 + $0x140] sm:$0xf]
        %v725 = vld [vmem:[%s578 + $0x144] sm:$0xf]
        %v726 = vld [vmem:[%s578 + $0x148] sm:$0xf]
        %v727 = vld [vmem:[%s578 + $0x14c] sm:$0xf]
        %v728 = vld [vmem:[%s578 + $0x150] sm:$0xf]
        %v729 = vld [vmem:[%s578 + $0x154] sm:$0xf]
        %v730 = vld [vmem:[%s578 + $0x158] sm:$0xf]
        %v731 = vld [vmem:[%s578 + $0x15c] sm:$0xf]
        %v732 = vld [vmem:[%s578 + $0x160] sm:$0xf]
        %v733 = vld [vmem:[%s578 + $0x164] sm:$0xf]
        %v734 = vld [vmem:[%s578 + $0x168] sm:$0xf]
        %v735 = vld [vmem:[%s578 + $0x16c] sm:$0xf]
        %v736 = vld [vmem:[%s578 + $0x170] sm:$0xf]
        %v737 = vld [vmem:[%s578 + $0x174] sm:$0xf]
        %v738 = vld [vmem:[%s578 + $0x178] sm:$0xf]
        %v739 = vld [vmem:[%s578 + $0x17c] sm:$0xf]
        %v740 = vunpack.c.l.bf16 %v630
        %v741 = vlaneseq
        %v742 = vshrl.u32 %v741, 7
        %v743 = vsub.s32 0, %v742
        %v744 = vrot.slane %v740, %v743
        %v841 = vunpack.c.l.b16 %v644
        %v842 = vunpack.c.l.b16 %v645
        %v843 = vunpack.c.l.b16 %v646
        %v844 = vunpack.c.l.b16 %v647
        %v845 = vunpack.c.l.b16 %v648
        %v846 = vunpack.c.l.b16 %v649
        %v847 = vunpack.c.l.b16 %v650
        %v848 = vunpack.c.l.b16 %v651
        %v849 = vunpack.c.l.b16 %v652
        %v850 = vunpack.c.l.b16 %v653
        %v851 = vunpack.c.l.b16 %v654
        %v852 = vunpack.c.l.b16 %v655
        %v853 = vunpack.c.l.b16 %v656
        %v854 = vunpack.c.l.b16 %v657
        %v855 = vunpack.c.l.b16 %v658
        %v856 = vunpack.c.l.b16 %v659
        %v857 = vunpack.c.l.b16 %v660
        %v858 = vunpack.c.l.b16 %v661
        %v859 = vunpack.c.l.b16 %v662
        %v860 = vunpack.c.l.b16 %v663
        %v861 = vunpack.c.l.b16 %v664
        %v862 = vunpack.c.l.b16 %v665
        %v863 = vunpack.c.l.b16 %v666
        %v864 = vunpack.c.l.b16 %v667
        %v865 = vunpack.c.l.b16 %v668
        %v866 = vunpack.c.l.b16 %v669
        %v867 = vunpack.c.l.b16 %v670
        %v868 = vunpack.c.l.b16 %v671
        %v869 = vunpack.c.l.b16 %v672
        %v870 = vunpack.c.l.b16 %v673
        %v871 = vunpack.c.l.b16 %v674
        %v872 = vunpack.c.l.b16 %v675
        %v873 = vunpack.c.l.b16 %v676
        %v874 = vunpack.c.l.b16 %v677
        %v875 = vunpack.c.l.b16 %v678
        %v876 = vunpack.c.l.b16 %v679
        %v877 = vunpack.c.l.b16 %v680
        %v878 = vunpack.c.l.b16 %v681
        %v879 = vunpack.c.l.b16 %v682
        %v880 = vunpack.c.l.b16 %v683
        %v881 = vunpack.c.l.b16 %v684
        %v882 = vunpack.c.l.b16 %v685
        %v883 = vunpack.c.l.b16 %v686
        %v884 = vunpack.c.l.b16 %v687
        %v885 = vunpack.c.l.b16 %v688
        %v886 = vunpack.c.l.b16 %v689
        %v887 = vunpack.c.l.b16 %v690
        %v888 = vunpack.c.l.b16 %v691
        %v889 = vunpack.c.l.b16 %v692
        %v890 = vunpack.c.l.b16 %v693
        %v891 = vunpack.c.l.b16 %v694
        %v892 = vunpack.c.l.b16 %v695
        %v893 = vunpack.c.l.b16 %v696
        %v894 = vunpack.c.l.b16 %v697
        %v895 = vunpack.c.l.b16 %v698
        %v896 = vunpack.c.l.b16 %v699
        %v897 = vunpack.c.l.b16 %v700
        %v898 = vunpack.c.l.b16 %v701
        %v899 = vunpack.c.l.b16 %v702
        %v900 = vunpack.c.l.b16 %v703
        %v901 = vunpack.c.l.b16 %v704
        %v902 = vunpack.c.l.b16 %v705
        %v903 = vunpack.c.l.b16 %v706
        %v904 = vunpack.c.l.b16 %v707
        %v905 = vunpack.c.l.b16 %v708
        %v906 = vunpack.c.l.b16 %v709
        %v907 = vunpack.c.l.b16 %v710
        %v908 = vunpack.c.l.b16 %v711
        %v909 = vunpack.c.l.b16 %v712
        %v910 = vunpack.c.l.b16 %v713
        %v911 = vunpack.c.l.b16 %v714
        %v912 = vunpack.c.l.b16 %v715
        %v913 = vunpack.c.l.b16 %v716
        %v914 = vunpack.c.l.b16 %v717
        %v915 = vunpack.c.l.b16 %v718
        %v916 = vunpack.c.l.b16 %v719
        %v917 = vunpack.c.l.b16 %v720
        %v918 = vunpack.c.l.b16 %v721
        %v919 = vunpack.c.l.b16 %v722
        %v920 = vunpack.c.l.b16 %v723
        %v921 = vunpack.c.l.b16 %v724
        %v922 = vunpack.c.l.b16 %v725
        %v923 = vunpack.c.l.b16 %v726
        %v924 = vunpack.c.l.b16 %v727
        %v925 = vunpack.c.l.b16 %v728
        %v926 = vunpack.c.l.b16 %v729
        %v927 = vunpack.c.l.b16 %v730
        %v928 = vunpack.c.l.b16 %v731
        %v929 = vunpack.c.l.b16 %v732
        %v930 = vunpack.c.l.b16 %v733
        %v931 = vunpack.c.l.b16 %v734
        %v932 = vunpack.c.l.b16 %v735
        %v933 = vunpack.c.l.b16 %v736
        %v934 = vunpack.c.l.b16 %v737
        %v935 = vunpack.c.l.b16 %v738
        %v936 = vunpack.c.l.b16 %v739
        %v937 = vpack.c.b16 %v842, %v841
        %v938 = vpack.c.b16 %v844, %v843
        %v939 = vpack.c.b16 %v846, %v845
        %v940 = vpack.c.b16 %v848, %v847
        %v941 = vpack.c.b16 %v850, %v849
        %v942 = vpack.c.b16 %v852, %v851
        %v943 = vpack.c.b16 %v854, %v853
        %v944 = vpack.c.b16 %v856, %v855
        %v945 = vpack.c.b16 %v858, %v857
        %v946 = vpack.c.b16 %v860, %v859
        %v947 = vpack.c.b16 %v862, %v861
        %v948 = vpack.c.b16 %v864, %v863
        %v949 = vpack.c.b16 %v866, %v865
        %v950 = vpack.c.b16 %v868, %v867
        %v951 = vpack.c.b16 %v870, %v869
        %v952 = vpack.c.b16 %v872, %v871
        %v953 = vpack.c.b16 %v874, %v873
        %v954 = vpack.c.b16 %v876, %v875
        %v955 = vpack.c.b16 %v878, %v877
        %v956 = vpack.c.b16 %v880, %v879
        %v957 = vpack.c.b16 %v882, %v881
        %v958 = vpack.c.b16 %v884, %v883
        %v959 = vpack.c.b16 %v886, %v885
        %v960 = vpack.c.b16 %v888, %v887
        %v961 = vpack.c.b16 %v890, %v889
        %v962 = vpack.c.b16 %v892, %v891
        %v963 = vpack.c.b16 %v894, %v893
        %v964 = vpack.c.b16 %v896, %v895
        %v965 = vpack.c.b16 %v898, %v897
        %v966 = vpack.c.b16 %v900, %v899
        %v967 = vpack.c.b16 %v902, %v901
        %v968 = vpack.c.b16 %v904, %v903
        %v969 = vpack.c.b16 %v906, %v905
        %v970 = vpack.c.b16 %v908, %v907
        %v971 = vpack.c.b16 %v910, %v909
        %v972 = vpack.c.b16 %v912, %v911
        %v973 = vpack.c.b16 %v914, %v913
        %v974 = vpack.c.b16 %v916, %v915
        %v975 = vpack.c.b16 %v918, %v917
        %v976 = vpack.c.b16 %v920, %v919
        %v977 = vpack.c.b16 %v922, %v921
        %v978 = vpack.c.b16 %v924, %v923
        %v979 = vpack.c.b16 %v926, %v925
        %v980 = vpack.c.b16 %v928, %v927
        %v981 = vpack.c.b16 %v930, %v929
        %v982 = vpack.c.b16 %v932, %v931
        %v983 = vpack.c.b16 %v934, %v933
        %v984 = vpack.c.b16 %v936, %v935
        %v997 = vunpack.c.l.b16 %v618
        %v998 = vunpack.c.l.b16 %v619
        %v999 = vunpack.c.l.b16 %v620
        %v1000 = vunpack.c.l.b16 %v621
        %v1001 = vunpack.c.l.b16 %v622
        %v1002 = vunpack.c.l.b16 %v623
        %v1003 = vunpack.c.l.b16 %v624
        %v1004 = vunpack.c.l.b16 %v625
        %v1005 = vunpack.c.l.b16 %v626
        %v1006 = vunpack.c.l.b16 %v627
        %v1007 = vunpack.c.l.b16 %v628
        %v1008 = vunpack.c.l.b16 %v629
        %v1009 = vpack.c.b16 %v998, %v997
        %v1010 = vpack.c.b16 %v1000, %v999
        %v1011 = vpack.c.b16 %v1002, %v1001
        %v1012 = vpack.c.b16 %v1004, %v1003
        %v1013 = vpack.c.b16 %v1006, %v1005
        %v1014 = vpack.c.b16 %v1008, %v1007
        %vm1020 = vcmask 736256
        %v1022 = vsel %vm1020, %v937, 0
        %v1025 = vsel %vm1020, %v938, 0
        %v1028 = vsel %vm1020, %v939, 0
        %v1031 = vsel %vm1020, %v940, 0
        %v1034 = vsel %vm1020, %v941, 0
        %v1037 = vsel %vm1020, %v942, 0
        %v1040 = vsel %vm1020, %v943, 0
        %v1043 = vsel %vm1020, %v944, 0
        %v1046 = vsel %vm1020, %v945, 0
        %v1049 = vsel %vm1020, %v946, 0
        %v1052 = vsel %vm1020, %v947, 0
        %v1055 = vsel %vm1020, %v948, 0
        %v1058 = vsel %vm1020, %v949, 0
        %v1061 = vsel %vm1020, %v950, 0
        %v1064 = vsel %vm1020, %v951, 0
        %v1067 = vsel %vm1020, %v952, 0
        %v1070 = vsel %vm1020, %v953, 0
        %v1073 = vsel %vm1020, %v954, 0
        %v1076 = vsel %vm1020, %v955, 0
        %v1079 = vsel %vm1020, %v956, 0
        %v1082 = vsel %vm1020, %v957, 0
        %v1085 = vsel %vm1020, %v958, 0
        %v1088 = vsel %vm1020, %v959, 0
        %v1091 = vsel %vm1020, %v960, 0
        %v1094 = vsel %vm1020, %v961, 0
        %v1097 = vsel %vm1020, %v962, 0
        %v1100 = vsel %vm1020, %v963, 0
        %v1103 = vsel %vm1020, %v964, 0
        %v1106 = vsel %vm1020, %v965, 0
        %v1109 = vsel %vm1020, %v966, 0
        %v1112 = vsel %vm1020, %v967, 0
        %v1115 = vsel %vm1020, %v968, 0
        %v1118 = vsel %vm1020, %v969, 0
        %v1121 = vsel %vm1020, %v970, 0
        %v1124 = vsel %vm1020, %v971, 0
        %v1127 = vsel %vm1020, %v972, 0
        %v1130 = vsel %vm1020, %v973, 0
        %v1133 = vsel %vm1020, %v974, 0
        %v1136 = vsel %vm1020, %v975, 0
        %v1139 = vsel %vm1020, %v976, 0
        %v1142 = vsel %vm1020, %v977, 0
        %v1145 = vsel %vm1020, %v978, 0
        %v1148 = vsel %vm1020, %v979, 0
        %v1151 = vsel %vm1020, %v980, 0
        %v1154 = vsel %vm1020, %v981, 0
        %v1157 = vsel %vm1020, %v982, 0
        %v1160 = vsel %vm1020, %v983, 0
        %v1163 = vsel %vm1020, %v984, 0
        %vm1165 = vcmask 1044480
        %v1167 = vsel %vm1165, %v1014, 0
        %1169 = vmatprep.subr.bf16.mxu0 0
        %1170 = vmatpush1.bf16.msra.mxu0 %v1009
        %1171 = vmatprep.subr.bf16.mxu0 0
        %1172 = vmatpush1.bf16.msra.mxu0 %v1010
        %1173 = vmatprep.subr.bf16.mxu0 0
        %1174 = vmatpush1.bf16.msra.mxu0 %v1011
        %1175 = vmatprep.subr.bf16.mxu0 0
        %1176 = vmatpush1.bf16.msra.mxu0 %v1012
        %1177 = vmatprep.subr.bf16.mxu0 0
        %1178 = vmatpush1.bf16.msra.mxu0 %v1013
        %1179 = vmatprep.subr.bf16.mxu0 0
        %1180 = vmatpush1.bf16.msra.mxu0 %v1167
        %1181 = vmatprep.subr.bf16.mxu0 0
        %1182 = vmatpush1.bf16.msra.mxu0 0
        %1183 = vmatprep.subr.bf16.mxu0 0
        %1184 = vmatpush1.bf16.msra.mxu0 0
        %1185 = vmatprep.subr.bf16.mxu0 0
        %1186 = vmatpush1.bf16.msra.mxu0 0
        %1187 = vmatprep.subr.bf16.mxu0 0
        %1188 = vmatpush1.bf16.msra.mxu0 0
        %1189 = vmatprep.subr.bf16.mxu0 0
        %1190 = vmatpush1.bf16.msra.mxu0 0
        %1191 = vmatprep.subr.bf16.mxu0 0
        %1192 = vmatpush1.bf16.msra.mxu0 0
        %1193 = vmatprep.subr.bf16.mxu0 0
        %1194 = vmatpush1.bf16.msra.mxu0 0
        %1195 = vmatprep.subr.bf16.mxu0 0
        %1196 = vmatpush1.bf16.msra.mxu0 0
        %1197 = vmatprep.subr.bf16.mxu0 0
        %1198 = vmatpush1.bf16.msra.mxu0 0
        %1199 = vmatprep.subr.bf16.mxu0 0
        %1200 = vmatpush1.bf16.msra.mxu0 0
        %1201 = vmatprep.mubr.bf16.mxu0 0
        %1202 = vmatmul.mubr.bf16.gmra.mrb[0].mxu0 %v1022
        %v1203 = vpop.f32.mrb[0].mxu0
        %v1204 = vadd.f32 %v744, %v1203
        %v1205 = vpop.f32.mrb[0].mxu0
        %v1206 = vpop.f32.mrb[0].mxu0
        %v1207 = vadd.f32 %v744, %v1206
        %v1208 = vpop.f32.mrb[0].mxu0
        %1209 = vmatprep.mubr.bf16.mxu0 0
        %1210 = vmatmul.mubr.bf16.gmra.mrb[0].mxu0 %v1025
        %v1211 = vpop.f32.mrb[0].mxu0
        %v1212 = vadd.f32 %v744, %v1211
        %v1213 = vpop.f32.mrb[0].mxu0
        %v1214 = vpop.f32.mrb[0].mxu0
        %v1215 = vadd.f32 %v744, %v1214
        %v1216 = vpop.f32.mrb[0].mxu0
        %1217 = vmatprep.mubr.bf16.mxu0 0
        %1218 = vmatmul.mubr.bf16.gmra.mrb[0].mxu0 %v1028
        %v1219 = vpop.f32.mrb[0].mxu0
        %v1220 = vadd.f32 %v744, %v1219
        %v1221 = vpop.f32.mrb[0].mxu0
        %v1222 = vpop.f32.mrb[0].mxu0
        %v1223 = vadd.f32 %v744, %v1222
        %v1224 = vpop.f32.mrb[0].mxu0
        %1225 = vmatprep.mubr.bf16.mxu0 0
        %1226 = vmatmul.mubr.bf16.gmra.mrb[0].mxu0 %v1031
        %v1227 = vpop.f32.mrb[0].mxu0
        %v1228 = vadd.f32 %v744, %v1227
        %v1229 = vpop.f32.mrb[0].mxu0
        %v1230 = vpop.f32.mrb[0].mxu0
        %v1231 = vadd.f32 %v744, %v1230
        %v1232 = vpop.f32.mrb[0].mxu0
        %1233 = vmatprep.mubr.bf16.mxu0 0
        %1234 = vmatmul.mubr.bf16.gmra.mrb[0].mxu0 %v1034
        %v1235 = vpop.f32.mrb[0].mxu0
        %v1236 = vadd.f32 %v744, %v1235
        %v1237 = vpop.f32.mrb[0].mxu0
        %v1238 = vpop.f32.mrb[0].mxu0
        %v1239 = vadd.f32 %v744, %v1238
        %v1240 = vpop.f32.mrb[0].mxu0
        %1241 = vmatprep.mubr.bf16.mxu0 0
        %1242 = vmatmul.mubr.bf16.gmra.mrb[0].mxu0 %v1037
        %v1243 = vpop.f32.mrb[0].mxu0
        %v1244 = vadd.f32 %v744, %v1243
        %v1245 = vpop.f32.mrb[0].mxu0
        %v1246 = vpop.f32.mrb[0].mxu0
        %v1247 = vadd.f32 %v744, %v1246
        %v1248 = vpop.f32.mrb[0].mxu0
        %1249 = vmatprep.mubr.bf16.mxu0 0
        %1250 = vmatmul.mubr.bf16.gmra.mrb[0].mxu0 %v1040
        %v1251 = vpop.f32.mrb[0].mxu0
        %v1252 = vadd.f32 %v744, %v1251
        %v1253 = vpop.f32.mrb[0].mxu0
        %v1254 = vpop.f32.mrb[0].mxu0
        %v1255 = vadd.f32 %v744, %v1254
        %v1256 = vpop.f32.mrb[0].mxu0
        %1257 = vmatprep.mubr.bf16.mxu0 0
        %1258 = vmatmul.mubr.bf16.gmra.mrb[0].mxu0 %v1043
        %v1259 = vpop.f32.mrb[0].mxu0
        %v1260 = vadd.f32 %v744, %v1259
        %v1261 = vpop.f32.mrb[0].mxu0
        %v1262 = vpop.f32.mrb[0].mxu0
        %v1263 = vadd.f32 %v744, %v1262
        %v1264 = vpop.f32.mrb[0].mxu0
        %1265 = vmatprep.mubr.bf16.mxu0 0
        %1266 = vmatmul.mubr.bf16.gmra.mrb[0].mxu0 %v1046
        %v1267 = vpop.f32.mrb[0].mxu0
        %v1268 = vadd.f32 %v744, %v1267
        %v1269 = vpop.f32.mrb[0].mxu0
        %v1270 = vpop.f32.mrb[0].mxu0
        %v1271 = vadd.f32 %v744, %v1270
        %v1272 = vpop.f32.mrb[0].mxu0
        %1273 = vmatprep.mubr.bf16.mxu0 0
        %1274 = vmatmul.mubr.bf16.gmra.mrb[0].mxu0 %v1049
        %v1275 = vpop.f32.mrb[0].mxu0
        %v1276 = vadd.f32 %v744, %v1275
        %v1277 = vpop.f32.mrb[0].mxu0
        %v1278 = vpop.f32.mrb[0].mxu0
        %v1279 = vadd.f32 %v744, %v1278
        %v1280 = vpop.f32.mrb[0].mxu0
        %1281 = vmatprep.mubr.bf16.mxu0 0
        %1282 = vmatmul.mubr.bf16.gmra.mrb[0].mxu0 %v1052
        %v1283 = vpop.f32.mrb[0].mxu0
        %v1284 = vadd.f32 %v744, %v1283
        %v1285 = vpop.f32.mrb[0].mxu0
        %v1286 = vpop.f32.mrb[0].mxu0
        %v1287 = vadd.f32 %v744, %v1286
        %v1288 = vpop.f32.mrb[0].mxu0
        %1289 = vmatprep.mubr.bf16.mxu0 0
        %1290 = vmatmul.mubr.bf16.gmra.mrb[0].mxu0 %v1055
        %v1291 = vpop.f32.mrb[0].mxu0
        %v1292 = vadd.f32 %v744, %v1291
        %v1293 = vpop.f32.mrb[0].mxu0
        %v1294 = vpop.f32.mrb[0].mxu0
        %v1295 = vadd.f32 %v744, %v1294
        %v1296 = vpop.f32.mrb[0].mxu0
        %1297 = vmatprep.mubr.bf16.mxu0 0
        %1298 = vmatmul.mubr.bf16.gmra.mrb[0].mxu0 %v1058
        %v1299 = vpop.f32.mrb[0].mxu0
        %v1300 = vadd.f32 %v744, %v1299
        %v1301 = vpop.f32.mrb[0].mxu0
        %v1302 = vpop.f32.mrb[0].mxu0
        %v1303 = vadd.f32 %v744, %v1302
        %v1304 = vpop.f32.mrb[0].mxu0
        %1305 = vmatprep.mubr.bf16.mxu0 0
        %1306 = vmatmul.mubr.bf16.gmra.mrb[0].mxu0 %v1061
        %v1307 = vpop.f32.mrb[0].mxu0
        %v1308 = vadd.f32 %v744, %v1307
        %v1309 = vpop.f32.mrb[0].mxu0
        %v1310 = vpop.f32.mrb[0].mxu0
        %v1311 = vadd.f32 %v744, %v1310
        %v1312 = vpop.f32.mrb[0].mxu0
        %1313 = vmatprep.mubr.bf16.mxu0 0
        %1314 = vmatmul.mubr.bf16.gmra.mrb[0].mxu0 %v1064
        %v1315 = vpop.f32.mrb[0].mxu0
        %v1316 = vadd.f32 %v744, %v1315
        %v1317 = vpop.f32.mrb[0].mxu0
        %v1318 = vpop.f32.mrb[0].mxu0
        %v1319 = vadd.f32 %v744, %v1318
        %v1320 = vpop.f32.mrb[0].mxu0
        %1321 = vmatprep.mubr.bf16.mxu0 0
        %1322 = vmatmul.mubr.bf16.gmra.mrb[0].mxu0 %v1067
        %v1323 = vpop.f32.mrb[0].mxu0
        %v1324 = vadd.f32 %v744, %v1323
        %v1325 = vpop.f32.mrb[0].mxu0
        %v1326 = vpop.f32.mrb[0].mxu0
        %v1327 = vadd.f32 %v744, %v1326
        %v1328 = vpop.f32.mrb[0].mxu0
        %1329 = vmatprep.mubr.bf16.mxu0 0
        %1330 = vmatmul.mubr.bf16.gmra.mrb[0].mxu0 %v1070
        %v1331 = vpop.f32.mrb[0].mxu0
        %v1332 = vadd.f32 %v744, %v1331
        %v1333 = vpop.f32.mrb[0].mxu0
        %v1334 = vpop.f32.mrb[0].mxu0
        %v1335 = vadd.f32 %v744, %v1334
        %v1336 = vpop.f32.mrb[0].mxu0
        %1337 = vmatprep.mubr.bf16.mxu0 0
        %1338 = vmatmul.mubr.bf16.gmra.mrb[0].mxu0 %v1073
        %v1339 = vpop.f32.mrb[0].mxu0
        %v1340 = vadd.f32 %v744, %v1339
        %v1341 = vpop.f32.mrb[0].mxu0
        %v1342 = vpop.f32.mrb[0].mxu0
        %v1343 = vadd.f32 %v744, %v1342
        %v1344 = vpop.f32.mrb[0].mxu0
        %1345 = vmatprep.mubr.bf16.mxu0 0
        %1346 = vmatmul.mubr.bf16.gmra.mrb[0].mxu0 %v1076
        %v1347 = vpop.f32.mrb[0].mxu0
        %v1348 = vadd.f32 %v744, %v1347
        %v1349 = vpop.f32.mrb[0].mxu0
        %v1350 = vpop.f32.mrb[0].mxu0
        %v1351 = vadd.f32 %v744, %v1350
        %v1352 = vpop.f32.mrb[0].mxu0
        %1353 = vmatprep.mubr.bf16.mxu0 0
        %1354 = vmatmul.mubr.bf16.gmra.mrb[0].mxu0 %v1079
        %v1355 = vpop.f32.mrb[0].mxu0
        %v1356 = vadd.f32 %v744, %v1355
        %v1357 = vpop.f32.mrb[0].mxu0
        %v1358 = vpop.f32.mrb[0].mxu0
        %v1359 = vadd.f32 %v744, %v1358
        %v1360 = vpop.f32.mrb[0].mxu0
        %1361 = vmatprep.mubr.bf16.mxu0 0
        %1362 = vmatmul.mubr.bf16.gmra.mrb[0].mxu0 %v1082
        %v1363 = vpop.f32.mrb[0].mxu0
        %v1364 = vadd.f32 %v744, %v1363
        %v1365 = vpop.f32.mrb[0].mxu0
        %v1366 = vpop.f32.mrb[0].mxu0
        %v1367 = vadd.f32 %v744, %v1366
        %v1368 = vpop.f32.mrb[0].mxu0
        %1369 = vmatprep.mubr.bf16.mxu0 0
        %1370 = vmatmul.mubr.bf16.gmra.mrb[0].mxu0 %v1085
        %v1371 = vpop.f32.mrb[0].mxu0
        %v1372 = vadd.f32 %v744, %v1371
        %v1373 = vpop.f32.mrb[0].mxu0
        %v1374 = vpop.f32.mrb[0].mxu0
        %v1375 = vadd.f32 %v744, %v1374
        %v1376 = vpop.f32.mrb[0].mxu0
        %1377 = vmatprep.mubr.bf16.mxu0 0
        %1378 = vmatmul.mubr.bf16.gmra.mrb[0].mxu0 %v1088
        %v1379 = vpop.f32.mrb[0].mxu0
        %v1380 = vadd.f32 %v744, %v1379
        %v1381 = vpop.f32.mrb[0].mxu0
        %v1382 = vpop.f32.mrb[0].mxu0
        %v1383 = vadd.f32 %v744, %v1382
        %v1384 = vpop.f32.mrb[0].mxu0
        %1385 = vmatprep.mubr.bf16.mxu0 0
        %1386 = vmatmul.mubr.bf16.gmra.mrb[0].mxu0 %v1091
        %v1387 = vpop.f32.mrb[0].mxu0
        %v1388 = vadd.f32 %v744, %v1387
        %v1389 = vpop.f32.mrb[0].mxu0
        %v1390 = vpop.f32.mrb[0].mxu0
        %v1391 = vadd.f32 %v744, %v1390
        %v1392 = vpop.f32.mrb[0].mxu0
        %1393 = vmatprep.mubr.bf16.mxu0 0
        %1394 = vmatmul.mubr.bf16.gmra.mrb[0].mxu0 %v1094
        %v1395 = vpop.f32.mrb[0].mxu0
        %v1396 = vadd.f32 %v744, %v1395
        %v1397 = vpop.f32.mrb[0].mxu0
        %v1398 = vpop.f32.mrb[0].mxu0
        %v1399 = vadd.f32 %v744, %v1398
        %v1400 = vpop.f32.mrb[0].mxu0
        %1401 = vmatprep.mubr.bf16.mxu0 0
        %1402 = vmatmul.mubr.bf16.gmra.mrb[0].mxu0 %v1097
        %v1403 = vpop.f32.mrb[0].mxu0
        %v1404 = vadd.f32 %v744, %v1403
        %v1405 = vpop.f32.mrb[0].mxu0
        %v1406 = vpop.f32.mrb[0].mxu0
        %v1407 = vadd.f32 %v744, %v1406
        %v1408 = vpop.f32.mrb[0].mxu0
        %1409 = vmatprep.mubr.bf16.mxu0 0
        %1410 = vmatmul.mubr.bf16.gmra.mrb[0].mxu0 %v1100
        %v1411 = vpop.f32.mrb[0].mxu0
        %v1412 = vadd.f32 %v744, %v1411
        %v1413 = vpop.f32.mrb[0].mxu0
        %v1414 = vpop.f32.mrb[0].mxu0
        %v1415 = vadd.f32 %v744, %v1414
        %v1416 = vpop.f32.mrb[0].mxu0
        %1417 = vmatprep.mubr.bf16.mxu0 0
        %1418 = vmatmul.mubr.bf16.gmra.mrb[0].mxu0 %v1103
        %v1419 = vpop.f32.mrb[0].mxu0
        %v1420 = vadd.f32 %v744, %v1419
        %v1421 = vpop.f32.mrb[0].mxu0
        %v1422 = vpop.f32.mrb[0].mxu0
        %v1423 = vadd.f32 %v744, %v1422
        %v1424 = vpop.f32.mrb[0].mxu0
        %1425 = vmatprep.mubr.bf16.mxu0 0
        %1426 = vmatmul.mubr.bf16.gmra.mrb[0].mxu0 %v1106
        %v1427 = vpop.f32.mrb[0].mxu0
        %v1428 = vadd.f32 %v744, %v1427
        %v1429 = vpop.f32.mrb[0].mxu0
        %v1430 = vpop.f32.mrb[0].mxu0
        %v1431 = vadd.f32 %v744, %v1430
        %v1432 = vpop.f32.mrb[0].mxu0
        %1433 = vmatprep.mubr.bf16.mxu0 0
        %1434 = vmatmul.mubr.bf16.gmra.mrb[0].mxu0 %v1109
        %v1435 = vpop.f32.mrb[0].mxu0
        %v1436 = vadd.f32 %v744, %v1435
        %v1437 = vpop.f32.mrb[0].mxu0
        %v1438 = vpop.f32.mrb[0].mxu0
        %v1439 = vadd.f32 %v744, %v1438
        %v1440 = vpop.f32.mrb[0].mxu0
        %1441 = vmatprep.mubr.bf16.mxu0 0
        %1442 = vmatmul.mubr.bf16.gmra.mrb[0].mxu0 %v1112
        %v1443 = vpop.f32.mrb[0].mxu0
        %v1444 = vadd.f32 %v744, %v1443
        %v1445 = vpop.f32.mrb[0].mxu0
        %v1446 = vpop.f32.mrb[0].mxu0
        %v1447 = vadd.f32 %v744, %v1446
        %v1448 = vpop.f32.mrb[0].mxu0
        %1449 = vmatprep.mubr.bf16.mxu0 0
        %1450 = vmatmul.mubr.bf16.gmra.mrb[0].mxu0 %v1115
        %v1451 = vpop.f32.mrb[0].mxu0
        %v1452 = vadd.f32 %v744, %v1451
        %v1453 = vpop.f32.mrb[0].mxu0
        %v1454 = vpop.f32.mrb[0].mxu0
        %v1455 = vadd.f32 %v744, %v1454
        %v1456 = vpop.f32.mrb[0].mxu0
        %1457 = vmatprep.mubr.bf16.mxu0 0
        %1458 = vmatmul.mubr.bf16.gmra.mrb[0].mxu0 %v1118
        %v1459 = vpop.f32.mrb[0].mxu0
        %v1460 = vadd.f32 %v744, %v1459
        %v1461 = vpop.f32.mrb[0].mxu0
        %v1462 = vpop.f32.mrb[0].mxu0
        %v1463 = vadd.f32 %v744, %v1462
        %v1464 = vpop.f32.mrb[0].mxu0
        %1465 = vmatprep.mubr.bf16.mxu0 0
        %1466 = vmatmul.mubr.bf16.gmra.mrb[0].mxu0 %v1121
        %v1467 = vpop.f32.mrb[0].mxu0
        %v1468 = vadd.f32 %v744, %v1467
        %v1469 = vpop.f32.mrb[0].mxu0
        %v1470 = vpop.f32.mrb[0].mxu0
        %v1471 = vadd.f32 %v744, %v1470
        %v1472 = vpop.f32.mrb[0].mxu0
        %1473 = vmatprep.mubr.bf16.mxu0 0
        %1474 = vmatmul.mubr.bf16.gmra.mrb[0].mxu0 %v1124
        %v1475 = vpop.f32.mrb[0].mxu0
        %v1476 = vadd.f32 %v744, %v1475
        %v1477 = vpop.f32.mrb[0].mxu0
        %v1478 = vpop.f32.mrb[0].mxu0
        %v1479 = vadd.f32 %v744, %v1478
        %v1480 = vpop.f32.mrb[0].mxu0
        %1481 = vmatprep.mubr.bf16.mxu0 0
        %1482 = vmatmul.mubr.bf16.gmra.mrb[0].mxu0 %v1127
        %v1483 = vpop.f32.mrb[0].mxu0
        %v1484 = vadd.f32 %v744, %v1483
        %v1485 = vpop.f32.mrb[0].mxu0
        %v1486 = vpop.f32.mrb[0].mxu0
        %v1487 = vadd.f32 %v744, %v1486
        %v1488 = vpop.f32.mrb[0].mxu0
        %1489 = vmatprep.mubr.bf16.mxu0 0
        %1490 = vmatmul.mubr.bf16.gmra.mrb[0].mxu0 %v1130
        %v1491 = vpop.f32.mrb[0].mxu0
        %v1492 = vadd.f32 %v744, %v1491
        %v1493 = vpop.f32.mrb[0].mxu0
        %v1494 = vpop.f32.mrb[0].mxu0
        %v1495 = vadd.f32 %v744, %v1494
        %v1496 = vpop.f32.mrb[0].mxu0
        %1497 = vmatprep.mubr.bf16.mxu0 0
        %1498 = vmatmul.mubr.bf16.gmra.mrb[0].mxu0 %v1133
        %v1499 = vpop.f32.mrb[0].mxu0
        %v1500 = vadd.f32 %v744, %v1499
        %v1501 = vpop.f32.mrb[0].mxu0
        %v1502 = vpop.f32.mrb[0].mxu0
        %v1503 = vadd.f32 %v744, %v1502
        %v1504 = vpop.f32.mrb[0].mxu0
        %1505 = vmatprep.mubr.bf16.mxu0 0
        %1506 = vmatmul.mubr.bf16.gmra.mrb[0].mxu0 %v1136
        %v1507 = vpop.f32.mrb[0].mxu0
        %v1508 = vadd.f32 %v744, %v1507
        %v1509 = vpop.f32.mrb[0].mxu0
        %v1510 = vpop.f32.mrb[0].mxu0
        %v1511 = vadd.f32 %v744, %v1510
        %v1512 = vpop.f32.mrb[0].mxu0
        %1513 = vmatprep.mubr.bf16.mxu0 0
        %1514 = vmatmul.mubr.bf16.gmra.mrb[0].mxu0 %v1139
        %v1515 = vpop.f32.mrb[0].mxu0
        %v1516 = vadd.f32 %v744, %v1515
        %v1517 = vpop.f32.mrb[0].mxu0
        %v1518 = vpop.f32.mrb[0].mxu0
        %v1519 = vadd.f32 %v744, %v1518
        %v1520 = vpop.f32.mrb[0].mxu0
        %1521 = vmatprep.mubr.bf16.mxu0 0
        %1522 = vmatmul.mubr.bf16.gmra.mrb[0].mxu0 %v1142
        %v1523 = vpop.f32.mrb[0].mxu0
        %v1524 = vadd.f32 %v744, %v1523
        %v1525 = vpop.f32.mrb[0].mxu0
        %v1526 = vpop.f32.mrb[0].mxu0
        %v1527 = vadd.f32 %v744, %v1526
        %v1528 = vpop.f32.mrb[0].mxu0
        %1529 = vmatprep.mubr.bf16.mxu0 0
        %1530 = vmatmul.mubr.bf16.gmra.mrb[0].mxu0 %v1145
        %v1531 = vpop.f32.mrb[0].mxu0
        %v1532 = vadd.f32 %v744, %v1531
        %v1533 = vpop.f32.mrb[0].mxu0
        %v1534 = vpop.f32.mrb[0].mxu0
        %v1535 = vadd.f32 %v744, %v1534
        %v1536 = vpop.f32.mrb[0].mxu0
        %1537 = vmatprep.mubr.bf16.mxu0 0
        %1538 = vmatmul.mubr.bf16.gmra.mrb[0].mxu0 %v1148
        %v1539 = vpop.f32.mrb[0].mxu0
        %v1540 = vadd.f32 %v744, %v1539
        %v1541 = vpop.f32.mrb[0].mxu0
        %v1542 = vpop.f32.mrb[0].mxu0
        %v1543 = vadd.f32 %v744, %v1542
        %v1544 = vpop.f32.mrb[0].mxu0
        %1545 = vmatprep.mubr.bf16.mxu0 0
        %1546 = vmatmul.mubr.bf16.gmra.mrb[0].mxu0 %v1151
        %v1547 = vpop.f32.mrb[0].mxu0
        %v1548 = vadd.f32 %v744, %v1547
        %v1549 = vpop.f32.mrb[0].mxu0
        %v1550 = vpop.f32.mrb[0].mxu0
        %v1551 = vadd.f32 %v744, %v1550
        %v1552 = vpop.f32.mrb[0].mxu0
        %1553 = vmatprep.mubr.bf16.mxu0 0
        %1554 = vmatmul.mubr.bf16.gmra.mrb[0].mxu0 %v1154
        %v1555 = vpop.f32.mrb[0].mxu0
        %v1556 = vadd.f32 %v744, %v1555
        %v1557 = vpop.f32.mrb[0].mxu0
        %v1558 = vpop.f32.mrb[0].mxu0
        %v1559 = vadd.f32 %v744, %v1558
        %v1560 = vpop.f32.mrb[0].mxu0
        %1561 = vmatprep.mubr.bf16.mxu0 0
        %1562 = vmatmul.mubr.bf16.gmra.mrb[0].mxu0 %v1157
        %v1563 = vpop.f32.mrb[0].mxu0
        %v1564 = vadd.f32 %v744, %v1563
        %v1565 = vpop.f32.mrb[0].mxu0
        %v1566 = vpop.f32.mrb[0].mxu0
        %v1567 = vadd.f32 %v744, %v1566
        %v1568 = vpop.f32.mrb[0].mxu0
        %1569 = vmatprep.mubr.bf16.mxu0 0
        %1570 = vmatmul.mubr.bf16.gmra.mrb[0].mxu0 %v1160
        %v1571 = vpop.f32.mrb[0].mxu0
        %v1572 = vadd.f32 %v744, %v1571
        %v1573 = vpop.f32.mrb[0].mxu0
        %v1574 = vpop.f32.mrb[0].mxu0
        %v1575 = vadd.f32 %v744, %v1574
        %v1576 = vpop.f32.mrb[0].mxu0
        %1577 = vmatprep.mubr.bf16.mxu0 0
        %1578 = vmatmul.mubr.bf16.gmra.mrb[0].mxu0 %v1163
        %v1579 = vpop.f32.mrb[0].mxu0
        %v1580 = vadd.f32 %v744, %v1579
        %v1581 = vpop.f32.mrb[0].mxu0
        %v1582 = vpop.f32.mrb[0].mxu0
        %v1583 = vadd.f32 %v744, %v1582
        %v1584 = vpop.f32.mrb[0].mxu0
        %1585 = vdwg.mxu0
        %v1586 = vtanh.pop %v1204
        %v1587 = vtanh.pop %v1207
        %v1588 = vtanh.pop %v1212
        %v1589 = vtanh.pop %v1215
        %v1590 = vtanh.pop %v1220
        %v1591 = vtanh.pop %v1223
        %v1592 = vtanh.pop %v1228
        %v1593 = vtanh.pop %v1231
        %v1594 = vtanh.pop %v1236
        %v1595 = vtanh.pop %v1239
        %v1596 = vtanh.pop %v1244
        %v1597 = vtanh.pop %v1247
        %v1598 = vtanh.pop %v1252
        %v1599 = vtanh.pop %v1255
        %v1600 = vtanh.pop %v1260
        %v1601 = vtanh.pop %v1263
        %v1602 = vtanh.pop %v1268
        %v1603 = vtanh.pop %v1271
        %v1604 = vtanh.pop %v1276
        %v1605 = vtanh.pop %v1279
        %v1606 = vtanh.pop %v1284
        %v1607 = vtanh.pop %v1287
        %v1608 = vtanh.pop %v1292
        %v1609 = vtanh.pop %v1295
        %v1610 = vtanh.pop %v1300
        %v1611 = vtanh.pop %v1303
        %v1612 = vtanh.pop %v1308
        %v1613 = vtanh.pop %v1311
        %v1614 = vtanh.pop %v1316
        %v1615 = vtanh.pop %v1319
        %v1616 = vtanh.pop %v1324
        %v1617 = vtanh.pop %v1327
        %v1618 = vtanh.pop %v1332
        %v1619 = vtanh.pop %v1335
        %v1620 = vtanh.pop %v1340
        %v1621 = vtanh.pop %v1343
        %v1622 = vtanh.pop %v1348
        %v1623 = vtanh.pop %v1351
        %v1624 = vtanh.pop %v1356
        %v1625 = vtanh.pop %v1359
        %v1626 = vtanh.pop %v1364
        %v1627 = vtanh.pop %v1367
        %v1628 = vtanh.pop %v1372
        %v1629 = vtanh.pop %v1375
        %v1630 = vtanh.pop %v1380
        %v1631 = vtanh.pop %v1383
        %v1632 = vtanh.pop %v1388
        %v1633 = vtanh.pop %v1391
        %v1634 = vtanh.pop %v1396
        %v1635 = vtanh.pop %v1399
        %v1636 = vtanh.pop %v1404
        %v1637 = vtanh.pop %v1407
        %v1638 = vtanh.pop %v1412
        %v1639 = vtanh.pop %v1415
        %v1640 = vtanh.pop %v1420
        %v1641 = vtanh.pop %v1423
        %v1642 = vtanh.pop %v1428
        %v1643 = vtanh.pop %v1431
        %v1644 = vtanh.pop %v1436
        %v1645 = vtanh.pop %v1439
        %v1646 = vtanh.pop %v1444
        %v1647 = vtanh.pop %v1447
        %v1648 = vtanh.pop %v1452
        %v1649 = vtanh.pop %v1455
        %v1650 = vtanh.pop %v1460
        %v1651 = vtanh.pop %v1463
        %v1652 = vtanh.pop %v1468
        %v1653 = vtanh.pop %v1471
        %v1654 = vtanh.pop %v1476
        %v1655 = vtanh.pop %v1479
        %v1656 = vtanh.pop %v1484
        %v1657 = vtanh.pop %v1487
        %v1658 = vtanh.pop %v1492
        %v1659 = vtanh.pop %v1495
        %v1660 = vtanh.pop %v1500
        %v1661 = vtanh.pop %v1503
        %v1662 = vtanh.pop %v1508
        %v1663 = vtanh.pop %v1511
        %v1664 = vtanh.pop %v1516
        %v1665 = vtanh.pop %v1519
        %v1666 = vtanh.pop %v1524
        %v1667 = vtanh.pop %v1527
        %v1668 = vtanh.pop %v1532
        %v1669 = vtanh.pop %v1535
        %v1670 = vtanh.pop %v1540
        %v1671 = vtanh.pop %v1543
        %v1672 = vtanh.pop %v1548
        %v1673 = vtanh.pop %v1551
        %v1674 = vtanh.pop %v1556
        %v1675 = vtanh.pop %v1559
        %v1676 = vtanh.pop %v1564
        %v1677 = vtanh.pop %v1567
        %v1678 = vtanh.pop %v1572
        %v1679 = vtanh.pop %v1575
        %v1680 = vtanh.pop %v1580
        %v1681 = vtanh.pop %v1583
        %v1682 = vpack.c.bf16 %v1587, %v1586
        %v1683 = vpack.c.bf16 %v1589, %v1588
        %v1684 = vpack.c.bf16 %v1591, %v1590
        %v1685 = vpack.c.bf16 %v1593, %v1592
        %v1686 = vpack.c.bf16 %v1595, %v1594
        %v1687 = vpack.c.bf16 %v1597, %v1596
        %v1688 = vpack.c.bf16 %v1599, %v1598
        %v1689 = vpack.c.bf16 %v1601, %v1600
        %v1690 = vpack.c.bf16 %v1603, %v1602
        %v1691 = vpack.c.bf16 %v1605, %v1604
        %v1692 = vpack.c.bf16 %v1607, %v1606
        %v1693 = vpack.c.bf16 %v1609, %v1608
        %v1694 = vpack.c.bf16 %v1611, %v1610
        %v1695 = vpack.c.bf16 %v1613, %v1612
        %v1696 = vpack.c.bf16 %v1615, %v1614
        %v1697 = vpack.c.bf16 %v1617, %v1616
        %v1698 = vpack.c.bf16 %v1619, %v1618
        %v1699 = vpack.c.bf16 %v1621, %v1620
        %v1700 = vpack.c.bf16 %v1623, %v1622
        %v1701 = vpack.c.bf16 %v1625, %v1624
        %v1702 = vpack.c.bf16 %v1627, %v1626
        %v1703 = vpack.c.bf16 %v1629, %v1628
        %v1704 = vpack.c.bf16 %v1631, %v1630
        %v1705 = vpack.c.bf16 %v1633, %v1632
        %v1706 = vpack.c.bf16 %v1635, %v1634
        %v1707 = vpack.c.bf16 %v1637, %v1636
        %v1708 = vpack.c.bf16 %v1639, %v1638
        %v1709 = vpack.c.bf16 %v1641, %v1640
        %v1710 = vpack.c.bf16 %v1643, %v1642
        %v1711 = vpack.c.bf16 %v1645, %v1644
        %v1712 = vpack.c.bf16 %v1647, %v1646
        %v1713 = vpack.c.bf16 %v1649, %v1648
        %v1714 = vpack.c.bf16 %v1651, %v1650
        %v1715 = vpack.c.bf16 %v1653, %v1652
        %v1716 = vpack.c.bf16 %v1655, %v1654
        %v1717 = vpack.c.bf16 %v1657, %v1656
        %v1718 = vpack.c.bf16 %v1659, %v1658
        %v1719 = vpack.c.bf16 %v1661, %v1660
        %v1720 = vpack.c.bf16 %v1663, %v1662
        %v1721 = vpack.c.bf16 %v1665, %v1664
        %v1722 = vpack.c.bf16 %v1667, %v1666
        %v1723 = vpack.c.bf16 %v1669, %v1668
        %v1724 = vpack.c.bf16 %v1671, %v1670
        %v1725 = vpack.c.bf16 %v1673, %v1672
        %v1726 = vpack.c.bf16 %v1675, %v1674
        %v1727 = vpack.c.bf16 %v1677, %v1676
        %v1728 = vpack.c.bf16 %v1679, %v1678
        %v1729 = vpack.c.bf16 %v1681, %v1680
        %v1730 = vunpack.c.l.bf16 %v638
        %v1731 = vlaneseq
        %v1732 = vshrl.u32 %v1731, 7
        %v1733 = vsub.s32 0, %v1732
        %v1734 = vrot.slane %v1730, %v1733
        %v1742 = vunpack.c.l.b16 %v631
        %v1743 = vunpack.c.l.b16 %v632
        %v1744 = vunpack.c.l.b16 %v633
        %v1745 = vunpack.c.l.b16 %v634
        %v1746 = vunpack.c.l.b16 %v635
        %v1747 = vunpack.c.l.b16 %v636
        %v1748 = vunpack.c.l.b16 %v637
        %v1749 = vpack.c.b16 %v1743, %v1742
        %v1750 = vpack.c.b16 %v1745, %v1744
        %v1751 = vpack.c.b16 %v1747, %v1746
        %v1752 = vpack.c.b16 %v1748, %v1748
        %vm1756 = vcmask 408576
        %v1758 = vsel %vm1756, %v1682, 0
        %v1761 = vsel %vm1756, %v1683, 0
        %v1764 = vsel %vm1756, %v1684, 0
        %v1767 = vsel %vm1756, %v1685, 0
        %v1770 = vsel %vm1756, %v1686, 0
        %v1773 = vsel %vm1756, %v1687, 0
        %v1776 = vsel %vm1756, %v1688, 0
        %v1779 = vsel %vm1756, %v1689, 0
        %v1782 = vsel %vm1756, %v1690, 0
        %v1785 = vsel %vm1756, %v1691, 0
        %v1788 = vsel %vm1756, %v1692, 0
        %v1791 = vsel %vm1756, %v1693, 0
        %v1794 = vsel %vm1756, %v1694, 0
        %v1797 = vsel %vm1756, %v1695, 0
        %v1800 = vsel %vm1756, %v1696, 0
        %v1803 = vsel %vm1756, %v1697, 0
        %v1806 = vsel %vm1756, %v1698, 0
        %v1809 = vsel %vm1756, %v1699, 0
        %v1812 = vsel %vm1756, %v1700, 0
        %v1815 = vsel %vm1756, %v1701, 0
        %v1818 = vsel %vm1756, %v1702, 0
        %v1821 = vsel %vm1756, %v1703, 0
        %v1824 = vsel %vm1756, %v1704, 0
        %v1827 = vsel %vm1756, %v1705, 0
        %v1830 = vsel %vm1756, %v1706, 0
        %v1833 = vsel %vm1756, %v1707, 0
        %v1836 = vsel %vm1756, %v1708, 0
        %v1839 = vsel %vm1756, %v1709, 0
        %v1842 = vsel %vm1756, %v1710, 0
        %v1845 = vsel %vm1756, %v1711, 0
        %v1848 = vsel %vm1756, %v1712, 0
        %v1851 = vsel %vm1756, %v1713, 0
        %v1854 = vsel %vm1756, %v1714, 0
        %v1857 = vsel %vm1756, %v1715, 0
        %v1860 = vsel %vm1756, %v1716, 0
        %v1863 = vsel %vm1756, %v1717, 0
        %v1866 = vsel %vm1756, %v1718, 0
        %v1869 = vsel %vm1756, %v1719, 0
        %v1872 = vsel %vm1756, %v1720, 0
        %v1875 = vsel %vm1756, %v1721, 0
        %v1878 = vsel %vm1756, %v1722, 0
        %v1881 = vsel %vm1756, %v1723, 0
        %v1884 = vsel %vm1756, %v1724, 0
        %v1887 = vsel %vm1756, %v1725, 0
        %v1890 = vsel %vm1756, %v1726, 0
        %v1893 = vsel %vm1756, %v1727, 0
        %v1896 = vsel %vm1756, %v1728, 0
        %v1899 = vsel %vm1756, %v1729, 0
        %vm1901 = vcmask 1040384
        %v1903 = vsel %vm1901, %v1752, 0
        %1905 = vmatprep.subr.bf16.mxu0 0
        %1906 = vmatpush1.bf16.msra.mxu0 %v1749
        %1907 = vmatprep.subr.bf16.mxu0 0
        %1908 = vmatpush1.bf16.msra.mxu0 %v1750
        %1909 = vmatprep.subr.bf16.mxu0 0
        %1910 = vmatpush1.bf16.msra.mxu0 %v1751
        %1911 = vmatprep.subr.bf16.mxu0 0
        %1912 = vmatpush1.bf16.msra.mxu0 %v1903
        %1913 = vmatprep.subr.bf16.mxu0 0
        %1914 = vmatpush1.bf16.msra.mxu0 0
        %1915 = vmatprep.subr.bf16.mxu0 0
        %1916 = vmatpush1.bf16.msra.mxu0 0
        %1917 = vmatprep.subr.bf16.mxu0 0
        %1918 = vmatpush1.bf16.msra.mxu0 0
        %1919 = vmatprep.subr.bf16.mxu0 0
        %1920 = vmatpush1.bf16.msra.mxu0 0
        %1921 = vmatprep.subr.bf16.mxu0 0
        %1922 = vmatpush1.bf16.msra.mxu0 0
        %1923 = vmatprep.subr.bf16.mxu0 0
        %1924 = vmatpush1.bf16.msra.mxu0 0
        %1925 = vmatprep.subr.bf16.mxu0 0
        %1926 = vmatpush1.bf16.msra.mxu0 0
        %1927 = vmatprep.subr.bf16.mxu0 0
        %1928 = vmatpush1.bf16.msra.mxu0 0
        %1929 = vmatprep.subr.bf16.mxu0 0
        %1930 = vmatpush1.bf16.msra.mxu0 0
        %1931 = vmatprep.subr.bf16.mxu0 0
        %1932 = vmatpush1.bf16.msra.mxu0 0
        %1933 = vmatprep.subr.bf16.mxu0 0
        %1934 = vmatpush1.bf16.msra.mxu0 0
        %1935 = vmatprep.subr.bf16.mxu0 0
        %1936 = vmatpush1.bf16.msra.mxu0 0
        %1937 = vmatprep.mubr.bf16.mxu0 0
        %1938 = vmatmul.mubr.bf16.gmra.mrb[0].mxu0 %v1758
        %v1939 = vpop.f32.mrb[0].mxu0
        %v1940 = vadd.f32 %v1734, %v1939
        %v1941 = vpop.f32.mrb[0].mxu0
        %v1942 = vpop.f32.mrb[0].mxu0
        %v1943 = vadd.f32 %v1734, %v1942
        %v1944 = vpop.f32.mrb[0].mxu0
        %1945 = vmatprep.mubr.bf16.mxu0 0
        %1946 = vmatmul.mubr.bf16.gmra.mrb[0].mxu0 %v1761
        %v1947 = vpop.f32.mrb[0].mxu0
        %v1948 = vadd.f32 %v1734, %v1947
        %v1949 = vpop.f32.mrb[0].mxu0
        %v1950 = vpop.f32.mrb[0].mxu0
        %v1951 = vadd.f32 %v1734, %v1950
        %v1952 = vpop.f32.mrb[0].mxu0
        %1953 = vmatprep.mubr.bf16.mxu0 0
        %1954 = vmatmul.mubr.bf16.gmra.mrb[0].mxu0 %v1764
        %v1955 = vpop.f32.mrb[0].mxu0
        %v1956 = vadd.f32 %v1734, %v1955
        %v1957 = vpop.f32.mrb[0].mxu0
        %v1958 = vpop.f32.mrb[0].mxu0
        %v1959 = vadd.f32 %v1734, %v1958
        %v1960 = vpop.f32.mrb[0].mxu0
        %1961 = vmatprep.mubr.bf16.mxu0 0
        %1962 = vmatmul.mubr.bf16.gmra.mrb[0].mxu0 %v1767
        %v1963 = vpop.f32.mrb[0].mxu0
        %v1964 = vadd.f32 %v1734, %v1963
        %v1965 = vpop.f32.mrb[0].mxu0
        %v1966 = vpop.f32.mrb[0].mxu0
        %v1967 = vadd.f32 %v1734, %v1966
        %v1968 = vpop.f32.mrb[0].mxu0
        %1969 = vmatprep.mubr.bf16.mxu0 0
        %1970 = vmatmul.mubr.bf16.gmra.mrb[0].mxu0 %v1770
        %v1971 = vpop.f32.mrb[0].mxu0
        %v1972 = vadd.f32 %v1734, %v1971
        %v1973 = vpop.f32.mrb[0].mxu0
        %v1974 = vpop.f32.mrb[0].mxu0
        %v1975 = vadd.f32 %v1734, %v1974
        %v1976 = vpop.f32.mrb[0].mxu0
        %1977 = vmatprep.mubr.bf16.mxu0 0
        %1978 = vmatmul.mubr.bf16.gmra.mrb[0].mxu0 %v1773
        %v1979 = vpop.f32.mrb[0].mxu0
        %v1980 = vadd.f32 %v1734, %v1979
        %v1981 = vpop.f32.mrb[0].mxu0
        %v1982 = vpop.f32.mrb[0].mxu0
        %v1983 = vadd.f32 %v1734, %v1982
        %v1984 = vpop.f32.mrb[0].mxu0
        %1985 = vmatprep.mubr.bf16.mxu0 0
        %1986 = vmatmul.mubr.bf16.gmra.mrb[0].mxu0 %v1776
        %v1987 = vpop.f32.mrb[0].mxu0
        %v1988 = vadd.f32 %v1734, %v1987
        %v1989 = vpop.f32.mrb[0].mxu0
        %v1990 = vpop.f32.mrb[0].mxu0
        %v1991 = vadd.f32 %v1734, %v1990
        %v1992 = vpop.f32.mrb[0].mxu0
        %1993 = vmatprep.mubr.bf16.mxu0 0
        %1994 = vmatmul.mubr.bf16.gmra.mrb[0].mxu0 %v1779
        %v1995 = vpop.f32.mrb[0].mxu0
        %v1996 = vadd.f32 %v1734, %v1995
        %v1997 = vpop.f32.mrb[0].mxu0
        %v1998 = vpop.f32.mrb[0].mxu0
        %v1999 = vadd.f32 %v1734, %v1998
        %v2000 = vpop.f32.mrb[0].mxu0
        %2001 = vmatprep.mubr.bf16.mxu0 0
        %2002 = vmatmul.mubr.bf16.gmra.mrb[0].mxu0 %v1782
        %v2003 = vpop.f32.mrb[0].mxu0
        %v2004 = vadd.f32 %v1734, %v2003
        %v2005 = vpop.f32.mrb[0].mxu0
        %v2006 = vpop.f32.mrb[0].mxu0
        %v2007 = vadd.f32 %v1734, %v2006
        %v2008 = vpop.f32.mrb[0].mxu0
        %2009 = vmatprep.mubr.bf16.mxu0 0
        %2010 = vmatmul.mubr.bf16.gmra.mrb[0].mxu0 %v1785
        %v2011 = vpop.f32.mrb[0].mxu0
        %v2012 = vadd.f32 %v1734, %v2011
        %v2013 = vpop.f32.mrb[0].mxu0
        %v2014 = vpop.f32.mrb[0].mxu0
        %v2015 = vadd.f32 %v1734, %v2014
        %v2016 = vpop.f32.mrb[0].mxu0
        %2017 = vmatprep.mubr.bf16.mxu0 0
        %2018 = vmatmul.mubr.bf16.gmra.mrb[0].mxu0 %v1788
        %v2019 = vpop.f32.mrb[0].mxu0
        %v2020 = vadd.f32 %v1734, %v2019
        %v2021 = vpop.f32.mrb[0].mxu0
        %v2022 = vpop.f32.mrb[0].mxu0
        %v2023 = vadd.f32 %v1734, %v2022
        %v2024 = vpop.f32.mrb[0].mxu0
        %2025 = vmatprep.mubr.bf16.mxu0 0
        %2026 = vmatmul.mubr.bf16.gmra.mrb[0].mxu0 %v1791
        %v2027 = vpop.f32.mrb[0].mxu0
        %v2028 = vadd.f32 %v1734, %v2027
        %v2029 = vpop.f32.mrb[0].mxu0
        %v2030 = vpop.f32.mrb[0].mxu0
        %v2031 = vadd.f32 %v1734, %v2030
        %v2032 = vpop.f32.mrb[0].mxu0
        %2033 = vmatprep.mubr.bf16.mxu0 0
        %2034 = vmatmul.mubr.bf16.gmra.mrb[0].mxu0 %v1794
        %v2035 = vpop.f32.mrb[0].mxu0
        %v2036 = vadd.f32 %v1734, %v2035
        %v2037 = vpop.f32.mrb[0].mxu0
        %v2038 = vpop.f32.mrb[0].mxu0
        %v2039 = vadd.f32 %v1734, %v2038
        %v2040 = vpop.f32.mrb[0].mxu0
        %2041 = vmatprep.mubr.bf16.mxu0 0
        %2042 = vmatmul.mubr.bf16.gmra.mrb[0].mxu0 %v1797
        %v2043 = vpop.f32.mrb[0].mxu0
        %v2044 = vadd.f32 %v1734, %v2043
        %v2045 = vpop.f32.mrb[0].mxu0
        %v2046 = vpop.f32.mrb[0].mxu0
        %v2047 = vadd.f32 %v1734, %v2046
        %v2048 = vpop.f32.mrb[0].mxu0
        %2049 = vmatprep.mubr.bf16.mxu0 0
        %2050 = vmatmul.mubr.bf16.gmra.mrb[0].mxu0 %v1800
        %v2051 = vpop.f32.mrb[0].mxu0
        %v2052 = vadd.f32 %v1734, %v2051
        %v2053 = vpop.f32.mrb[0].mxu0
        %v2054 = vpop.f32.mrb[0].mxu0
        %v2055 = vadd.f32 %v1734, %v2054
        %v2056 = vpop.f32.mrb[0].mxu0
        %2057 = vmatprep.mubr.bf16.mxu0 0
        %2058 = vmatmul.mubr.bf16.gmra.mrb[0].mxu0 %v1803
        %v2059 = vpop.f32.mrb[0].mxu0
        %v2060 = vadd.f32 %v1734, %v2059
        %v2061 = vpop.f32.mrb[0].mxu0
        %v2062 = vpop.f32.mrb[0].mxu0
        %v2063 = vadd.f32 %v1734, %v2062
        %v2064 = vpop.f32.mrb[0].mxu0
        %2065 = vmatprep.mubr.bf16.mxu0 0
        %2066 = vmatmul.mubr.bf16.gmra.mrb[0].mxu0 %v1806
        %v2067 = vpop.f32.mrb[0].mxu0
        %v2068 = vadd.f32 %v1734, %v2067
        %v2069 = vpop.f32.mrb[0].mxu0
        %v2070 = vpop.f32.mrb[0].mxu0
        %v2071 = vadd.f32 %v1734, %v2070
        %v2072 = vpop.f32.mrb[0].mxu0
        %2073 = vmatprep.mubr.bf16.mxu0 0
        %2074 = vmatmul.mubr.bf16.gmra.mrb[0].mxu0 %v1809
        %v2075 = vpop.f32.mrb[0].mxu0
        %v2076 = vadd.f32 %v1734, %v2075
        %v2077 = vpop.f32.mrb[0].mxu0
        %v2078 = vpop.f32.mrb[0].mxu0
        %v2079 = vadd.f32 %v1734, %v2078
        %v2080 = vpop.f32.mrb[0].mxu0
        %2081 = vmatprep.mubr.bf16.mxu0 0
        %2082 = vmatmul.mubr.bf16.gmra.mrb[0].mxu0 %v1812
        %v2083 = vpop.f32.mrb[0].mxu0
        %v2084 = vadd.f32 %v1734, %v2083
        %v2085 = vpop.f32.mrb[0].mxu0
        %v2086 = vpop.f32.mrb[0].mxu0
        %v2087 = vadd.f32 %v1734, %v2086
        %v2088 = vpop.f32.mrb[0].mxu0
        %2089 = vmatprep.mubr.bf16.mxu0 0
        %2090 = vmatmul.mubr.bf16.gmra.mrb[0].mxu0 %v1815
        %v2091 = vpop.f32.mrb[0].mxu0
        %v2092 = vadd.f32 %v1734, %v2091
        %v2093 = vpop.f32.mrb[0].mxu0
        %v2094 = vpop.f32.mrb[0].mxu0
        %v2095 = vadd.f32 %v1734, %v2094
        %v2096 = vpop.f32.mrb[0].mxu0
        %2097 = vmatprep.mubr.bf16.mxu0 0
        %2098 = vmatmul.mubr.bf16.gmra.mrb[0].mxu0 %v1818
        %v2099 = vpop.f32.mrb[0].mxu0
        %v2100 = vadd.f32 %v1734, %v2099
        %v2101 = vpop.f32.mrb[0].mxu0
        %v2102 = vpop.f32.mrb[0].mxu0
        %v2103 = vadd.f32 %v1734, %v2102
        %v2104 = vpop.f32.mrb[0].mxu0
        %2105 = vmatprep.mubr.bf16.mxu0 0
        %2106 = vmatmul.mubr.bf16.gmra.mrb[0].mxu0 %v1821
        %v2107 = vpop.f32.mrb[0].mxu0
        %v2108 = vadd.f32 %v1734, %v2107
        %v2109 = vpop.f32.mrb[0].mxu0
        %v2110 = vpop.f32.mrb[0].mxu0
        %v2111 = vadd.f32 %v1734, %v2110
        %v2112 = vpop.f32.mrb[0].mxu0
        %2113 = vmatprep.mubr.bf16.mxu0 0
        %2114 = vmatmul.mubr.bf16.gmra.mrb[0].mxu0 %v1824
        %v2115 = vpop.f32.mrb[0].mxu0
        %v2116 = vadd.f32 %v1734, %v2115
        %v2117 = vpop.f32.mrb[0].mxu0
        %v2118 = vpop.f32.mrb[0].mxu0
        %v2119 = vadd.f32 %v1734, %v2118
        %v2120 = vpop.f32.mrb[0].mxu0
        %2121 = vmatprep.mubr.bf16.mxu0 0
        %2122 = vmatmul.mubr.bf16.gmra.mrb[0].mxu0 %v1827
        %v2123 = vpop.f32.mrb[0].mxu0
        %v2124 = vadd.f32 %v1734, %v2123
        %v2125 = vpop.f32.mrb[0].mxu0
        %v2126 = vpop.f32.mrb[0].mxu0
        %v2127 = vadd.f32 %v1734, %v2126
        %v2128 = vpop.f32.mrb[0].mxu0
        %2129 = vmatprep.mubr.bf16.mxu0 0
        %2130 = vmatmul.mubr.bf16.gmra.mrb[0].mxu0 %v1830
        %v2131 = vpop.f32.mrb[0].mxu0
        %v2132 = vadd.f32 %v1734, %v2131
        %v2133 = vpop.f32.mrb[0].mxu0
        %v2134 = vpop.f32.mrb[0].mxu0
        %v2135 = vadd.f32 %v1734, %v2134
        %v2136 = vpop.f32.mrb[0].mxu0
        %2137 = vmatprep.mubr.bf16.mxu0 0
        %2138 = vmatmul.mubr.bf16.gmra.mrb[0].mxu0 %v1833
        %v2139 = vpop.f32.mrb[0].mxu0
        %v2140 = vadd.f32 %v1734, %v2139
        %v2141 = vpop.f32.mrb[0].mxu0
        %v2142 = vpop.f32.mrb[0].mxu0
        %v2143 = vadd.f32 %v1734, %v2142
        %v2144 = vpop.f32.mrb[0].mxu0
        %2145 = vmatprep.mubr.bf16.mxu0 0
        %2146 = vmatmul.mubr.bf16.gmra.mrb[0].mxu0 %v1836
        %v2147 = vpop.f32.mrb[0].mxu0
        %v2148 = vadd.f32 %v1734, %v2147
        %v2149 = vpop.f32.mrb[0].mxu0
        %v2150 = vpop.f32.mrb[0].mxu0
        %v2151 = vadd.f32 %v1734, %v2150
        %v2152 = vpop.f32.mrb[0].mxu0
        %2153 = vmatprep.mubr.bf16.mxu0 0
        %2154 = vmatmul.mubr.bf16.gmra.mrb[0].mxu0 %v1839
        %v2155 = vpop.f32.mrb[0].mxu0
        %v2156 = vadd.f32 %v1734, %v2155
        %v2157 = vpop.f32.mrb[0].mxu0
        %v2158 = vpop.f32.mrb[0].mxu0
        %v2159 = vadd.f32 %v1734, %v2158
        %v2160 = vpop.f32.mrb[0].mxu0
        %2161 = vmatprep.mubr.bf16.mxu0 0
        %2162 = vmatmul.mubr.bf16.gmra.mrb[0].mxu0 %v1842
        %v2163 = vpop.f32.mrb[0].mxu0
        %v2164 = vadd.f32 %v1734, %v2163
        %v2165 = vpop.f32.mrb[0].mxu0
        %v2166 = vpop.f32.mrb[0].mxu0
        %v2167 = vadd.f32 %v1734, %v2166
        %v2168 = vpop.f32.mrb[0].mxu0
        %2169 = vmatprep.mubr.bf16.mxu0 0
        %2170 = vmatmul.mubr.bf16.gmra.mrb[0].mxu0 %v1845
        %v2171 = vpop.f32.mrb[0].mxu0
        %v2172 = vadd.f32 %v1734, %v2171
        %v2173 = vpop.f32.mrb[0].mxu0
        %v2174 = vpop.f32.mrb[0].mxu0
        %v2175 = vadd.f32 %v1734, %v2174
        %v2176 = vpop.f32.mrb[0].mxu0
        %2177 = vmatprep.mubr.bf16.mxu0 0
        %2178 = vmatmul.mubr.bf16.gmra.mrb[0].mxu0 %v1848
        %v2179 = vpop.f32.mrb[0].mxu0
        %v2180 = vadd.f32 %v1734, %v2179
        %v2181 = vpop.f32.mrb[0].mxu0
        %v2182 = vpop.f32.mrb[0].mxu0
        %v2183 = vadd.f32 %v1734, %v2182
        %v2184 = vpop.f32.mrb[0].mxu0
        %2185 = vmatprep.mubr.bf16.mxu0 0
        %2186 = vmatmul.mubr.bf16.gmra.mrb[0].mxu0 %v1851
        %v2187 = vpop.f32.mrb[0].mxu0
        %v2188 = vadd.f32 %v1734, %v2187
        %v2189 = vpop.f32.mrb[0].mxu0
        %v2190 = vpop.f32.mrb[0].mxu0
        %v2191 = vadd.f32 %v1734, %v2190
        %v2192 = vpop.f32.mrb[0].mxu0
        %2193 = vmatprep.mubr.bf16.mxu0 0
        %2194 = vmatmul.mubr.bf16.gmra.mrb[0].mxu0 %v1854
        %v2195 = vpop.f32.mrb[0].mxu0
        %v2196 = vadd.f32 %v1734, %v2195
        %v2197 = vpop.f32.mrb[0].mxu0
        %v2198 = vpop.f32.mrb[0].mxu0
        %v2199 = vadd.f32 %v1734, %v2198
        %v2200 = vpop.f32.mrb[0].mxu0
        %2201 = vmatprep.mubr.bf16.mxu0 0
        %2202 = vmatmul.mubr.bf16.gmra.mrb[0].mxu0 %v1857
        %v2203 = vpop.f32.mrb[0].mxu0
        %v2204 = vadd.f32 %v1734, %v2203
        %v2205 = vpop.f32.mrb[0].mxu0
        %v2206 = vpop.f32.mrb[0].mxu0
        %v2207 = vadd.f32 %v1734, %v2206
        %v2208 = vpop.f32.mrb[0].mxu0
        %2209 = vmatprep.mubr.bf16.mxu0 0
        %2210 = vmatmul.mubr.bf16.gmra.mrb[0].mxu0 %v1860
        %v2211 = vpop.f32.mrb[0].mxu0
        %v2212 = vadd.f32 %v1734, %v2211
        %v2213 = vpop.f32.mrb[0].mxu0
        %v2214 = vpop.f32.mrb[0].mxu0
        %v2215 = vadd.f32 %v1734, %v2214
        %v2216 = vpop.f32.mrb[0].mxu0
        %2217 = vmatprep.mubr.bf16.mxu0 0
        %2218 = vmatmul.mubr.bf16.gmra.mrb[0].mxu0 %v1863
        %v2219 = vpop.f32.mrb[0].mxu0
        %v2220 = vadd.f32 %v1734, %v2219
        %v2221 = vpop.f32.mrb[0].mxu0
        %v2222 = vpop.f32.mrb[0].mxu0
        %v2223 = vadd.f32 %v1734, %v2222
        %v2224 = vpop.f32.mrb[0].mxu0
        %2225 = vmatprep.mubr.bf16.mxu0 0
        %2226 = vmatmul.mubr.bf16.gmra.mrb[0].mxu0 %v1866
        %v2227 = vpop.f32.mrb[0].mxu0
        %v2228 = vadd.f32 %v1734, %v2227
        %v2229 = vpop.f32.mrb[0].mxu0
        %v2230 = vpop.f32.mrb[0].mxu0
        %v2231 = vadd.f32 %v1734, %v2230
        %v2232 = vpop.f32.mrb[0].mxu0
        %2233 = vmatprep.mubr.bf16.mxu0 0
        %2234 = vmatmul.mubr.bf16.gmra.mrb[0].mxu0 %v1869
        %v2235 = vpop.f32.mrb[0].mxu0
        %v2236 = vadd.f32 %v1734, %v2235
        %v2237 = vpop.f32.mrb[0].mxu0
        %v2238 = vpop.f32.mrb[0].mxu0
        %v2239 = vadd.f32 %v1734, %v2238
        %v2240 = vpop.f32.mrb[0].mxu0
        %2241 = vmatprep.mubr.bf16.mxu0 0
        %2242 = vmatmul.mubr.bf16.gmra.mrb[0].mxu0 %v1872
        %v2243 = vpop.f32.mrb[0].mxu0
        %v2244 = vadd.f32 %v1734, %v2243
        %v2245 = vpop.f32.mrb[0].mxu0
        %v2246 = vpop.f32.mrb[0].mxu0
        %v2247 = vadd.f32 %v1734, %v2246
        %v2248 = vpop.f32.mrb[0].mxu0
        %2249 = vmatprep.mubr.bf16.mxu0 0
        %2250 = vmatmul.mubr.bf16.gmra.mrb[0].mxu0 %v1875
        %v2251 = vpop.f32.mrb[0].mxu0
        %v2252 = vadd.f32 %v1734, %v2251
        %v2253 = vpop.f32.mrb[0].mxu0
        %v2254 = vpop.f32.mrb[0].mxu0
        %v2255 = vadd.f32 %v1734, %v2254
        %v2256 = vpop.f32.mrb[0].mxu0
        %2257 = vmatprep.mubr.bf16.mxu0 0
        %2258 = vmatmul.mubr.bf16.gmra.mrb[0].mxu0 %v1878
        %v2259 = vpop.f32.mrb[0].mxu0
        %v2260 = vadd.f32 %v1734, %v2259
        %v2261 = vpop.f32.mrb[0].mxu0
        %v2262 = vpop.f32.mrb[0].mxu0
        %v2263 = vadd.f32 %v1734, %v2262
        %v2264 = vpop.f32.mrb[0].mxu0
        %2265 = vmatprep.mubr.bf16.mxu0 0
        %2266 = vmatmul.mubr.bf16.gmra.mrb[0].mxu0 %v1881
        %v2267 = vpop.f32.mrb[0].mxu0
        %v2268 = vadd.f32 %v1734, %v2267
        %v2269 = vpop.f32.mrb[0].mxu0
        %v2270 = vpop.f32.mrb[0].mxu0
        %v2271 = vadd.f32 %v1734, %v2270
        %v2272 = vpop.f32.mrb[0].mxu0
        %2273 = vmatprep.mubr.bf16.mxu0 0
        %2274 = vmatmul.mubr.bf16.gmra.mrb[0].mxu0 %v1884
        %v2275 = vpop.f32.mrb[0].mxu0
        %v2276 = vadd.f32 %v1734, %v2275
        %v2277 = vpop.f32.mrb[0].mxu0
        %v2278 = vpop.f32.mrb[0].mxu0
        %v2279 = vadd.f32 %v1734, %v2278
        %v2280 = vpop.f32.mrb[0].mxu0
        %2281 = vmatprep.mubr.bf16.mxu0 0
        %2282 = vmatmul.mubr.bf16.gmra.mrb[0].mxu0 %v1887
        %v2283 = vpop.f32.mrb[0].mxu0
        %v2284 = vadd.f32 %v1734, %v2283
        %v2285 = vpop.f32.mrb[0].mxu0
        %v2286 = vpop.f32.mrb[0].mxu0
        %v2287 = vadd.f32 %v1734, %v2286
        %v2288 = vpop.f32.mrb[0].mxu0
        %2289 = vmatprep.mubr.bf16.mxu0 0
        %2290 = vmatmul.mubr.bf16.gmra.mrb[0].mxu0 %v1890
        %v2291 = vpop.f32.mrb[0].mxu0
        %v2292 = vadd.f32 %v1734, %v2291
        %v2293 = vpop.f32.mrb[0].mxu0
        %v2294 = vpop.f32.mrb[0].mxu0
        %v2295 = vadd.f32 %v1734, %v2294
        %v2296 = vpop.f32.mrb[0].mxu0
        %2297 = vmatprep.mubr.bf16.mxu0 0
        %2298 = vmatmul.mubr.bf16.gmra.mrb[0].mxu0 %v1893
        %v2299 = vpop.f32.mrb[0].mxu0
        %v2300 = vadd.f32 %v1734, %v2299
        %v2301 = vpop.f32.mrb[0].mxu0
        %v2302 = vpop.f32.mrb[0].mxu0
        %v2303 = vadd.f32 %v1734, %v2302
        %v2304 = vpop.f32.mrb[0].mxu0
        %2305 = vmatprep.mubr.bf16.mxu0 0
        %2306 = vmatmul.mubr.bf16.gmra.mrb[0].mxu0 %v1896
        %v2307 = vpop.f32.mrb[0].mxu0
        %v2308 = vadd.f32 %v1734, %v2307
        %v2309 = vpop.f32.mrb[0].mxu0
        %v2310 = vpop.f32.mrb[0].mxu0
        %v2311 = vadd.f32 %v1734, %v2310
        %v2312 = vpop.f32.mrb[0].mxu0
        %2313 = vmatprep.mubr.bf16.mxu0 0
        %2314 = vmatmul.mubr.bf16.gmra.mrb[0].mxu0 %v1899
        %v2315 = vpop.f32.mrb[0].mxu0
        %v2316 = vadd.f32 %v1734, %v2315
        %v2317 = vpop.f32.mrb[0].mxu0
        %v2318 = vpop.f32.mrb[0].mxu0
        %v2319 = vadd.f32 %v1734, %v2318
        %v2320 = vpop.f32.mrb[0].mxu0
        %2321 = vdwg.mxu0
        %v2322 = vtanh.pop %v1940
        %v2323 = vtanh.pop %v1943
        %v2324 = vtanh.pop %v1948
        %v2325 = vtanh.pop %v1951
        %v2326 = vtanh.pop %v1956
        %v2327 = vtanh.pop %v1959
        %v2328 = vtanh.pop %v1964
        %v2329 = vtanh.pop %v1967
        %v2330 = vtanh.pop %v1972
        %v2331 = vtanh.pop %v1975
        %v2332 = vtanh.pop %v1980
        %v2333 = vtanh.pop %v1983
        %v2334 = vtanh.pop %v1988
        %v2335 = vtanh.pop %v1991
        %v2336 = vtanh.pop %v1996
        %v2337 = vtanh.pop %v1999
        %v2338 = vtanh.pop %v2004
        %v2339 = vtanh.pop %v2007
        %v2340 = vtanh.pop %v2012
        %v2341 = vtanh.pop %v2015
        %v2342 = vtanh.pop %v2020
        %v2343 = vtanh.pop %v2023
        %v2344 = vtanh.pop %v2028
        %v2345 = vtanh.pop %v2031
        %v2346 = vtanh.pop %v2036
        %v2347 = vtanh.pop %v2039
        %v2348 = vtanh.pop %v2044
        %v2349 = vtanh.pop %v2047
        %v2350 = vtanh.pop %v2052
        %v2351 = vtanh.pop %v2055
        %v2352 = vtanh.pop %v2060
        %v2353 = vtanh.pop %v2063
        %v2354 = vtanh.pop %v2068
        %v2355 = vtanh.pop %v2071
        %v2356 = vtanh.pop %v2076
        %v2357 = vtanh.pop %v2079
        %v2358 = vtanh.pop %v2084
        %v2359 = vtanh.pop %v2087
        %v2360 = vtanh.pop %v2092
        %v2361 = vtanh.pop %v2095
        %v2362 = vtanh.pop %v2100
        %v2363 = vtanh.pop %v2103
        %v2364 = vtanh.pop %v2108
        %v2365 = vtanh.pop %v2111
        %v2366 = vtanh.pop %v2116
        %v2367 = vtanh.pop %v2119
        %v2368 = vtanh.pop %v2124
        %v2369 = vtanh.pop %v2127
        %v2370 = vtanh.pop %v2132
        %v2371 = vtanh.pop %v2135
        %v2372 = vtanh.pop %v2140
        %v2373 = vtanh.pop %v2143
        %v2374 = vtanh.pop %v2148
        %v2375 = vtanh.pop %v2151
        %v2376 = vtanh.pop %v2156
        %v2377 = vtanh.pop %v2159
        %v2378 = vtanh.pop %v2164
        %v2379 = vtanh.pop %v2167
        %v2380 = vtanh.pop %v2172
        %v2381 = vtanh.pop %v2175
        %v2382 = vtanh.pop %v2180
        %v2383 = vtanh.pop %v2183
        %v2384 = vtanh.pop %v2188
        %v2385 = vtanh.pop %v2191
        %v2386 = vtanh.pop %v2196
        %v2387 = vtanh.pop %v2199
        %v2388 = vtanh.pop %v2204
        %v2389 = vtanh.pop %v2207
        %v2390 = vtanh.pop %v2212
        %v2391 = vtanh.pop %v2215
        %v2392 = vtanh.pop %v2220
        %v2393 = vtanh.pop %v2223
        %v2394 = vtanh.pop %v2228
        %v2395 = vtanh.pop %v2231
        %v2396 = vtanh.pop %v2236
        %v2397 = vtanh.pop %v2239
        %v2398 = vtanh.pop %v2244
        %v2399 = vtanh.pop %v2247
        %v2400 = vtanh.pop %v2252
        %v2401 = vtanh.pop %v2255
        %v2402 = vtanh.pop %v2260
        %v2403 = vtanh.pop %v2263
        %v2404 = vtanh.pop %v2268
        %v2405 = vtanh.pop %v2271
        %v2406 = vtanh.pop %v2276
        %v2407 = vtanh.pop %v2279
        %v2408 = vtanh.pop %v2284
        %v2409 = vtanh.pop %v2287
        %v2410 = vtanh.pop %v2292
        %v2411 = vtanh.pop %v2295
        %v2412 = vtanh.pop %v2300
        %v2413 = vtanh.pop %v2303
        %v2414 = vtanh.pop %v2308
        %v2415 = vtanh.pop %v2311
        %v2416 = vtanh.pop %v2316
        %v2417 = vtanh.pop %v2319
        %v2418 = vpack.c.bf16 %v2323, %v2322
        %v2419 = vpack.c.bf16 %v2325, %v2324
        %v2420 = vpack.c.bf16 %v2327, %v2326
        %v2421 = vpack.c.bf16 %v2329, %v2328
        %v2422 = vpack.c.bf16 %v2331, %v2330
        %v2423 = vpack.c.bf16 %v2333, %v2332
        %v2424 = vpack.c.bf16 %v2335, %v2334
        %v2425 = vpack.c.bf16 %v2337, %v2336
        %v2426 = vpack.c.bf16 %v2339, %v2338
        %v2427 = vpack.c.bf16 %v2341, %v2340
        %v2428 = vpack.c.bf16 %v2343, %v2342
        %v2429 = vpack.c.bf16 %v2345, %v2344
        %v2430 = vpack.c.bf16 %v2347, %v2346
        %v2431 = vpack.c.bf16 %v2349, %v2348
        %v2432 = vpack.c.bf16 %v2351, %v2350
        %v2433 = vpack.c.bf16 %v2353, %v2352
        %v2434 = vpack.c.bf16 %v2355, %v2354
        %v2435 = vpack.c.bf16 %v2357, %v2356
        %v2436 = vpack.c.bf16 %v2359, %v2358
        %v2437 = vpack.c.bf16 %v2361, %v2360
        %v2438 = vpack.c.bf16 %v2363, %v2362
        %v2439 = vpack.c.bf16 %v2365, %v2364
        %v2440 = vpack.c.bf16 %v2367, %v2366
        %v2441 = vpack.c.bf16 %v2369, %v2368
        %v2442 = vpack.c.bf16 %v2371, %v2370
        %v2443 = vpack.c.bf16 %v2373, %v2372
        %v2444 = vpack.c.bf16 %v2375, %v2374
        %v2445 = vpack.c.bf16 %v2377, %v2376
        %v2446 = vpack.c.bf16 %v2379, %v2378
        %v2447 = vpack.c.bf16 %v2381, %v2380
        %v2448 = vpack.c.bf16 %v2383, %v2382
        %v2449 = vpack.c.bf16 %v2385, %v2384
        %v2450 = vpack.c.bf16 %v2387, %v2386
        %v2451 = vpack.c.bf16 %v2389, %v2388
        %v2452 = vpack.c.bf16 %v2391, %v2390
        %v2453 = vpack.c.bf16 %v2393, %v2392
        %v2454 = vpack.c.bf16 %v2395, %v2394
        %v2455 = vpack.c.bf16 %v2397, %v2396
        %v2456 = vpack.c.bf16 %v2399, %v2398
        %v2457 = vpack.c.bf16 %v2401, %v2400
        %v2458 = vpack.c.bf16 %v2403, %v2402
        %v2459 = vpack.c.bf16 %v2405, %v2404
        %v2460 = vpack.c.bf16 %v2407, %v2406
        %v2461 = vpack.c.bf16 %v2409, %v2408
        %v2462 = vpack.c.bf16 %v2411, %v2410
        %v2463 = vpack.c.bf16 %v2413, %v2412
        %v2464 = vpack.c.bf16 %v2415, %v2414
        %v2465 = vpack.c.bf16 %v2417, %v2416
        %v2466 = vunpack.c.l.bf16 %v643
        %v2467 = vlaneseq
        %v2468 = vshrl.u32 %v2467, 7
        %v2469 = vsub.s32 0, %v2468
        %v2470 = vrot.slane %v2466, %v2469
        %v2475 = vunpack.c.l.b16 %v639
        %v2476 = vunpack.c.l.b16 %v640
        %v2477 = vunpack.c.l.b16 %v641
        %v2478 = vunpack.c.l.b16 %v642
        %v2479 = vpack.c.b16 %v2476, %v2475
        %v2480 = vpack.c.b16 %v2478, %v2477
        %vm2483 = vcmask 261120
        %v2485 = vsel %vm2483, %v2418, 0
        %v2488 = vsel %vm2483, %v2419, 0
        %v2491 = vsel %vm2483, %v2420, 0
        %v2494 = vsel %vm2483, %v2421, 0
        %v2497 = vsel %vm2483, %v2422, 0
        %v2500 = vsel %vm2483, %v2423, 0
        %v2503 = vsel %vm2483, %v2424, 0
        %v2506 = vsel %vm2483, %v2425, 0
        %v2509 = vsel %vm2483, %v2426, 0
        %v2512 = vsel %vm2483, %v2427, 0
        %v2515 = vsel %vm2483, %v2428, 0
        %v2518 = vsel %vm2483, %v2429, 0
        %v2521 = vsel %vm2483, %v2430, 0
        %v2524 = vsel %vm2483, %v2431, 0
        %v2527 = vsel %vm2483, %v2432, 0
        %v2530 = vsel %vm2483, %v2433, 0
        %v2533 = vsel %vm2483, %v2434, 0
        %v2536 = vsel %vm2483, %v2435, 0
        %v2539 = vsel %vm2483, %v2436, 0
        %v2542 = vsel %vm2483, %v2437, 0
        %v2545 = vsel %vm2483, %v2438, 0
        %v2548 = vsel %vm2483, %v2439, 0
        %v2551 = vsel %vm2483, %v2440, 0
        %v2554 = vsel %vm2483, %v2441, 0
        %v2557 = vsel %vm2483, %v2442, 0
        %v2560 = vsel %vm2483, %v2443, 0
        %v2563 = vsel %vm2483, %v2444, 0
        %v2566 = vsel %vm2483, %v2445, 0
        %v2569 = vsel %vm2483, %v2446, 0
        %v2572 = vsel %vm2483, %v2447, 0
        %v2575 = vsel %vm2483, %v2448, 0
        %v2578 = vsel %vm2483, %v2449, 0
        %v2581 = vsel %vm2483, %v2450, 0
        %v2584 = vsel %vm2483, %v2451, 0
        %v2587 = vsel %vm2483, %v2452, 0
        %v2590 = vsel %vm2483, %v2453, 0
        %v2593 = vsel %vm2483, %v2454, 0
        %v2596 = vsel %vm2483, %v2455, 0
        %v2599 = vsel %vm2483, %v2456, 0
        %v2602 = vsel %vm2483, %v2457, 0
        %v2605 = vsel %vm2483, %v2458, 0
        %v2608 = vsel %vm2483, %v2459, 0
        %v2611 = vsel %vm2483, %v2460, 0
        %v2614 = vsel %vm2483, %v2461, 0
        %v2617 = vsel %vm2483, %v2462, 0
        %v2620 = vsel %vm2483, %v2463, 0
        %v2623 = vsel %vm2483, %v2464, 0
        %v2626 = vsel %vm2483, %v2465, 0
        %2628 = vmatprep.subr.bf16.mxu0 0
        %2629 = vmatpush1.bf16.msra.mxu0 %v2479
        %2630 = vmatprep.subr.bf16.mxu0 0
        %2631 = vmatpush1.bf16.msra.mxu0 %v2480
        %2632 = vmatprep.subr.bf16.mxu0 0
        %2633 = vmatpush1.bf16.msra.mxu0 0
        %2634 = vmatprep.subr.bf16.mxu0 0
        %2635 = vmatpush1.bf16.msra.mxu0 0
        %2636 = vmatprep.subr.bf16.mxu0 0
        %2637 = vmatpush1.bf16.msra.mxu0 0
        %2638 = vmatprep.subr.bf16.mxu0 0
        %2639 = vmatpush1.bf16.msra.mxu0 0
        %2640 = vmatprep.subr.bf16.mxu0 0
        %2641 = vmatpush1.bf16.msra.mxu0 0
        %2642 = vmatprep.subr.bf16.mxu0 0
        %2643 = vmatpush1.bf16.msra.mxu0 0
        %2644 = vmatprep.subr.bf16.mxu0 0
        %2645 = vmatpush1.bf16.msra.mxu0 0
        %2646 = vmatprep.subr.bf16.mxu0 0
        %2647 = vmatpush1.bf16.msra.mxu0 0
        %2648 = vmatprep.subr.bf16.mxu0 0
        %2649 = vmatpush1.bf16.msra.mxu0 0
        %2650 = vmatprep.subr.bf16.mxu0 0
        %2651 = vmatpush1.bf16.msra.mxu0 0
        %2652 = vmatprep.subr.bf16.mxu0 0
        %2653 = vmatpush1.bf16.msra.mxu0 0
        %2654 = vmatprep.subr.bf16.mxu0 0
        %2655 = vmatpush1.bf16.msra.mxu0 0
        %2656 = vmatprep.subr.bf16.mxu0 0
        %2657 = vmatpush1.bf16.msra.mxu0 0
        %2658 = vmatprep.subr.bf16.mxu0 0
        %2659 = vmatpush1.bf16.msra.mxu0 0
        %2660 = vmatprep.mubr.bf16.mxu0 0
        %2661 = vmatmul.mubr.bf16.gmra.mrb[0].mxu0 %v2485
        %v2662 = vpop.f32.mrb[0].mxu0
        %v2663 = vadd.f32 %v2470, %v2662
        %v2664 = vpop.f32.mrb[0].mxu0
        %v2665 = vpop.f32.mrb[0].mxu0
        %v2666 = vadd.f32 %v2470, %v2665
        %v2667 = vpop.f32.mrb[0].mxu0
        %2668 = vmatprep.mubr.bf16.mxu0 0
        %2669 = vmatmul.mubr.bf16.gmra.mrb[0].mxu0 %v2488
        %v2670 = vpop.f32.mrb[0].mxu0
        %v2671 = vadd.f32 %v2470, %v2670
        %v2672 = vpop.f32.mrb[0].mxu0
        %v2673 = vpop.f32.mrb[0].mxu0
        %v2674 = vadd.f32 %v2470, %v2673
        %v2675 = vpop.f32.mrb[0].mxu0
        %2676 = vmatprep.mubr.bf16.mxu0 0
        %2677 = vmatmul.mubr.bf16.gmra.mrb[0].mxu0 %v2491
        %v2678 = vpop.f32.mrb[0].mxu0
        %v2679 = vadd.f32 %v2470, %v2678
        %v2680 = vpop.f32.mrb[0].mxu0
        %v2681 = vpop.f32.mrb[0].mxu0
        %v2682 = vadd.f32 %v2470, %v2681
        %v2683 = vpop.f32.mrb[0].mxu0
        %2684 = vmatprep.mubr.bf16.mxu0 0
        %2685 = vmatmul.mubr.bf16.gmra.mrb[0].mxu0 %v2494
        %v2686 = vpop.f32.mrb[0].mxu0
        %v2687 = vadd.f32 %v2470, %v2686
        %v2688 = vpop.f32.mrb[0].mxu0
        %v2689 = vpop.f32.mrb[0].mxu0
        %v2690 = vadd.f32 %v2470, %v2689
        %v2691 = vpop.f32.mrb[0].mxu0
        %2692 = vmatprep.mubr.bf16.mxu0 0
        %2693 = vmatmul.mubr.bf16.gmra.mrb[0].mxu0 %v2497
        %v2694 = vpop.f32.mrb[0].mxu0
        %v2695 = vadd.f32 %v2470, %v2694
        %v2696 = vpop.f32.mrb[0].mxu0
        %v2697 = vpop.f32.mrb[0].mxu0
        %v2698 = vadd.f32 %v2470, %v2697
        %v2699 = vpop.f32.mrb[0].mxu0
        %2700 = vmatprep.mubr.bf16.mxu0 0
        %2701 = vmatmul.mubr.bf16.gmra.mrb[0].mxu0 %v2500
        %v2702 = vpop.f32.mrb[0].mxu0
        %v2703 = vadd.f32 %v2470, %v2702
        %v2704 = vpop.f32.mrb[0].mxu0
        %v2705 = vpop.f32.mrb[0].mxu0
        %v2706 = vadd.f32 %v2470, %v2705
        %v2707 = vpop.f32.mrb[0].mxu0
        %2708 = vmatprep.mubr.bf16.mxu0 0
        %2709 = vmatmul.mubr.bf16.gmra.mrb[0].mxu0 %v2503
        %v2710 = vpop.f32.mrb[0].mxu0
        %v2711 = vadd.f32 %v2470, %v2710
        %v2712 = vpop.f32.mrb[0].mxu0
        %v2713 = vpop.f32.mrb[0].mxu0
        %v2714 = vadd.f32 %v2470, %v2713
        %v2715 = vpop.f32.mrb[0].mxu0
        %2716 = vmatprep.mubr.bf16.mxu0 0
        %2717 = vmatmul.mubr.bf16.gmra.mrb[0].mxu0 %v2506
        %v2718 = vpop.f32.mrb[0].mxu0
        %v2719 = vadd.f32 %v2470, %v2718
        %v2720 = vpop.f32.mrb[0].mxu0
        %v2721 = vpop.f32.mrb[0].mxu0
        %v2722 = vadd.f32 %v2470, %v2721
        %v2723 = vpop.f32.mrb[0].mxu0
        %2724 = vmatprep.mubr.bf16.mxu0 0
        %2725 = vmatmul.mubr.bf16.gmra.mrb[0].mxu0 %v2509
        %v2726 = vpop.f32.mrb[0].mxu0
        %v2727 = vadd.f32 %v2470, %v2726
        %v2728 = vpop.f32.mrb[0].mxu0
        %v2729 = vpop.f32.mrb[0].mxu0
        %v2730 = vadd.f32 %v2470, %v2729
        %v2731 = vpop.f32.mrb[0].mxu0
        %2732 = vmatprep.mubr.bf16.mxu0 0
        %2733 = vmatmul.mubr.bf16.gmra.mrb[0].mxu0 %v2512
        %v2734 = vpop.f32.mrb[0].mxu0
        %v2735 = vadd.f32 %v2470, %v2734
        %v2736 = vpop.f32.mrb[0].mxu0
        %v2737 = vpop.f32.mrb[0].mxu0
        %v2738 = vadd.f32 %v2470, %v2737
        %v2739 = vpop.f32.mrb[0].mxu0
        %2740 = vmatprep.mubr.bf16.mxu0 0
        %2741 = vmatmul.mubr.bf16.gmra.mrb[0].mxu0 %v2515
        %v2742 = vpop.f32.mrb[0].mxu0
        %v2743 = vadd.f32 %v2470, %v2742
        %v2744 = vpop.f32.mrb[0].mxu0
        %v2745 = vpop.f32.mrb[0].mxu0
        %v2746 = vadd.f32 %v2470, %v2745
        %v2747 = vpop.f32.mrb[0].mxu0
        %2748 = vmatprep.mubr.bf16.mxu0 0
        %2749 = vmatmul.mubr.bf16.gmra.mrb[0].mxu0 %v2518
        %v2750 = vpop.f32.mrb[0].mxu0
        %v2751 = vadd.f32 %v2470, %v2750
        %v2752 = vpop.f32.mrb[0].mxu0
        %v2753 = vpop.f32.mrb[0].mxu0
        %v2754 = vadd.f32 %v2470, %v2753
        %v2755 = vpop.f32.mrb[0].mxu0
        %2756 = vmatprep.mubr.bf16.mxu0 0
        %2757 = vmatmul.mubr.bf16.gmra.mrb[0].mxu0 %v2521
        %v2758 = vpop.f32.mrb[0].mxu0
        %v2759 = vadd.f32 %v2470, %v2758
        %v2760 = vpop.f32.mrb[0].mxu0
        %v2761 = vpop.f32.mrb[0].mxu0
        %v2762 = vadd.f32 %v2470, %v2761
        %v2763 = vpop.f32.mrb[0].mxu0
        %2764 = vmatprep.mubr.bf16.mxu0 0
        %2765 = vmatmul.mubr.bf16.gmra.mrb[0].mxu0 %v2524
        %v2766 = vpop.f32.mrb[0].mxu0
        %v2767 = vadd.f32 %v2470, %v2766
        %v2768 = vpop.f32.mrb[0].mxu0
        %v2769 = vpop.f32.mrb[0].mxu0
        %v2770 = vadd.f32 %v2470, %v2769
        %v2771 = vpop.f32.mrb[0].mxu0
        %2772 = vmatprep.mubr.bf16.mxu0 0
        %2773 = vmatmul.mubr.bf16.gmra.mrb[0].mxu0 %v2527
        %v2774 = vpop.f32.mrb[0].mxu0
        %v2775 = vadd.f32 %v2470, %v2774
        %v2776 = vpop.f32.mrb[0].mxu0
        %v2777 = vpop.f32.mrb[0].mxu0
        %v2778 = vadd.f32 %v2470, %v2777
        %v2779 = vpop.f32.mrb[0].mxu0
        %2780 = vmatprep.mubr.bf16.mxu0 0
        %2781 = vmatmul.mubr.bf16.gmra.mrb[0].mxu0 %v2530
        %v2782 = vpop.f32.mrb[0].mxu0
        %v2783 = vadd.f32 %v2470, %v2782
        %v2784 = vpop.f32.mrb[0].mxu0
        %v2785 = vpop.f32.mrb[0].mxu0
        %v2786 = vadd.f32 %v2470, %v2785
        %v2787 = vpop.f32.mrb[0].mxu0
        %2788 = vmatprep.mubr.bf16.mxu0 0
        %2789 = vmatmul.mubr.bf16.gmra.mrb[0].mxu0 %v2533
        %v2790 = vpop.f32.mrb[0].mxu0
        %v2791 = vadd.f32 %v2470, %v2790
        %v2792 = vpop.f32.mrb[0].mxu0
        %v2793 = vpop.f32.mrb[0].mxu0
        %v2794 = vadd.f32 %v2470, %v2793
        %v2795 = vpop.f32.mrb[0].mxu0
        %2796 = vmatprep.mubr.bf16.mxu0 0
        %2797 = vmatmul.mubr.bf16.gmra.mrb[0].mxu0 %v2536
        %v2798 = vpop.f32.mrb[0].mxu0
        %v2799 = vadd.f32 %v2470, %v2798
        %v2800 = vpop.f32.mrb[0].mxu0
        %v2801 = vpop.f32.mrb[0].mxu0
        %v2802 = vadd.f32 %v2470, %v2801
        %v2803 = vpop.f32.mrb[0].mxu0
        %2804 = vmatprep.mubr.bf16.mxu0 0
        %2805 = vmatmul.mubr.bf16.gmra.mrb[0].mxu0 %v2539
        %v2806 = vpop.f32.mrb[0].mxu0
        %v2807 = vadd.f32 %v2470, %v2806
        %v2808 = vpop.f32.mrb[0].mxu0
        %v2809 = vpop.f32.mrb[0].mxu0
        %v2810 = vadd.f32 %v2470, %v2809
        %v2811 = vpop.f32.mrb[0].mxu0
        %2812 = vmatprep.mubr.bf16.mxu0 0
        %2813 = vmatmul.mubr.bf16.gmra.mrb[0].mxu0 %v2542
        %v2814 = vpop.f32.mrb[0].mxu0
        %v2815 = vadd.f32 %v2470, %v2814
        %v2816 = vpop.f32.mrb[0].mxu0
        %v2817 = vpop.f32.mrb[0].mxu0
        %v2818 = vadd.f32 %v2470, %v2817
        %v2819 = vpop.f32.mrb[0].mxu0
        %2820 = vmatprep.mubr.bf16.mxu0 0
        %2821 = vmatmul.mubr.bf16.gmra.mrb[0].mxu0 %v2545
        %v2822 = vpop.f32.mrb[0].mxu0
        %v2823 = vadd.f32 %v2470, %v2822
        %v2824 = vpop.f32.mrb[0].mxu0
        %v2825 = vpop.f32.mrb[0].mxu0
        %v2826 = vadd.f32 %v2470, %v2825
        %v2827 = vpop.f32.mrb[0].mxu0
        %2828 = vmatprep.mubr.bf16.mxu0 0
        %2829 = vmatmul.mubr.bf16.gmra.mrb[0].mxu0 %v2548
        %v2830 = vpop.f32.mrb[0].mxu0
        %v2831 = vadd.f32 %v2470, %v2830
        %v2832 = vpop.f32.mrb[0].mxu0
        %v2833 = vpop.f32.mrb[0].mxu0
        %v2834 = vadd.f32 %v2470, %v2833
        %v2835 = vpop.f32.mrb[0].mxu0
        %2836 = vmatprep.mubr.bf16.mxu0 0
        %2837 = vmatmul.mubr.bf16.gmra.mrb[0].mxu0 %v2551
        %v2838 = vpop.f32.mrb[0].mxu0
        %v2839 = vadd.f32 %v2470, %v2838
        %v2840 = vpop.f32.mrb[0].mxu0
        %v2841 = vpop.f32.mrb[0].mxu0
        %v2842 = vadd.f32 %v2470, %v2841
        %v2843 = vpop.f32.mrb[0].mxu0
        %2844 = vmatprep.mubr.bf16.mxu0 0
        %2845 = vmatmul.mubr.bf16.gmra.mrb[0].mxu0 %v2554
        %v2846 = vpop.f32.mrb[0].mxu0
        %v2847 = vadd.f32 %v2470, %v2846
        %v2848 = vpop.f32.mrb[0].mxu0
        %v2849 = vpop.f32.mrb[0].mxu0
        %v2850 = vadd.f32 %v2470, %v2849
        %v2851 = vpop.f32.mrb[0].mxu0
        %2852 = vmatprep.mubr.bf16.mxu0 0
        %2853 = vmatmul.mubr.bf16.gmra.mrb[0].mxu0 %v2557
        %v2854 = vpop.f32.mrb[0].mxu0
        %v2855 = vadd.f32 %v2470, %v2854
        %v2856 = vpop.f32.mrb[0].mxu0
        %v2857 = vpop.f32.mrb[0].mxu0
        %v2858 = vadd.f32 %v2470, %v2857
        %v2859 = vpop.f32.mrb[0].mxu0
        %2860 = vmatprep.mubr.bf16.mxu0 0
        %2861 = vmatmul.mubr.bf16.gmra.mrb[0].mxu0 %v2560
        %v2862 = vpop.f32.mrb[0].mxu0
        %v2863 = vadd.f32 %v2470, %v2862
        %v2864 = vpop.f32.mrb[0].mxu0
        %v2865 = vpop.f32.mrb[0].mxu0
        %v2866 = vadd.f32 %v2470, %v2865
        %v2867 = vpop.f32.mrb[0].mxu0
        %2868 = vmatprep.mubr.bf16.mxu0 0
        %2869 = vmatmul.mubr.bf16.gmra.mrb[0].mxu0 %v2563
        %v2870 = vpop.f32.mrb[0].mxu0
        %v2871 = vadd.f32 %v2470, %v2870
        %v2872 = vpop.f32.mrb[0].mxu0
        %v2873 = vpop.f32.mrb[0].mxu0
        %v2874 = vadd.f32 %v2470, %v2873
        %v2875 = vpop.f32.mrb[0].mxu0
        %2876 = vmatprep.mubr.bf16.mxu0 0
        %2877 = vmatmul.mubr.bf16.gmra.mrb[0].mxu0 %v2566
        %v2878 = vpop.f32.mrb[0].mxu0
        %v2879 = vadd.f32 %v2470, %v2878
        %v2880 = vpop.f32.mrb[0].mxu0
        %v2881 = vpop.f32.mrb[0].mxu0
        %v2882 = vadd.f32 %v2470, %v2881
        %v2883 = vpop.f32.mrb[0].mxu0
        %2884 = vmatprep.mubr.bf16.mxu0 0
        %2885 = vmatmul.mubr.bf16.gmra.mrb[0].mxu0 %v2569
        %v2886 = vpop.f32.mrb[0].mxu0
        %v2887 = vadd.f32 %v2470, %v2886
        %v2888 = vpop.f32.mrb[0].mxu0
        %v2889 = vpop.f32.mrb[0].mxu0
        %v2890 = vadd.f32 %v2470, %v2889
        %v2891 = vpop.f32.mrb[0].mxu0
        %2892 = vmatprep.mubr.bf16.mxu0 0
        %2893 = vmatmul.mubr.bf16.gmra.mrb[0].mxu0 %v2572
        %v2894 = vpop.f32.mrb[0].mxu0
        %v2895 = vadd.f32 %v2470, %v2894
        %v2896 = vpop.f32.mrb[0].mxu0
        %v2897 = vpop.f32.mrb[0].mxu0
        %v2898 = vadd.f32 %v2470, %v2897
        %v2899 = vpop.f32.mrb[0].mxu0
        %2900 = vmatprep.mubr.bf16.mxu0 0
        %2901 = vmatmul.mubr.bf16.gmra.mrb[0].mxu0 %v2575
        %v2902 = vpop.f32.mrb[0].mxu0
        %v2903 = vadd.f32 %v2470, %v2902
        %v2904 = vpop.f32.mrb[0].mxu0
        %v2905 = vpop.f32.mrb[0].mxu0
        %v2906 = vadd.f32 %v2470, %v2905
        %v2907 = vpop.f32.mrb[0].mxu0
        %2908 = vmatprep.mubr.bf16.mxu0 0
        %2909 = vmatmul.mubr.bf16.gmra.mrb[0].mxu0 %v2578
        %v2910 = vpop.f32.mrb[0].mxu0
        %v2911 = vadd.f32 %v2470, %v2910
        %v2912 = vpop.f32.mrb[0].mxu0
        %v2913 = vpop.f32.mrb[0].mxu0
        %v2914 = vadd.f32 %v2470, %v2913
        %v2915 = vpop.f32.mrb[0].mxu0
        %2916 = vmatprep.mubr.bf16.mxu0 0
        %2917 = vmatmul.mubr.bf16.gmra.mrb[0].mxu0 %v2581
        %v2918 = vpop.f32.mrb[0].mxu0
        %v2919 = vadd.f32 %v2470, %v2918
        %v2920 = vpop.f32.mrb[0].mxu0
        %v2921 = vpop.f32.mrb[0].mxu0
        %v2922 = vadd.f32 %v2470, %v2921
        %v2923 = vpop.f32.mrb[0].mxu0
        %2924 = vmatprep.mubr.bf16.mxu0 0
        %2925 = vmatmul.mubr.bf16.gmra.mrb[0].mxu0 %v2584
        %v2926 = vpop.f32.mrb[0].mxu0
        %v2927 = vadd.f32 %v2470, %v2926
        %v2928 = vpop.f32.mrb[0].mxu0
        %v2929 = vpop.f32.mrb[0].mxu0
        %v2930 = vadd.f32 %v2470, %v2929
        %v2931 = vpop.f32.mrb[0].mxu0
        %2932 = vmatprep.mubr.bf16.mxu0 0
        %2933 = vmatmul.mubr.bf16.gmra.mrb[0].mxu0 %v2587
        %v2934 = vpop.f32.mrb[0].mxu0
        %v2935 = vadd.f32 %v2470, %v2934
        %v2936 = vpop.f32.mrb[0].mxu0
        %v2937 = vpop.f32.mrb[0].mxu0
        %v2938 = vadd.f32 %v2470, %v2937
        %v2939 = vpop.f32.mrb[0].mxu0
        %2940 = vmatprep.mubr.bf16.mxu0 0
        %2941 = vmatmul.mubr.bf16.gmra.mrb[0].mxu0 %v2590
        %v2942 = vpop.f32.mrb[0].mxu0
        %v2943 = vadd.f32 %v2470, %v2942
        %v2944 = vpop.f32.mrb[0].mxu0
        %v2945 = vpop.f32.mrb[0].mxu0
        %v2946 = vadd.f32 %v2470, %v2945
        %v2947 = vpop.f32.mrb[0].mxu0
        %2948 = vmatprep.mubr.bf16.mxu0 0
        %2949 = vmatmul.mubr.bf16.gmra.mrb[0].mxu0 %v2593
        %v2950 = vpop.f32.mrb[0].mxu0
        %v2951 = vadd.f32 %v2470, %v2950
        %v2952 = vpop.f32.mrb[0].mxu0
        %v2953 = vpop.f32.mrb[0].mxu0
        %v2954 = vadd.f32 %v2470, %v2953
        %v2955 = vpop.f32.mrb[0].mxu0
        %2956 = vmatprep.mubr.bf16.mxu0 0
        %2957 = vmatmul.mubr.bf16.gmra.mrb[0].mxu0 %v2596
        %v2958 = vpop.f32.mrb[0].mxu0
        %v2959 = vadd.f32 %v2470, %v2958
        %v2960 = vpop.f32.mrb[0].mxu0
        %v2961 = vpop.f32.mrb[0].mxu0
        %v2962 = vadd.f32 %v2470, %v2961
        %v2963 = vpop.f32.mrb[0].mxu0
        %2964 = vmatprep.mubr.bf16.mxu0 0
        %2965 = vmatmul.mubr.bf16.gmra.mrb[0].mxu0 %v2599
        %v2966 = vpop.f32.mrb[0].mxu0
        %v2967 = vadd.f32 %v2470, %v2966
        %v2968 = vpop.f32.mrb[0].mxu0
        %v2969 = vpop.f32.mrb[0].mxu0
        %v2970 = vadd.f32 %v2470, %v2969
        %v2971 = vpop.f32.mrb[0].mxu0
        %2972 = vmatprep.mubr.bf16.mxu0 0
        %2973 = vmatmul.mubr.bf16.gmra.mrb[0].mxu0 %v2602
        %v2974 = vpop.f32.mrb[0].mxu0
        %v2975 = vadd.f32 %v2470, %v2974
        %v2976 = vpop.f32.mrb[0].mxu0
        %v2977 = vpop.f32.mrb[0].mxu0
        %v2978 = vadd.f32 %v2470, %v2977
        %v2979 = vpop.f32.mrb[0].mxu0
        %2980 = vmatprep.mubr.bf16.mxu0 0
        %2981 = vmatmul.mubr.bf16.gmra.mrb[0].mxu0 %v2605
        %v2982 = vpop.f32.mrb[0].mxu0
        %v2983 = vadd.f32 %v2470, %v2982
        %v2984 = vpop.f32.mrb[0].mxu0
        %v2985 = vpop.f32.mrb[0].mxu0
        %v2986 = vadd.f32 %v2470, %v2985
        %v2987 = vpop.f32.mrb[0].mxu0
        %2988 = vmatprep.mubr.bf16.mxu0 0
        %2989 = vmatmul.mubr.bf16.gmra.mrb[0].mxu0 %v2608
        %v2990 = vpop.f32.mrb[0].mxu0
        %v2991 = vadd.f32 %v2470, %v2990
        %v2992 = vpop.f32.mrb[0].mxu0
        %v2993 = vpop.f32.mrb[0].mxu0
        %v2994 = vadd.f32 %v2470, %v2993
        %v2995 = vpop.f32.mrb[0].mxu0
        %2996 = vmatprep.mubr.bf16.mxu0 0
        %2997 = vmatmul.mubr.bf16.gmra.mrb[0].mxu0 %v2611
        %v2998 = vpop.f32.mrb[0].mxu0
        %v2999 = vadd.f32 %v2470, %v2998
        %v3000 = vpop.f32.mrb[0].mxu0
        %v3001 = vpop.f32.mrb[0].mxu0
        %v3002 = vadd.f32 %v2470, %v3001
        %v3003 = vpop.f32.mrb[0].mxu0
        %3004 = vmatprep.mubr.bf16.mxu0 0
        %3005 = vmatmul.mubr.bf16.gmra.mrb[0].mxu0 %v2614
        %v3006 = vpop.f32.mrb[0].mxu0
        %v3007 = vadd.f32 %v2470, %v3006
        %v3008 = vpop.f32.mrb[0].mxu0
        %v3009 = vpop.f32.mrb[0].mxu0
        %v3010 = vadd.f32 %v2470, %v3009
        %v3011 = vpop.f32.mrb[0].mxu0
        %3012 = vmatprep.mubr.bf16.mxu0 0
        %3013 = vmatmul.mubr.bf16.gmra.mrb[0].mxu0 %v2617
        %v3014 = vpop.f32.mrb[0].mxu0
        %v3015 = vadd.f32 %v2470, %v3014
        %v3016 = vpop.f32.mrb[0].mxu0
        %v3017 = vpop.f32.mrb[0].mxu0
        %v3018 = vadd.f32 %v2470, %v3017
        %v3019 = vpop.f32.mrb[0].mxu0
        %3020 = vmatprep.mubr.bf16.mxu0 0
        %3021 = vmatmul.mubr.bf16.gmra.mrb[0].mxu0 %v2620
        %v3022 = vpop.f32.mrb[0].mxu0
        %v3023 = vadd.f32 %v2470, %v3022
        %v3024 = vpop.f32.mrb[0].mxu0
        %v3025 = vpop.f32.mrb[0].mxu0
        %v3026 = vadd.f32 %v2470, %v3025
        %v3027 = vpop.f32.mrb[0].mxu0
        %3028 = vmatprep.mubr.bf16.mxu0 0
        %3029 = vmatmul.mubr.bf16.gmra.mrb[0].mxu0 %v2623
        %v3030 = vpop.f32.mrb[0].mxu0
        %v3031 = vadd.f32 %v2470, %v3030
        %v3032 = vpop.f32.mrb[0].mxu0
        %v3033 = vpop.f32.mrb[0].mxu0
        %v3034 = vadd.f32 %v2470, %v3033
        %v3035 = vpop.f32.mrb[0].mxu0
        %3036 = vmatprep.mubr.bf16.mxu0 0
        %3037 = vmatmul.mubr.bf16.gmra.mrb[0].mxu0 %v2626
        %v3038 = vpop.f32.mrb[0].mxu0
        %v3039 = vadd.f32 %v2470, %v3038
        %v3040 = vpop.f32.mrb[0].mxu0
        %v3041 = vpop.f32.mrb[0].mxu0
        %v3042 = vadd.f32 %v2470, %v3041
        %v3043 = vpop.f32.mrb[0].mxu0
        %3044 = vdwg.mxu0
        %v3045 = vtanh.pop %v2663
        %v3046 = vtanh.pop %v2666
        %v3047 = vtanh.pop %v2671
        %v3048 = vtanh.pop %v2674
        %v3049 = vtanh.pop %v2679
        %v3050 = vtanh.pop %v2682
        %v3051 = vtanh.pop %v2687
        %v3052 = vtanh.pop %v2690
        %v3053 = vtanh.pop %v2695
        %v3054 = vtanh.pop %v2698
        %v3055 = vtanh.pop %v2703
        %v3056 = vtanh.pop %v2706
        %v3057 = vtanh.pop %v2711
        %v3058 = vtanh.pop %v2714
        %v3059 = vtanh.pop %v2719
        %v3060 = vtanh.pop %v2722
        %v3061 = vtanh.pop %v2727
        %v3062 = vtanh.pop %v2730
        %v3063 = vtanh.pop %v2735
        %v3064 = vtanh.pop %v2738
        %v3065 = vtanh.pop %v2743
        %v3066 = vtanh.pop %v2746
        %v3067 = vtanh.pop %v2751
        %v3068 = vtanh.pop %v2754
        %v3069 = vtanh.pop %v2759
        %v3070 = vtanh.pop %v2762
        %v3071 = vtanh.pop %v2767
        %v3072 = vtanh.pop %v2770
        %v3073 = vtanh.pop %v2775
        %v3074 = vtanh.pop %v2778
        %v3075 = vtanh.pop %v2783
        %v3076 = vtanh.pop %v2786
        %v3077 = vtanh.pop %v2791
        %v3078 = vtanh.pop %v2794
        %v3079 = vtanh.pop %v2799
        %v3080 = vtanh.pop %v2802
        %v3081 = vtanh.pop %v2807
        %v3082 = vtanh.pop %v2810
        %v3083 = vtanh.pop %v2815
        %v3084 = vtanh.pop %v2818
        %v3085 = vtanh.pop %v2823
        %v3086 = vtanh.pop %v2826
        %v3087 = vtanh.pop %v2831
        %v3088 = vtanh.pop %v2834
        %v3089 = vtanh.pop %v2839
        %v3090 = vtanh.pop %v2842
        %v3091 = vtanh.pop %v2847
        %v3092 = vtanh.pop %v2850
        %v3093 = vtanh.pop %v2855
        %v3094 = vtanh.pop %v2858
        %v3095 = vtanh.pop %v2863
        %v3096 = vtanh.pop %v2866
        %v3097 = vtanh.pop %v2871
        %v3098 = vtanh.pop %v2874
        %v3099 = vtanh.pop %v2879
        %v3100 = vtanh.pop %v2882
        %v3101 = vtanh.pop %v2887
        %v3102 = vtanh.pop %v2890
        %v3103 = vtanh.pop %v2895
        %v3104 = vtanh.pop %v2898
        %v3105 = vtanh.pop %v2903
        %v3106 = vtanh.pop %v2906
        %v3107 = vtanh.pop %v2911
        %v3108 = vtanh.pop %v2914
        %v3109 = vtanh.pop %v2919
        %v3110 = vtanh.pop %v2922
        %v3111 = vtanh.pop %v2927
        %v3112 = vtanh.pop %v2930
        %v3113 = vtanh.pop %v2935
        %v3114 = vtanh.pop %v2938
        %v3115 = vtanh.pop %v2943
        %v3116 = vtanh.pop %v2946
        %v3117 = vtanh.pop %v2951
        %v3118 = vtanh.pop %v2954
        %v3119 = vtanh.pop %v2959
        %v3120 = vtanh.pop %v2962
        %v3121 = vtanh.pop %v2967
        %v3122 = vtanh.pop %v2970
        %v3123 = vtanh.pop %v2975
        %v3124 = vtanh.pop %v2978
        %v3125 = vtanh.pop %v2983
        %v3126 = vtanh.pop %v2986
        %v3127 = vtanh.pop %v2991
        %v3128 = vtanh.pop %v2994
        %v3129 = vtanh.pop %v2999
        %v3130 = vtanh.pop %v3002
        %v3131 = vtanh.pop %v3007
        %v3132 = vtanh.pop %v3010
        %v3133 = vtanh.pop %v3015
        %v3134 = vtanh.pop %v3018
        %v3135 = vtanh.pop %v3023
        %v3136 = vtanh.pop %v3026
        %v3137 = vtanh.pop %v3031
        %v3138 = vtanh.pop %v3034
        %v3139 = vtanh.pop %v3039
        %v3140 = vtanh.pop %v3042
        %v3141 = vpack.c.bf16 %v3046, %v3045
        %v3142 = vpack.c.bf16 %v3048, %v3047
        %v3143 = vpack.c.bf16 %v3050, %v3049
        %v3144 = vpack.c.bf16 %v3052, %v3051
        %v3145 = vpack.c.bf16 %v3054, %v3053
        %v3146 = vpack.c.bf16 %v3056, %v3055
        %v3147 = vpack.c.bf16 %v3058, %v3057
        %v3148 = vpack.c.bf16 %v3060, %v3059
        %v3149 = vpack.c.bf16 %v3062, %v3061
        %v3150 = vpack.c.bf16 %v3064, %v3063
        %v3151 = vpack.c.bf16 %v3066, %v3065
        %v3152 = vpack.c.bf16 %v3068, %v3067
        %v3153 = vpack.c.bf16 %v3070, %v3069
        %v3154 = vpack.c.bf16 %v3072, %v3071
        %v3155 = vpack.c.bf16 %v3074, %v3073
        %v3156 = vpack.c.bf16 %v3076, %v3075
        %v3157 = vpack.c.bf16 %v3078, %v3077
        %v3158 = vpack.c.bf16 %v3080, %v3079
        %v3159 = vpack.c.bf16 %v3082, %v3081
        %v3160 = vpack.c.bf16 %v3084, %v3083
        %v3161 = vpack.c.bf16 %v3086, %v3085
        %v3162 = vpack.c.bf16 %v3088, %v3087
        %v3163 = vpack.c.bf16 %v3090, %v3089
        %v3164 = vpack.c.bf16 %v3092, %v3091
        %v3165 = vpack.c.bf16 %v3094, %v3093
        %v3166 = vpack.c.bf16 %v3096, %v3095
        %v3167 = vpack.c.bf16 %v3098, %v3097
        %v3168 = vpack.c.bf16 %v3100, %v3099
        %v3169 = vpack.c.bf16 %v3102, %v3101
        %v3170 = vpack.c.bf16 %v3104, %v3103
        %v3171 = vpack.c.bf16 %v3106, %v3105
        %v3172 = vpack.c.bf16 %v3108, %v3107
        %v3173 = vpack.c.bf16 %v3110, %v3109
        %v3174 = vpack.c.bf16 %v3112, %v3111
        %v3175 = vpack.c.bf16 %v3114, %v3113
        %v3176 = vpack.c.bf16 %v3116, %v3115
        %v3177 = vpack.c.bf16 %v3118, %v3117
        %v3178 = vpack.c.bf16 %v3120, %v3119
        %v3179 = vpack.c.bf16 %v3122, %v3121
        %v3180 = vpack.c.bf16 %v3124, %v3123
        %v3181 = vpack.c.bf16 %v3126, %v3125
        %v3182 = vpack.c.bf16 %v3128, %v3127
        %v3183 = vpack.c.bf16 %v3130, %v3129
        %v3184 = vpack.c.bf16 %v3132, %v3131
        %v3185 = vpack.c.bf16 %v3134, %v3133
        %v3186 = vpack.c.bf16 %v3136, %v3135
        %v3187 = vpack.c.bf16 %v3138, %v3137
        %v3188 = vpack.c.bf16 %v3140, %v3139
        %v3189 = vld [vmem:[%s609] sm:$0xf]
        %v3190 = vld [vmem:[%s609 + $0x4] sm:$0xf]
        %v3191 = vld [vmem:[%s609 + $0x8] sm:$0xf]
        %v3192 = vld [vmem:[%s609 + $0xc] sm:$0xf]
        %v3193 = vld [vmem:[%s609 + $0x10] sm:$0xf]
        %v3194 = vld [vmem:[%s609 + $0x14] sm:$0xf]
        %v3195 = vld [vmem:[%s609 + $0x18] sm:$0xf]
        %v3196 = vld [vmem:[%s609 + $0x1c] sm:$0xf]
        %v3197 = vld [vmem:[%s609 + $0x20] sm:$0xf]
        %v3198 = vld [vmem:[%s609 + $0x24] sm:$0xf]
        %v3199 = vld [vmem:[%s609 + $0x28] sm:$0xf]
        %v3200 = vld [vmem:[%s609 + $0x2c] sm:$0xf]
        %v3201 = vld [vmem:[%s609 + $0x30] sm:$0xf]
        %v3202 = vld [vmem:[%s609 + $0x34] sm:$0xf]
        %v3203 = vld [vmem:[%s609 + $0x38] sm:$0xf]
        %v3204 = vld [vmem:[%s609 + $0x3c] sm:$0xf]
        %v3205 = vld [vmem:[%s2 + $0x98] sm:$0x7]
        %v3206 = vld [vmem:[%s2 + $0x9c] sm:$0x1]
        %v3207 = vunpack.c.l.bf16 %v3206
        %v3208 = vlaneseq
        %v3209 = vshrl.u32 %v3208, 7
        %v3210 = vsub.s32 0, %v3209
        %v3211 = vrot.slane %v3207, %v3210
        %v3228 = vunpack.c.l.b16 %v3189
        %v3229 = vunpack.c.l.b16 %v3190
        %v3230 = vunpack.c.l.b16 %v3191
        %v3231 = vunpack.c.l.b16 %v3192
        %v3232 = vunpack.c.l.b16 %v3193
        %v3233 = vunpack.c.l.b16 %v3194
        %v3234 = vunpack.c.l.b16 %v3195
        %v3235 = vunpack.c.l.b16 %v3196
        %v3236 = vunpack.c.l.b16 %v3197
        %v3237 = vunpack.c.l.b16 %v3198
        %v3238 = vunpack.c.l.b16 %v3199
        %v3239 = vunpack.c.l.b16 %v3200
        %v3240 = vunpack.c.l.b16 %v3201
        %v3241 = vunpack.c.l.b16 %v3202
        %v3242 = vunpack.c.l.b16 %v3203
        %v3243 = vunpack.c.l.b16 %v3204
        %v3244 = vpack.c.b16 %v3229, %v3228
        %v3245 = vpack.c.b16 %v3231, %v3230
        %v3246 = vpack.c.b16 %v3233, %v3232
        %v3247 = vpack.c.b16 %v3235, %v3234
        %v3248 = vpack.c.b16 %v3237, %v3236
        %v3249 = vpack.c.b16 %v3239, %v3238
        %v3250 = vpack.c.b16 %v3241, %v3240
        %v3251 = vpack.c.b16 %v3243, %v3242
        %vm3252 = vcmask 39936
        %v3254 = vsel %vm3252, %v3244, 0
        %v3257 = vsel %vm3252, %v3245, 0
        %v3260 = vsel %vm3252, %v3246, 0
        %v3263 = vsel %vm3252, %v3247, 0
        %v3266 = vsel %vm3252, %v3248, 0
        %v3269 = vsel %vm3252, %v3249, 0
        %v3272 = vsel %vm3252, %v3250, 0
        %v3275 = vsel %vm3252, %v3251, 0
        %vm3277 = vcmask 1041408
        %vm3278 = vcmask 1042432
        %v3279 = vsel %vm3277, 4294967295, 65535
        %v3280 = vsel %vm3278, %v3279, 0
        %v3282 = vand.u32 %v3205, %v3280
        %3284 = vmatprep.subr.bf16.mxu0 0
        %3285 = vmatpush1.bf16.msra.mxu0 %v3282
        %3286 = vmatprep.subr.bf16.mxu0 0
        %3287 = vmatpush1.bf16.msra.mxu0 0
        %3288 = vmatprep.subr.bf16.mxu0 0
        %3289 = vmatpush1.bf16.msra.mxu0 0
        %3290 = vmatprep.subr.bf16.mxu0 0
        %3291 = vmatpush1.bf16.msra.mxu0 0
        %3292 = vmatprep.subr.bf16.mxu0 0
        %3293 = vmatpush1.bf16.msra.mxu0 0
        %3294 = vmatprep.subr.bf16.mxu0 0
        %3295 = vmatpush1.bf16.msra.mxu0 0
        %3296 = vmatprep.subr.bf16.mxu0 0
        %3297 = vmatpush1.bf16.msra.mxu0 0
        %3298 = vmatprep.subr.bf16.mxu0 0
        %3299 = vmatpush1.bf16.msra.mxu0 0
        %3300 = vmatprep.subr.bf16.mxu0 0
        %3301 = vmatpush1.bf16.msra.mxu0 0
        %3302 = vmatprep.subr.bf16.mxu0 0
        %3303 = vmatpush1.bf16.msra.mxu0 0
        %3304 = vmatprep.subr.bf16.mxu0 0
        %3305 = vmatpush1.bf16.msra.mxu0 0
        %3306 = vmatprep.subr.bf16.mxu0 0
        %3307 = vmatpush1.bf16.msra.mxu0 0
        %3308 = vmatprep.subr.bf16.mxu0 0
        %3309 = vmatpush1.bf16.msra.mxu0 0
        %3310 = vmatprep.subr.bf16.mxu0 0
        %3311 = vmatpush1.bf16.msra.mxu0 0
        %3312 = vmatprep.subr.bf16.mxu0 0
        %3313 = vmatpush1.bf16.msra.mxu0 0
        %3314 = vmatprep.subr.bf16.mxu0 0
        %3315 = vmatpush1.bf16.msra.mxu0 0
        %3316 = vmatprep.mubr.bf16.mxu0 0
        %3317 = vmatmul.mubr.bf16.gmra.mrb[0].mxu0 %v3254
        %v3318 = vpop.f32.mrb[0].mxu0
        %v3319 = vadd.f32 %v3211, %v3318
        %v3320 = vpop.f32.mrb[0].mxu0
        %v3321 = vpop.f32.mrb[0].mxu0
        %v3322 = vadd.f32 %v3211, %v3321
        %v3323 = vpop.f32.mrb[0].mxu0
        %3324 = vmatprep.mubr.bf16.mxu0 0
        %3325 = vmatmul.mubr.bf16.gmra.mrb[0].mxu0 %v3257
        %v3326 = vpop.f32.mrb[0].mxu0
        %v3327 = vadd.f32 %v3211, %v3326
        %v3328 = vpop.f32.mrb[0].mxu0
        %v3329 = vpop.f32.mrb[0].mxu0
        %v3330 = vadd.f32 %v3211, %v3329
        %v3331 = vpop.f32.mrb[0].mxu0
        %3332 = vmatprep.mubr.bf16.mxu0 0
        %3333 = vmatmul.mubr.bf16.gmra.mrb[0].mxu0 %v3260
        %v3334 = vpop.f32.mrb[0].mxu0
        %v3335 = vadd.f32 %v3211, %v3334
        %v3336 = vpop.f32.mrb[0].mxu0
        %v3337 = vpop.f32.mrb[0].mxu0
        %v3338 = vadd.f32 %v3211, %v3337
        %v3339 = vpop.f32.mrb[0].mxu0
        %3340 = vmatprep.mubr.bf16.mxu0 0
        %3341 = vmatmul.mubr.bf16.gmra.mrb[0].mxu0 %v3263
        %v3342 = vpop.f32.mrb[0].mxu0
        %v3343 = vadd.f32 %v3211, %v3342
        %v3344 = vpop.f32.mrb[0].mxu0
        %v3345 = vpop.f32.mrb[0].mxu0
        %v3346 = vadd.f32 %v3211, %v3345
        %v3347 = vpop.f32.mrb[0].mxu0
        %3348 = vmatprep.mubr.bf16.mxu0 0
        %3349 = vmatmul.mubr.bf16.gmra.mrb[0].mxu0 %v3266
        %v3350 = vpop.f32.mrb[0].mxu0
        %v3351 = vadd.f32 %v3211, %v3350
        %v3352 = vpop.f32.mrb[0].mxu0
        %v3353 = vpop.f32.mrb[0].mxu0
        %v3354 = vadd.f32 %v3211, %v3353
        %v3355 = vpop.f32.mrb[0].mxu0
        %3356 = vmatprep.mubr.bf16.mxu0 0
        %3357 = vmatmul.mubr.bf16.gmra.mrb[0].mxu0 %v3269
        %v3358 = vpop.f32.mrb[0].mxu0
        %v3359 = vadd.f32 %v3211, %v3358
        %v3360 = vpop.f32.mrb[0].mxu0
        %v3361 = vpop.f32.mrb[0].mxu0
        %v3362 = vadd.f32 %v3211, %v3361
        %v3363 = vpop.f32.mrb[0].mxu0
        %3364 = vmatprep.mubr.bf16.mxu0 0
        %3365 = vmatmul.mubr.bf16.gmra.mrb[0].mxu0 %v3272
        %v3366 = vpop.f32.mrb[0].mxu0
        %v3367 = vadd.f32 %v3211, %v3366
        %v3368 = vpop.f32.mrb[0].mxu0
        %v3369 = vpop.f32.mrb[0].mxu0
        %v3370 = vadd.f32 %v3211, %v3369
        %v3371 = vpop.f32.mrb[0].mxu0
        %3372 = vmatprep.mubr.bf16.mxu0 0
        %3373 = vmatmul.mubr.bf16.gmra.mrb[0].mxu0 %v3275
        %v3374 = vpop.f32.mrb[0].mxu0
        %v3375 = vadd.f32 %v3211, %v3374
        %v3376 = vpop.f32.mrb[0].mxu0
        %v3377 = vpop.f32.mrb[0].mxu0
        %v3378 = vadd.f32 %v3211, %v3377
        %v3379 = vpop.f32.mrb[0].mxu0
        %3380 = vdwg.mxu0
        %v3381 = vld [vmem:[%s2 + $0x68] sm:$0xf]
        %v3382 = vld [vmem:[%s2 + $0x6c] sm:$0xf]
        %v3385 = vunpack.c.l.b16 %v3381
        %v3386 = vunpack.c.l.b16 %v3382
        %v3387 = vpack.c.b16 %v3386, %v3385
        %vm3389 = vcmask 130048
        %v3391 = vsel %vm3389, %v3141, 0
        %v3394 = vsel %vm3389, %v3142, 0
        %v3397 = vsel %vm3389, %v3143, 0
        %v3400 = vsel %vm3389, %v3144, 0
        %v3403 = vsel %vm3389, %v3145, 0
        %v3406 = vsel %vm3389, %v3146, 0
        %v3409 = vsel %vm3389, %v3147, 0
        %v3412 = vsel %vm3389, %v3148, 0
        %3414 = vmatprep.subr.bf16.mxu0 0
        %3415 = vmatpush1.bf16.msra.mxu0 %v3387
        %3416 = vmatprep.subr.bf16.mxu0 0
        %3417 = vmatpush1.bf16.msra.mxu0 0
        %3418 = vmatprep.subr.bf16.mxu0 0
        %3419 = vmatpush1.bf16.msra.mxu0 0
        %3420 = vmatprep.subr.bf16.mxu0 0
        %3421 = vmatpush1.bf16.msra.mxu0 0
        %3422 = vmatprep.subr.bf16.mxu0 0
        %3423 = vmatpush1.bf16.msra.mxu0 0
        %3424 = vmatprep.subr.bf16.mxu0 0
        %3425 = vmatpush1.bf16.msra.mxu0 0
        %3426 = vmatprep.subr.bf16.mxu0 0
        %3427 = vmatpush1.bf16.msra.mxu0 0
        %3428 = vmatprep.subr.bf16.mxu0 0
        %3429 = vmatpush1.bf16.msra.mxu0 0
        %3430 = vmatprep.subr.bf16.mxu0 0
        %3431 = vmatpush1.bf16.msra.mxu0 0
        %3432 = vmatprep.subr.bf16.mxu0 0
        %3433 = vmatpush1.bf16.msra.mxu0 0
        %3434 = vmatprep.subr.bf16.mxu0 0
        %3435 = vmatpush1.bf16.msra.mxu0 0
        %3436 = vmatprep.subr.bf16.mxu0 0
        %3437 = vmatpush1.bf16.msra.mxu0 0
        %3438 = vmatprep.subr.bf16.mxu0 0
        %3439 = vmatpush1.bf16.msra.mxu0 0
        %3440 = vmatprep.subr.bf16.mxu0 0
        %3441 = vmatpush1.bf16.msra.mxu0 0
        %3442 = vmatprep.subr.bf16.mxu0 0
        %3443 = vmatpush1.bf16.msra.mxu0 0
        %3444 = vmatprep.subr.bf16.mxu0 0
        %3445 = vmatpush1.bf16.msra.mxu0 0
        %3446 = vmatprep.mubr.bf16.mxu0 0
        %3447 = vmatmul.mubr.bf16.gmra.mrb[0].mxu0 %v3391
        %v3448 = vpop.f32.mrb[0].mxu0
        %v3449 = vadd.f32 0.0, %v3448
        %v3450 = vpop.f32.mrb[0].mxu0
        %v3451 = vpop.f32.mrb[0].mxu0
        %v3452 = vadd.f32 0.0, %v3451
        %v3453 = vpop.f32.mrb[0].mxu0
        %3454 = vmatprep.mubr.bf16.mxu0 0
        %3455 = vmatmul.mubr.bf16.gmra.mrb[0].mxu0 %v3394
        %v3456 = vpop.f32.mrb[0].mxu0
        %v3457 = vadd.f32 0.0, %v3456
        %v3458 = vpop.f32.mrb[0].mxu0
        %v3459 = vpop.f32.mrb[0].mxu0
        %v3460 = vadd.f32 0.0, %v3459
        %v3461 = vpop.f32.mrb[0].mxu0
        %3462 = vmatprep.mubr.bf16.mxu0 0
        %3463 = vmatmul.mubr.bf16.gmra.mrb[0].mxu0 %v3397
        %v3464 = vpop.f32.mrb[0].mxu0
        %v3465 = vadd.f32 0.0, %v3464
        %v3466 = vpop.f32.mrb[0].mxu0
        %v3467 = vpop.f32.mrb[0].mxu0
        %v3468 = vadd.f32 0.0, %v3467
        %v3469 = vpop.f32.mrb[0].mxu0
        %3470 = vmatprep.mubr.bf16.mxu0 0
        %3471 = vmatmul.mubr.bf16.gmra.mrb[0].mxu0 %v3400
        %v3472 = vpop.f32.mrb[0].mxu0
        %v3473 = vadd.f32 0.0, %v3472
        %v3474 = vpop.f32.mrb[0].mxu0
        %v3475 = vpop.f32.mrb[0].mxu0
        %v3476 = vadd.f32 0.0, %v3475
        %v3477 = vpop.f32.mrb[0].mxu0
        %3478 = vmatprep.mubr.bf16.mxu0 0
        %3479 = vmatmul.mubr.bf16.gmra.mrb[0].mxu0 %v3403
        %v3480 = vpop.f32.mrb[0].mxu0
        %v3481 = vadd.f32 0.0, %v3480
        %v3482 = vpop.f32.mrb[0].mxu0
        %v3483 = vpop.f32.mrb[0].mxu0
        %v3484 = vadd.f32 0.0, %v3483
        %v3485 = vpop.f32.mrb[0].mxu0
        %3486 = vmatprep.mubr.bf16.mxu0 0
        %3487 = vmatmul.mubr.bf16.gmra.mrb[0].mxu0 %v3406
        %v3488 = vpop.f32.mrb[0].mxu0
        %v3489 = vadd.f32 0.0, %v3488
        %v3490 = vpop.f32.mrb[0].mxu0
        %v3491 = vpop.f32.mrb[0].mxu0
        %v3492 = vadd.f32 0.0, %v3491
        %v3493 = vpop.f32.mrb[0].mxu0
        %3494 = vmatprep.mubr.bf16.mxu0 0
        %3495 = vmatmul.mubr.bf16.gmra.mrb[0].mxu0 %v3409
        %v3496 = vpop.f32.mrb[0].mxu0
        %v3497 = vadd.f32 0.0, %v3496
        %v3498 = vpop.f32.mrb[0].mxu0
        %v3499 = vpop.f32.mrb[0].mxu0
        %v3500 = vadd.f32 0.0, %v3499
        %v3501 = vpop.f32.mrb[0].mxu0
        %3502 = vmatprep.mubr.bf16.mxu0 0
        %3503 = vmatmul.mubr.bf16.gmra.mrb[0].mxu0 %v3412
        %v3504 = vpop.f32.mrb[0].mxu0
        %v3505 = vadd.f32 0.0, %v3504
        %v3506 = vpop.f32.mrb[0].mxu0
        %v3507 = vpop.f32.mrb[0].mxu0
        %v3508 = vadd.f32 0.0, %v3507
        %v3509 = vpop.f32.mrb[0].mxu0
        %3510 = vdwg.mxu0
        %v3511 = vadd.f32 %v3319, %v3449
        %v3512 = vadd.f32 %v3322, %v3452
        %v3513 = vadd.f32 %v3327, %v3457
        %v3514 = vadd.f32 %v3330, %v3460
        %v3515 = vadd.f32 %v3335, %v3465
        %v3516 = vadd.f32 %v3338, %v3468
        %v3517 = vadd.f32 %v3343, %v3473
        %v3518 = vadd.f32 %v3346, %v3476
        %v3519 = vadd.f32 %v3351, %v3481
        %v3520 = vadd.f32 %v3354, %v3484
        %v3521 = vadd.f32 %v3359, %v3489
        %v3522 = vadd.f32 %v3362, %v3492
        %v3523 = vadd.f32 %v3367, %v3497
        %v3524 = vadd.f32 %v3370, %v3500
        %v3525 = vadd.f32 %v3375, %v3505
        %v3526 = vadd.f32 %v3378, %v3508
        %v3527 = vld [vmem:[%s2 + $0x70] sm:$0xf]
        %v3528 = vld [vmem:[%s2 + $0x74] sm:$0xf]
        %v3531 = vunpack.c.l.b16 %v3527
        %v3532 = vunpack.c.l.b16 %v3528
        %v3533 = vpack.c.b16 %v3532, %v3531
        %v3536 = vsel %vm3389, %v3149, 0
        %v3539 = vsel %vm3389, %v3150, 0
        %v3542 = vsel %vm3389, %v3151, 0
        %v3545 = vsel %vm3389, %v3152, 0
        %v3548 = vsel %vm3389, %v3153, 0
        %v3551 = vsel %vm3389, %v3154, 0
        %v3554 = vsel %vm3389, %v3155, 0
        %v3557 = vsel %vm3389, %v3156, 0
        %3559 = vmatprep.subr.bf16.mxu0 0
        %3560 = vmatpush1.bf16.msra.mxu0 %v3533
        %3561 = vmatprep.subr.bf16.mxu0 0
        %3562 = vmatpush1.bf16.msra.mxu0 0
        %3563 = vmatprep.subr.bf16.mxu0 0
        %3564 = vmatpush1.bf16.msra.mxu0 0
        %3565 = vmatprep.subr.bf16.mxu0 0
        %3566 = vmatpush1.bf16.msra.mxu0 0
        %3567 = vmatprep.subr.bf16.mxu0 0
        %3568 = vmatpush1.bf16.msra.mxu0 0
        %3569 = vmatprep.subr.bf16.mxu0 0
        %3570 = vmatpush1.bf16.msra.mxu0 0
        %3571 = vmatprep.subr.bf16.mxu0 0
        %3572 = vmatpush1.bf16.msra.mxu0 0
        %3573 = vmatprep.subr.bf16.mxu0 0
        %3574 = vmatpush1.bf16.msra.mxu0 0
        %3575 = vmatprep.subr.bf16.mxu0 0
        %3576 = vmatpush1.bf16.msra.mxu0 0
        %3577 = vmatprep.subr.bf16.mxu0 0
        %3578 = vmatpush1.bf16.msra.mxu0 0
        %3579 = vmatprep.subr.bf16.mxu0 0
        %3580 = vmatpush1.bf16.msra.mxu0 0
        %3581 = vmatprep.subr.bf16.mxu0 0
        %3582 = vmatpush1.bf16.msra.mxu0 0
        %3583 = vmatprep.subr.bf16.mxu0 0
        %3584 = vmatpush1.bf16.msra.mxu0 0
        %3585 = vmatprep.subr.bf16.mxu0 0
        %3586 = vmatpush1.bf16.msra.mxu0 0
        %3587 = vmatprep.subr.bf16.mxu0 0
        %3588 = vmatpush1.bf16.msra.mxu0 0
        %3589 = vmatprep.subr.bf16.mxu0 0
        %3590 = vmatpush1.bf16.msra.mxu0 0
        %3591 = vmatprep.mubr.bf16.mxu0 0
        %3592 = vmatmul.mubr.bf16.gmra.mrb[0].mxu0 %v3536
        %v3593 = vpop.f32.mrb[0].mxu0
        %v3594 = vadd.f32 0.0, %v3593
        %v3595 = vpop.f32.mrb[0].mxu0
        %v3596 = vpop.f32.mrb[0].mxu0
        %v3597 = vadd.f32 0.0, %v3596
        %v3598 = vpop.f32.mrb[0].mxu0
        %3599 = vmatprep.mubr.bf16.mxu0 0
        %3600 = vmatmul.mubr.bf16.gmra.mrb[0].mxu0 %v3539
        %v3601 = vpop.f32.mrb[0].mxu0
        %v3602 = vadd.f32 0.0, %v3601
        %v3603 = vpop.f32.mrb[0].mxu0
        %v3604 = vpop.f32.mrb[0].mxu0
        %v3605 = vadd.f32 0.0, %v3604
        %v3606 = vpop.f32.mrb[0].mxu0
        %3607 = vmatprep.mubr.bf16.mxu0 0
        %3608 = vmatmul.mubr.bf16.gmra.mrb[0].mxu0 %v3542
        %v3609 = vpop.f32.mrb[0].mxu0
        %v3610 = vadd.f32 0.0, %v3609
        %v3611 = vpop.f32.mrb[0].mxu0
        %v3612 = vpop.f32.mrb[0].mxu0
        %v3613 = vadd.f32 0.0, %v3612
        %v3614 = vpop.f32.mrb[0].mxu0
        %3615 = vmatprep.mubr.bf16.mxu0 0
        %3616 = vmatmul.mubr.bf16.gmra.mrb[0].mxu0 %v3545
        %v3617 = vpop.f32.mrb[0].mxu0
        %v3618 = vadd.f32 0.0, %v3617
        %v3619 = vpop.f32.mrb[0].mxu0
        %v3620 = vpop.f32.mrb[0].mxu0
        %v3621 = vadd.f32 0.0, %v3620
        %v3622 = vpop.f32.mrb[0].mxu0
        %3623 = vmatprep.mubr.bf16.mxu0 0
        %3624 = vmatmul.mubr.bf16.gmra.mrb[0].mxu0 %v3548
        %v3625 = vpop.f32.mrb[0].mxu0
        %v3626 = vadd.f32 0.0, %v3625
        %v3627 = vpop.f32.mrb[0].mxu0
        %v3628 = vpop.f32.mrb[0].mxu0
        %v3629 = vadd.f32 0.0, %v3628
        %v3630 = vpop.f32.mrb[0].mxu0
        %3631 = vmatprep.mubr.bf16.mxu0 0
        %3632 = vmatmul.mubr.bf16.gmra.mrb[0].mxu0 %v3551
        %v3633 = vpop.f32.mrb[0].mxu0
        %v3634 = vadd.f32 0.0, %v3633
        %v3635 = vpop.f32.mrb[0].mxu0
        %v3636 = vpop.f32.mrb[0].mxu0
        %v3637 = vadd.f32 0.0, %v3636
        %v3638 = vpop.f32.mrb[0].mxu0
        %3639 = vmatprep.mubr.bf16.mxu0 0
        %3640 = vmatmul.mubr.bf16.gmra.mrb[0].mxu0 %v3554
        %v3641 = vpop.f32.mrb[0].mxu0
        %v3642 = vadd.f32 0.0, %v3641
        %v3643 = vpop.f32.mrb[0].mxu0
        %v3644 = vpop.f32.mrb[0].mxu0
        %v3645 = vadd.f32 0.0, %v3644
        %v3646 = vpop.f32.mrb[0].mxu0
        %3647 = vmatprep.mubr.bf16.mxu0 0
        %3648 = vmatmul.mubr.bf16.gmra.mrb[0].mxu0 %v3557
        %v3649 = vpop.f32.mrb[0].mxu0
        %v3650 = vadd.f32 0.0, %v3649
        %v3651 = vpop.f32.mrb[0].mxu0
        %v3652 = vpop.f32.mrb[0].mxu0
        %v3653 = vadd.f32 0.0, %v3652
        %v3654 = vpop.f32.mrb[0].mxu0
        %3655 = vdwg.mxu0
        %v3656 = vadd.f32 %v3511, %v3594
        %v3657 = vadd.f32 %v3512, %v3597
        %v3658 = vadd.f32 %v3513, %v3602
        %v3659 = vadd.f32 %v3514, %v3605
        %v3660 = vadd.f32 %v3515, %v3610
        %v3661 = vadd.f32 %v3516, %v3613
        %v3662 = vadd.f32 %v3517, %v3618
        %v3663 = vadd.f32 %v3518, %v3621
        %v3664 = vadd.f32 %v3519, %v3626
        %v3665 = vadd.f32 %v3520, %v3629
        %v3666 = vadd.f32 %v3521, %v3634
        %v3667 = vadd.f32 %v3522, %v3637
        %v3668 = vadd.f32 %v3523, %v3642
        %v3669 = vadd.f32 %v3524, %v3645
        %v3670 = vadd.f32 %v3525, %v3650
        %v3671 = vadd.f32 %v3526, %v3653
        %v3672 = vld [vmem:[%s2 + $0x78] sm:$0xf]
        %v3673 = vld [vmem:[%s2 + $0x7c] sm:$0xf]
        %v3676 = vunpack.c.l.b16 %v3672
        %v3677 = vunpack.c.l.b16 %v3673
        %v3678 = vpack.c.b16 %v3677, %v3676
        %v3681 = vsel %vm3389, %v3157, 0
        %v3684 = vsel %vm3389, %v3158, 0
        %v3687 = vsel %vm3389, %v3159, 0
        %v3690 = vsel %vm3389, %v3160, 0
        %v3693 = vsel %vm3389, %v3161, 0
        %v3696 = vsel %vm3389, %v3162, 0
        %v3699 = vsel %vm3389, %v3163, 0
        %v3702 = vsel %vm3389, %v3164, 0
        %3704 = vmatprep.subr.bf16.mxu0 0
        %3705 = vmatpush1.bf16.msra.mxu0 %v3678
        %3706 = vmatprep.subr.bf16.mxu0 0
        %3707 = vmatpush1.bf16.msra.mxu0 0
        %3708 = vmatprep.subr.bf16.mxu0 0
        %3709 = vmatpush1.bf16.msra.mxu0 0
        %3710 = vmatprep.subr.bf16.mxu0 0
        %3711 = vmatpush1.bf16.msra.mxu0 0
        %3712 = vmatprep.subr.bf16.mxu0 0
        %3713 = vmatpush1.bf16.msra.mxu0 0
        %3714 = vmatprep.subr.bf16.mxu0 0
        %3715 = vmatpush1.bf16.msra.mxu0 0
        %3716 = vmatprep.subr.bf16.mxu0 0
        %3717 = vmatpush1.bf16.msra.mxu0 0
        %3718 = vmatprep.subr.bf16.mxu0 0
        %3719 = vmatpush1.bf16.msra.mxu0 0
        %3720 = vmatprep.subr.bf16.mxu0 0
        %3721 = vmatpush1.bf16.msra.mxu0 0
        %3722 = vmatprep.subr.bf16.mxu0 0
        %3723 = vmatpush1.bf16.msra.mxu0 0
        %3724 = vmatprep.subr.bf16.mxu0 0
        %3725 = vmatpush1.bf16.msra.mxu0 0
        %3726 = vmatprep.subr.bf16.mxu0 0
        %3727 = vmatpush1.bf16.msra.mxu0 0
        %3728 = vmatprep.subr.bf16.mxu0 0
        %3729 = vmatpush1.bf16.msra.mxu0 0
        %3730 = vmatprep.subr.bf16.mxu0 0
        %3731 = vmatpush1.bf16.msra.mxu0 0
        %3732 = vmatprep.subr.bf16.mxu0 0
        %3733 = vmatpush1.bf16.msra.mxu0 0
        %3734 = vmatprep.subr.bf16.mxu0 0
        %3735 = vmatpush1.bf16.msra.mxu0 0
        %3736 = vmatprep.mubr.bf16.mxu0 0
        %3737 = vmatmul.mubr.bf16.gmra.mrb[0].mxu0 %v3681
        %v3738 = vpop.f32.mrb[0].mxu0
        %v3739 = vadd.f32 0.0, %v3738
        %v3740 = vpop.f32.mrb[0].mxu0
        %v3741 = vpop.f32.mrb[0].mxu0
        %v3742 = vadd.f32 0.0, %v3741
        %v3743 = vpop.f32.mrb[0].mxu0
        %3744 = vmatprep.mubr.bf16.mxu0 0
        %3745 = vmatmul.mubr.bf16.gmra.mrb[0].mxu0 %v3684
        %v3746 = vpop.f32.mrb[0].mxu0
        %v3747 = vadd.f32 0.0, %v3746
        %v3748 = vpop.f32.mrb[0].mxu0
        %v3749 = vpop.f32.mrb[0].mxu0
        %v3750 = vadd.f32 0.0, %v3749
        %v3751 = vpop.f32.mrb[0].mxu0
        %3752 = vmatprep.mubr.bf16.mxu0 0
        %3753 = vmatmul.mubr.bf16.gmra.mrb[0].mxu0 %v3687
        %v3754 = vpop.f32.mrb[0].mxu0
        %v3755 = vadd.f32 0.0, %v3754
        %v3756 = vpop.f32.mrb[0].mxu0
        %v3757 = vpop.f32.mrb[0].mxu0
        %v3758 = vadd.f32 0.0, %v3757
        %v3759 = vpop.f32.mrb[0].mxu0
        %3760 = vmatprep.mubr.bf16.mxu0 0
        %3761 = vmatmul.mubr.bf16.gmra.mrb[0].mxu0 %v3690
        %v3762 = vpop.f32.mrb[0].mxu0
        %v3763 = vadd.f32 0.0, %v3762
        %v3764 = vpop.f32.mrb[0].mxu0
        %v3765 = vpop.f32.mrb[0].mxu0
        %v3766 = vadd.f32 0.0, %v3765
        %v3767 = vpop.f32.mrb[0].mxu0
        %3768 = vmatprep.mubr.bf16.mxu0 0
        %3769 = vmatmul.mubr.bf16.gmra.mrb[0].mxu0 %v3693
        %v3770 = vpop.f32.mrb[0].mxu0
        %v3771 = vadd.f32 0.0, %v3770
        %v3772 = vpop.f32.mrb[0].mxu0
        %v3773 = vpop.f32.mrb[0].mxu0
        %v3774 = vadd.f32 0.0, %v3773
        %v3775 = vpop.f32.mrb[0].mxu0
        %3776 = vmatprep.mubr.bf16.mxu0 0
        %3777 = vmatmul.mubr.bf16.gmra.mrb[0].mxu0 %v3696
        %v3778 = vpop.f32.mrb[0].mxu0
        %v3779 = vadd.f32 0.0, %v3778
        %v3780 = vpop.f32.mrb[0].mxu0
        %v3781 = vpop.f32.mrb[0].mxu0
        %v3782 = vadd.f32 0.0, %v3781
        %v3783 = vpop.f32.mrb[0].mxu0
        %3784 = vmatprep.mubr.bf16.mxu0 0
        %3785 = vmatmul.mubr.bf16.gmra.mrb[0].mxu0 %v3699
        %v3786 = vpop.f32.mrb[0].mxu0
        %v3787 = vadd.f32 0.0, %v3786
        %v3788 = vpop.f32.mrb[0].mxu0
        %v3789 = vpop.f32.mrb[0].mxu0
        %v3790 = vadd.f32 0.0, %v3789
        %v3791 = vpop.f32.mrb[0].mxu0
        %3792 = vmatprep.mubr.bf16.mxu0 0
        %3793 = vmatmul.mubr.bf16.gmra.mrb[0].mxu0 %v3702
        %v3794 = vpop.f32.mrb[0].mxu0
        %v3795 = vadd.f32 0.0, %v3794
        %v3796 = vpop.f32.mrb[0].mxu0
        %v3797 = vpop.f32.mrb[0].mxu0
        %v3798 = vadd.f32 0.0, %v3797
        %v3799 = vpop.f32.mrb[0].mxu0
        %3800 = vdwg.mxu0
        %v3801 = vadd.f32 %v3656, %v3739
        %v3802 = vadd.f32 %v3657, %v3742
        %v3803 = vadd.f32 %v3658, %v3747
        %v3804 = vadd.f32 %v3659, %v3750
        %v3805 = vadd.f32 %v3660, %v3755
        %v3806 = vadd.f32 %v3661, %v3758
        %v3807 = vadd.f32 %v3662, %v3763
        %v3808 = vadd.f32 %v3663, %v3766
        %v3809 = vadd.f32 %v3664, %v3771
        %v3810 = vadd.f32 %v3665, %v3774
        %v3811 = vadd.f32 %v3666, %v3779
        %v3812 = vadd.f32 %v3667, %v3782
        %v3813 = vadd.f32 %v3668, %v3787
        %v3814 = vadd.f32 %v3669, %v3790
        %v3815 = vadd.f32 %v3670, %v3795
        %v3816 = vadd.f32 %v3671, %v3798
        %v3817 = vld [vmem:[%s2 + $0x80] sm:$0xf]
        %v3818 = vld [vmem:[%s2 + $0x84] sm:$0xf]
        %v3821 = vunpack.c.l.b16 %v3817
        %v3822 = vunpack.c.l.b16 %v3818
        %v3823 = vpack.c.b16 %v3822, %v3821
        %v3826 = vsel %vm3389, %v3165, 0
        %v3829 = vsel %vm3389, %v3166, 0
        %v3832 = vsel %vm3389, %v3167, 0
        %v3835 = vsel %vm3389, %v3168, 0
        %v3838 = vsel %vm3389, %v3169, 0
        %v3841 = vsel %vm3389, %v3170, 0
        %v3844 = vsel %vm3389, %v3171, 0
        %v3847 = vsel %vm3389, %v3172, 0
        %3849 = vmatprep.subr.bf16.mxu0 0
        %3850 = vmatpush1.bf16.msra.mxu0 %v3823
        %3851 = vmatprep.subr.bf16.mxu0 0
        %3852 = vmatpush1.bf16.msra.mxu0 0
        %3853 = vmatprep.subr.bf16.mxu0 0
        %3854 = vmatpush1.bf16.msra.mxu0 0
        %3855 = vmatprep.subr.bf16.mxu0 0
        %3856 = vmatpush1.bf16.msra.mxu0 0
        %3857 = vmatprep.subr.bf16.mxu0 0
        %3858 = vmatpush1.bf16.msra.mxu0 0
        %3859 = vmatprep.subr.bf16.mxu0 0
        %3860 = vmatpush1.bf16.msra.mxu0 0
        %3861 = vmatprep.subr.bf16.mxu0 0
        %3862 = vmatpush1.bf16.msra.mxu0 0
        %3863 = vmatprep.subr.bf16.mxu0 0
        %3864 = vmatpush1.bf16.msra.mxu0 0
        %3865 = vmatprep.subr.bf16.mxu0 0
        %3866 = vmatpush1.bf16.msra.mxu0 0
        %3867 = vmatprep.subr.bf16.mxu0 0
        %3868 = vmatpush1.bf16.msra.mxu0 0
        %3869 = vmatprep.subr.bf16.mxu0 0
        %3870 = vmatpush1.bf16.msra.mxu0 0
        %3871 = vmatprep.subr.bf16.mxu0 0
        %3872 = vmatpush1.bf16.msra.mxu0 0
        %3873 = vmatprep.subr.bf16.mxu0 0
        %3874 = vmatpush1.bf16.msra.mxu0 0
        %3875 = vmatprep.subr.bf16.mxu0 0
        %3876 = vmatpush1.bf16.msra.mxu0 0
        %3877 = vmatprep.subr.bf16.mxu0 0
        %3878 = vmatpush1.bf16.msra.mxu0 0
        %3879 = vmatprep.subr.bf16.mxu0 0
        %3880 = vmatpush1.bf16.msra.mxu0 0
        %3881 = vmatprep.mubr.bf16.mxu0 0
        %3882 = vmatmul.mubr.bf16.gmra.mrb[0].mxu0 %v3826
        %v3883 = vpop.f32.mrb[0].mxu0
        %v3884 = vadd.f32 0.0, %v3883
        %v3885 = vpop.f32.mrb[0].mxu0
        %v3886 = vpop.f32.mrb[0].mxu0
        %v3887 = vadd.f32 0.0, %v3886
        %v3888 = vpop.f32.mrb[0].mxu0
        %3889 = vmatprep.mubr.bf16.mxu0 0
        %3890 = vmatmul.mubr.bf16.gmra.mrb[0].mxu0 %v3829
        %v3891 = vpop.f32.mrb[0].mxu0
        %v3892 = vadd.f32 0.0, %v3891
        %v3893 = vpop.f32.mrb[0].mxu0
        %v3894 = vpop.f32.mrb[0].mxu0
        %v3895 = vadd.f32 0.0, %v3894
        %v3896 = vpop.f32.mrb[0].mxu0
        %3897 = vmatprep.mubr.bf16.mxu0 0
        %3898 = vmatmul.mubr.bf16.gmra.mrb[0].mxu0 %v3832
        %v3899 = vpop.f32.mrb[0].mxu0
        %v3900 = vadd.f32 0.0, %v3899
        %v3901 = vpop.f32.mrb[0].mxu0
        %v3902 = vpop.f32.mrb[0].mxu0
        %v3903 = vadd.f32 0.0, %v3902
        %v3904 = vpop.f32.mrb[0].mxu0
        %3905 = vmatprep.mubr.bf16.mxu0 0
        %3906 = vmatmul.mubr.bf16.gmra.mrb[0].mxu0 %v3835
        %v3907 = vpop.f32.mrb[0].mxu0
        %v3908 = vadd.f32 0.0, %v3907
        %v3909 = vpop.f32.mrb[0].mxu0
        %v3910 = vpop.f32.mrb[0].mxu0
        %v3911 = vadd.f32 0.0, %v3910
        %v3912 = vpop.f32.mrb[0].mxu0
        %3913 = vmatprep.mubr.bf16.mxu0 0
        %3914 = vmatmul.mubr.bf16.gmra.mrb[0].mxu0 %v3838
        %v3915 = vpop.f32.mrb[0].mxu0
        %v3916 = vadd.f32 0.0, %v3915
        %v3917 = vpop.f32.mrb[0].mxu0
        %v3918 = vpop.f32.mrb[0].mxu0
        %v3919 = vadd.f32 0.0, %v3918
        %v3920 = vpop.f32.mrb[0].mxu0
        %3921 = vmatprep.mubr.bf16.mxu0 0
        %3922 = vmatmul.mubr.bf16.gmra.mrb[0].mxu0 %v3841
        %v3923 = vpop.f32.mrb[0].mxu0
        %v3924 = vadd.f32 0.0, %v3923
        %v3925 = vpop.f32.mrb[0].mxu0
        %v3926 = vpop.f32.mrb[0].mxu0
        %v3927 = vadd.f32 0.0, %v3926
        %v3928 = vpop.f32.mrb[0].mxu0
        %3929 = vmatprep.mubr.bf16.mxu0 0
        %3930 = vmatmul.mubr.bf16.gmra.mrb[0].mxu0 %v3844
        %v3931 = vpop.f32.mrb[0].mxu0
        %v3932 = vadd.f32 0.0, %v3931
        %v3933 = vpop.f32.mrb[0].mxu0
        %v3934 = vpop.f32.mrb[0].mxu0
        %v3935 = vadd.f32 0.0, %v3934
        %v3936 = vpop.f32.mrb[0].mxu0
        %3937 = vmatprep.mubr.bf16.mxu0 0
        %3938 = vmatmul.mubr.bf16.gmra.mrb[0].mxu0 %v3847
        %v3939 = vpop.f32.mrb[0].mxu0
        %v3940 = vadd.f32 0.0, %v3939
        %v3941 = vpop.f32.mrb[0].mxu0
        %v3942 = vpop.f32.mrb[0].mxu0
        %v3943 = vadd.f32 0.0, %v3942
        %v3944 = vpop.f32.mrb[0].mxu0
        %3945 = vdwg.mxu0
        %v3946 = vadd.f32 %v3801, %v3884
        %v3947 = vadd.f32 %v3802, %v3887
        %v3948 = vadd.f32 %v3803, %v3892
        %v3949 = vadd.f32 %v3804, %v3895
        %v3950 = vadd.f32 %v3805, %v3900
        %v3951 = vadd.f32 %v3806, %v3903
        %v3952 = vadd.f32 %v3807, %v3908
        %v3953 = vadd.f32 %v3808, %v3911
        %v3954 = vadd.f32 %v3809, %v3916
        %v3955 = vadd.f32 %v3810, %v3919
        %v3956 = vadd.f32 %v3811, %v3924
        %v3957 = vadd.f32 %v3812, %v3927
        %v3958 = vadd.f32 %v3813, %v3932
        %v3959 = vadd.f32 %v3814, %v3935
        %v3960 = vadd.f32 %v3815, %v3940
        %v3961 = vadd.f32 %v3816, %v3943
        %v3962 = vld [vmem:[%s2 + $0x88] sm:$0xf]
        %v3963 = vld [vmem:[%s2 + $0x8c] sm:$0xf]
        %v3966 = vunpack.c.l.b16 %v3962
        %v3967 = vunpack.c.l.b16 %v3963
        %v3968 = vpack.c.b16 %v3967, %v3966
        %v3971 = vsel %vm3389, %v3173, 0
        %v3974 = vsel %vm3389, %v3174, 0
        %v3977 = vsel %vm3389, %v3175, 0
        %v3980 = vsel %vm3389, %v3176, 0
        %v3983 = vsel %vm3389, %v3177, 0
        %v3986 = vsel %vm3389, %v3178, 0
        %v3989 = vsel %vm3389, %v3179, 0
        %v3992 = vsel %vm3389, %v3180, 0
        %3994 = vmatprep.subr.bf16.mxu0 0
        %3995 = vmatpush1.bf16.msra.mxu0 %v3968
        %3996 = vmatprep.subr.bf16.mxu0 0
        %3997 = vmatpush1.bf16.msra.mxu0 0
        %3998 = vmatprep.subr.bf16.mxu0 0
        %3999 = vmatpush1.bf16.msra.mxu0 0
        %4000 = vmatprep.subr.bf16.mxu0 0
        %4001 = vmatpush1.bf16.msra.mxu0 0
        %4002 = vmatprep.subr.bf16.mxu0 0
        %4003 = vmatpush1.bf16.msra.mxu0 0
        %4004 = vmatprep.subr.bf16.mxu0 0
        %4005 = vmatpush1.bf16.msra.mxu0 0
        %4006 = vmatprep.subr.bf16.mxu0 0
        %4007 = vmatpush1.bf16.msra.mxu0 0
        %4008 = vmatprep.subr.bf16.mxu0 0
        %4009 = vmatpush1.bf16.msra.mxu0 0
        %4010 = vmatprep.subr.bf16.mxu0 0
        %4011 = vmatpush1.bf16.msra.mxu0 0
        %4012 = vmatprep.subr.bf16.mxu0 0
        %4013 = vmatpush1.bf16.msra.mxu0 0
        %4014 = vmatprep.subr.bf16.mxu0 0
        %4015 = vmatpush1.bf16.msra.mxu0 0
        %4016 = vmatprep.subr.bf16.mxu0 0
        %4017 = vmatpush1.bf16.msra.mxu0 0
        %4018 = vmatprep.subr.bf16.mxu0 0
        %4019 = vmatpush1.bf16.msra.mxu0 0
        %4020 = vmatprep.subr.bf16.mxu0 0
        %4021 = vmatpush1.bf16.msra.mxu0 0
        %4022 = vmatprep.subr.bf16.mxu0 0
        %4023 = vmatpush1.bf16.msra.mxu0 0
        %4024 = vmatprep.subr.bf16.mxu0 0
        %4025 = vmatpush1.bf16.msra.mxu0 0
        %4026 = vmatprep.mubr.bf16.mxu0 0
        %4027 = vmatmul.mubr.bf16.gmra.mrb[0].mxu0 %v3971
        %v4028 = vpop.f32.mrb[0].mxu0
        %v4029 = vadd.f32 0.0, %v4028
        %v4030 = vpop.f32.mrb[0].mxu0
        %v4031 = vpop.f32.mrb[0].mxu0
        %v4032 = vadd.f32 0.0, %v4031
        %v4033 = vpop.f32.mrb[0].mxu0
        %4034 = vmatprep.mubr.bf16.mxu0 0
        %4035 = vmatmul.mubr.bf16.gmra.mrb[0].mxu0 %v3974
        %v4036 = vpop.f32.mrb[0].mxu0
        %v4037 = vadd.f32 0.0, %v4036
        %v4038 = vpop.f32.mrb[0].mxu0
        %v4039 = vpop.f32.mrb[0].mxu0
        %v4040 = vadd.f32 0.0, %v4039
        %v4041 = vpop.f32.mrb[0].mxu0
        %4042 = vmatprep.mubr.bf16.mxu0 0
        %4043 = vmatmul.mubr.bf16.gmra.mrb[0].mxu0 %v3977
        %v4044 = vpop.f32.mrb[0].mxu0
        %v4045 = vadd.f32 0.0, %v4044
        %v4046 = vpop.f32.mrb[0].mxu0
        %v4047 = vpop.f32.mrb[0].mxu0
        %v4048 = vadd.f32 0.0, %v4047
        %v4049 = vpop.f32.mrb[0].mxu0
        %4050 = vmatprep.mubr.bf16.mxu0 0
        %4051 = vmatmul.mubr.bf16.gmra.mrb[0].mxu0 %v3980
        %v4052 = vpop.f32.mrb[0].mxu0
        %v4053 = vadd.f32 0.0, %v4052
        %v4054 = vpop.f32.mrb[0].mxu0
        %v4055 = vpop.f32.mrb[0].mxu0
        %v4056 = vadd.f32 0.0, %v4055
        %v4057 = vpop.f32.mrb[0].mxu0
        %4058 = vmatprep.mubr.bf16.mxu0 0
        %4059 = vmatmul.mubr.bf16.gmra.mrb[0].mxu0 %v3983
        %v4060 = vpop.f32.mrb[0].mxu0
        %v4061 = vadd.f32 0.0, %v4060
        %v4062 = vpop.f32.mrb[0].mxu0
        %v4063 = vpop.f32.mrb[0].mxu0
        %v4064 = vadd.f32 0.0, %v4063
        %v4065 = vpop.f32.mrb[0].mxu0
        %4066 = vmatprep.mubr.bf16.mxu0 0
        %4067 = vmatmul.mubr.bf16.gmra.mrb[0].mxu0 %v3986
        %v4068 = vpop.f32.mrb[0].mxu0
        %v4069 = vadd.f32 0.0, %v4068
        %v4070 = vpop.f32.mrb[0].mxu0
        %v4071 = vpop.f32.mrb[0].mxu0
        %v4072 = vadd.f32 0.0, %v4071
        %v4073 = vpop.f32.mrb[0].mxu0
        %4074 = vmatprep.mubr.bf16.mxu0 0
        %4075 = vmatmul.mubr.bf16.gmra.mrb[0].mxu0 %v3989
        %v4076 = vpop.f32.mrb[0].mxu0
        %v4077 = vadd.f32 0.0, %v4076
        %v4078 = vpop.f32.mrb[0].mxu0
        %v4079 = vpop.f32.mrb[0].mxu0
        %v4080 = vadd.f32 0.0, %v4079
        %v4081 = vpop.f32.mrb[0].mxu0
        %4082 = vmatprep.mubr.bf16.mxu0 0
        %4083 = vmatmul.mubr.bf16.gmra.mrb[0].mxu0 %v3992
        %v4084 = vpop.f32.mrb[0].mxu0
        %v4085 = vadd.f32 0.0, %v4084
        %v4086 = vpop.f32.mrb[0].mxu0
        %v4087 = vpop.f32.mrb[0].mxu0
        %v4088 = vadd.f32 0.0, %v4087
        %v4089 = vpop.f32.mrb[0].mxu0
        %4090 = vdwg.mxu0
        %v4091 = vadd.f32 %v3946, %v4029
        %v4092 = vadd.f32 %v3947, %v4032
        %v4093 = vadd.f32 %v3948, %v4037
        %v4094 = vadd.f32 %v3949, %v4040
        %v4095 = vadd.f32 %v3950, %v4045
        %v4096 = vadd.f32 %v3951, %v4048
        %v4097 = vadd.f32 %v3952, %v4053
        %v4098 = vadd.f32 %v3953, %v4056
        %v4099 = vadd.f32 %v3954, %v4061
        %v4100 = vadd.f32 %v3955, %v4064
        %v4101 = vadd.f32 %v3956, %v4069
        %v4102 = vadd.f32 %v3957, %v4072
        %v4103 = vadd.f32 %v3958, %v4077
        %v4104 = vadd.f32 %v3959, %v4080
        %v4105 = vadd.f32 %v3960, %v4085
        %v4106 = vadd.f32 %v3961, %v4088
        %v4107 = vld [vmem:[%s2 + $0x90] sm:$0xf]
        %v4108 = vld [vmem:[%s2 + $0x94] sm:$0xf]
        %v4111 = vunpack.c.l.b16 %v4107
        %v4112 = vunpack.c.l.b16 %v4108
        %v4113 = vpack.c.b16 %v4112, %v4111
        %v4116 = vsel %vm3389, %v3181, 0
        %v4119 = vsel %vm3389, %v3182, 0
        %v4122 = vsel %vm3389, %v3183, 0
        %v4125 = vsel %vm3389, %v3184, 0
        %v4128 = vsel %vm3389, %v3185, 0
        %v4131 = vsel %vm3389, %v3186, 0
        %v4134 = vsel %vm3389, %v3187, 0
        %v4137 = vsel %vm3389, %v3188, 0
        %4139 = vmatprep.subr.bf16.mxu0 0
        %4140 = vmatpush1.bf16.msra.mxu0 %v4113
        %4141 = vmatprep.subr.bf16.mxu0 0
        %4142 = vmatpush1.bf16.msra.mxu0 0
        %4143 = vmatprep.subr.bf16.mxu0 0
        %4144 = vmatpush1.bf16.msra.mxu0 0
        %4145 = vmatprep.subr.bf16.mxu0 0
        %4146 = vmatpush1.bf16.msra.mxu0 0
        %4147 = vmatprep.subr.bf16.mxu0 0
        %4148 = vmatpush1.bf16.msra.mxu0 0
        %4149 = vmatprep.subr.bf16.mxu0 0
        %4150 = vmatpush1.bf16.msra.mxu0 0
        %4151 = vmatprep.subr.bf16.mxu0 0
        %4152 = vmatpush1.bf16.msra.mxu0 0
        %4153 = vmatprep.subr.bf16.mxu0 0
        %4154 = vmatpush1.bf16.msra.mxu0 0
        %4155 = vmatprep.subr.bf16.mxu0 0
        %4156 = vmatpush1.bf16.msra.mxu0 0
        %4157 = vmatprep.subr.bf16.mxu0 0
        %4158 = vmatpush1.bf16.msra.mxu0 0
        %4159 = vmatprep.subr.bf16.mxu0 0
        %4160 = vmatpush1.bf16.msra.mxu0 0
        %4161 = vmatprep.subr.bf16.mxu0 0
        %4162 = vmatpush1.bf16.msra.mxu0 0
        %4163 = vmatprep.subr.bf16.mxu0 0
        %4164 = vmatpush1.bf16.msra.mxu0 0
        %4165 = vmatprep.subr.bf16.mxu0 0
        %4166 = vmatpush1.bf16.msra.mxu0 0
        %4167 = vmatprep.subr.bf16.mxu0 0
        %4168 = vmatpush1.bf16.msra.mxu0 0
        %4169 = vmatprep.subr.bf16.mxu0 0
        %4170 = vmatpush1.bf16.msra.mxu0 0
        %4171 = vmatprep.mubr.bf16.mxu0 0
        %4172 = vmatmul.mubr.bf16.gmra.mrb[0].mxu0 %v4116
        %v4173 = vpop.f32.mrb[0].mxu0
        %v4174 = vadd.f32 0.0, %v4173
        %v4175 = vpop.f32.mrb[0].mxu0
        %v4176 = vpop.f32.mrb[0].mxu0
        %v4177 = vadd.f32 0.0, %v4176
        %v4178 = vpop.f32.mrb[0].mxu0
        %4179 = vmatprep.mubr.bf16.mxu0 0
        %4180 = vmatmul.mubr.bf16.gmra.mrb[0].mxu0 %v4119
        %v4181 = vpop.f32.mrb[0].mxu0
        %v4182 = vadd.f32 0.0, %v4181
        %v4183 = vpop.f32.mrb[0].mxu0
        %v4184 = vpop.f32.mrb[0].mxu0
        %v4185 = vadd.f32 0.0, %v4184
        %v4186 = vpop.f32.mrb[0].mxu0
        %4187 = vmatprep.mubr.bf16.mxu0 0
        %4188 = vmatmul.mubr.bf16.gmra.mrb[0].mxu0 %v4122
        %v4189 = vpop.f32.mrb[0].mxu0
        %v4190 = vadd.f32 0.0, %v4189
        %v4191 = vpop.f32.mrb[0].mxu0
        %v4192 = vpop.f32.mrb[0].mxu0
        %v4193 = vadd.f32 0.0, %v4192
        %v4194 = vpop.f32.mrb[0].mxu0
        %4195 = vmatprep.mubr.bf16.mxu0 0
        %4196 = vmatmul.mubr.bf16.gmra.mrb[0].mxu0 %v4125
        %v4197 = vpop.f32.mrb[0].mxu0
        %v4198 = vadd.f32 0.0, %v4197
        %v4199 = vpop.f32.mrb[0].mxu0
        %v4200 = vpop.f32.mrb[0].mxu0
        %v4201 = vadd.f32 0.0, %v4200
        %v4202 = vpop.f32.mrb[0].mxu0
        %4203 = vmatprep.mubr.bf16.mxu0 0
        %4204 = vmatmul.mubr.bf16.gmra.mrb[0].mxu0 %v4128
        %v4205 = vpop.f32.mrb[0].mxu0
        %v4206 = vadd.f32 0.0, %v4205
        %v4207 = vpop.f32.mrb[0].mxu0
        %v4208 = vpop.f32.mrb[0].mxu0
        %v4209 = vadd.f32 0.0, %v4208
        %v4210 = vpop.f32.mrb[0].mxu0
        %4211 = vmatprep.mubr.bf16.mxu0 0
        %4212 = vmatmul.mubr.bf16.gmra.mrb[0].mxu0 %v4131
        %v4213 = vpop.f32.mrb[0].mxu0
        %v4214 = vadd.f32 0.0, %v4213
        %v4215 = vpop.f32.mrb[0].mxu0
        %v4216 = vpop.f32.mrb[0].mxu0
        %v4217 = vadd.f32 0.0, %v4216
        %v4218 = vpop.f32.mrb[0].mxu0
        %4219 = vmatprep.mubr.bf16.mxu0 0
        %4220 = vmatmul.mubr.bf16.gmra.mrb[0].mxu0 %v4134
        %v4221 = vpop.f32.mrb[0].mxu0
        %v4222 = vadd.f32 0.0, %v4221
        %v4223 = vpop.f32.mrb[0].mxu0
        %v4224 = vpop.f32.mrb[0].mxu0
        %v4225 = vadd.f32 0.0, %v4224
        %v4226 = vpop.f32.mrb[0].mxu0
        %4227 = vmatprep.mubr.bf16.mxu0 0
        %4228 = vmatmul.mubr.bf16.gmra.mrb[0].mxu0 %v4137
        %v4229 = vpop.f32.mrb[0].mxu0
        %v4230 = vadd.f32 0.0, %v4229
        %v4231 = vpop.f32.mrb[0].mxu0
        %v4232 = vpop.f32.mrb[0].mxu0
        %v4233 = vadd.f32 0.0, %v4232
        %v4234 = vpop.f32.mrb[0].mxu0
        %4235 = vdwg.mxu0
        %v4236 = vadd.f32 %v4091, %v4174
        %v4237 = vadd.f32 %v4092, %v4177
        %v4238 = vadd.f32 %v4093, %v4182
        %v4239 = vadd.f32 %v4094, %v4185
        %v4240 = vadd.f32 %v4095, %v4190
        %v4241 = vadd.f32 %v4096, %v4193
        %v4242 = vadd.f32 %v4097, %v4198
        %v4243 = vadd.f32 %v4098, %v4201
        %v4244 = vadd.f32 %v4099, %v4206
        %v4245 = vadd.f32 %v4100, %v4209
        %v4246 = vadd.f32 %v4101, %v4214
        %v4247 = vadd.f32 %v4102, %v4217
        %v4248 = vadd.f32 %v4103, %v4222
        %v4249 = vadd.f32 %v4104, %v4225
        %v4250 = vadd.f32 %v4105, %v4230
        %v4251 = vadd.f32 %v4106, %v4233
        %v4252 = vtanh.pop %v4236
        %v4253 = vtanh.pop %v4237
        %v4254 = vtanh.pop %v4238
        %v4255 = vtanh.pop %v4239
        %v4256 = vtanh.pop %v4240
        %v4257 = vtanh.pop %v4241
        %v4258 = vtanh.pop %v4242
        %v4259 = vtanh.pop %v4243
        %v4260 = vtanh.pop %v4244
        %v4261 = vtanh.pop %v4245
        %v4262 = vtanh.pop %v4246
        %v4263 = vtanh.pop %v4247
        %v4264 = vtanh.pop %v4248
        %v4265 = vtanh.pop %v4249
        %v4266 = vtanh.pop %v4250
        %v4267 = vtanh.pop %v4251
        %v4268 = vpack.c.bf16 %v4253, %v4252
        %v4269 = vpack.c.bf16 %v4255, %v4254
        %v4270 = vpack.c.bf16 %v4257, %v4256
        %v4271 = vpack.c.bf16 %v4259, %v4258
        %v4272 = vpack.c.bf16 %v4261, %v4260
        %v4273 = vpack.c.bf16 %v4263, %v4262
        %v4274 = vpack.c.bf16 %v4265, %v4264
        %v4275 = vpack.c.bf16 %v4267, %v4266
        %v4276 = vld [vmem:[%s2 + $0xa0] sm:$0xf]
        %v4277 = vld [vmem:[%s2 + $0xa4] sm:$0xf]
        %v4278 = vld [vmem:[%s2 + $0xa8] sm:$0xf]
        %v4279 = vld [vmem:[%s2 + $0xac] sm:$0xf]
        %v4280 = vld [vmem:[%s2 + $0xb0] sm:$0xf]
        %v4281 = vld [vmem:[%s2 + $0xb4] sm:$0xf]
        %v4282 = vld [vmem:[%s2 + $0xb8] sm:$0x1]
        %v4283 = vld [vmem:[%s2 + $0xbc] sm:$0x1]
        %v4284 = vunpack.c.l.bf16 %v4283
        %v4285 = vlaneseq
        %v4286 = vshrl.u32 %v4285, 7
        %v4287 = vsub.s32 0, %v4286
        %v4288 = vrot.slane %v4284, %v4287
        %v4296 = vunpack.c.l.b16 %v4276
        %v4297 = vunpack.c.l.b16 %v4277
        %v4298 = vunpack.c.l.b16 %v4278
        %v4299 = vunpack.c.l.b16 %v4279
        %v4300 = vunpack.c.l.b16 %v4280
        %v4301 = vunpack.c.l.b16 %v4281
        %v4302 = vunpack.c.l.b16 %v4282
        %v4303 = vpack.c.b16 %v4297, %v4296
        %v4304 = vpack.c.b16 %v4299, %v4298
        %v4305 = vpack.c.b16 %v4301, %v4300
        %v4306 = vpack.c.b16 %v4302, %v4302
        %v4311 = vsel %vm1756, %v4268, 0
        %v4314 = vsel %vm1756, %v4269, 0
        %v4317 = vsel %vm1756, %v4270, 0
        %v4320 = vsel %vm1756, %v4271, 0
        %v4323 = vsel %vm1756, %v4272, 0
        %v4326 = vsel %vm1756, %v4273, 0
        %v4329 = vsel %vm1756, %v4274, 0
        %v4332 = vsel %vm1756, %v4275, 0
        %v4335 = vsel %vm1901, %v4306, 0
        %4337 = vmatprep.subr.bf16.mxu0 0
        %4338 = vmatpush1.bf16.msra.mxu0 %v4303
        %4339 = vmatprep.subr.bf16.mxu0 0
        %4340 = vmatpush1.bf16.msra.mxu0 %v4304
        %4341 = vmatprep.subr.bf16.mxu0 0
        %4342 = vmatpush1.bf16.msra.mxu0 %v4305
        %4343 = vmatprep.subr.bf16.mxu0 0
        %4344 = vmatpush1.bf16.msra.mxu0 %v4335
        %4345 = vmatprep.subr.bf16.mxu0 0
        %4346 = vmatpush1.bf16.msra.mxu0 0
        %4347 = vmatprep.subr.bf16.mxu0 0
        %4348 = vmatpush1.bf16.msra.mxu0 0
        %4349 = vmatprep.subr.bf16.mxu0 0
        %4350 = vmatpush1.bf16.msra.mxu0 0
        %4351 = vmatprep.subr.bf16.mxu0 0
        %4352 = vmatpush1.bf16.msra.mxu0 0
        %4353 = vmatprep.subr.bf16.mxu0 0
        %4354 = vmatpush1.bf16.msra.mxu0 0
        %4355 = vmatprep.subr.bf16.mxu0 0
        %4356 = vmatpush1.bf16.msra.mxu0 0
        %4357 = vmatprep.subr.bf16.mxu0 0
        %4358 = vmatpush1.bf16.msra.mxu0 0
        %4359 = vmatprep.subr.bf16.mxu0 0
        %4360 = vmatpush1.bf16.msra.mxu0 0
        %4361 = vmatprep.subr.bf16.mxu0 0
        %4362 = vmatpush1.bf16.msra.mxu0 0
        %4363 = vmatprep.subr.bf16.mxu0 0
        %4364 = vmatpush1.bf16.msra.mxu0 0
        %4365 = vmatprep.subr.bf16.mxu0 0
        %4366 = vmatpush1.bf16.msra.mxu0 0
        %4367 = vmatprep.subr.bf16.mxu0 0
        %4368 = vmatpush1.bf16.msra.mxu0 0
        %4369 = vmatprep.mubr.bf16.mxu0 0
        %4370 = vmatmul.mubr.bf16.gmra.mrb[0].mxu0 %v4311
        %v4371 = vpop.f32.mrb[0].mxu0
        %v4372 = vadd.f32 %v4288, %v4371
        %v4373 = vpop.f32.mrb[0].mxu0
        %v4374 = vpop.f32.mrb[0].mxu0
        %v4375 = vadd.f32 %v4288, %v4374
        %v4376 = vpop.f32.mrb[0].mxu0
        %4377 = vmatprep.mubr.bf16.mxu0 0
        %4378 = vmatmul.mubr.bf16.gmra.mrb[0].mxu0 %v4314
        %v4379 = vpop.f32.mrb[0].mxu0
        %v4380 = vadd.f32 %v4288, %v4379
        %v4381 = vpop.f32.mrb[0].mxu0
        %v4382 = vpop.f32.mrb[0].mxu0
        %v4383 = vadd.f32 %v4288, %v4382
        %v4384 = vpop.f32.mrb[0].mxu0
        %4385 = vmatprep.mubr.bf16.mxu0 0
        %4386 = vmatmul.mubr.bf16.gmra.mrb[0].mxu0 %v4317
        %v4387 = vpop.f32.mrb[0].mxu0
        %v4388 = vadd.f32 %v4288, %v4387
        %v4389 = vpop.f32.mrb[0].mxu0
        %v4390 = vpop.f32.mrb[0].mxu0
        %v4391 = vadd.f32 %v4288, %v4390
        %v4392 = vpop.f32.mrb[0].mxu0
        %4393 = vmatprep.mubr.bf16.mxu0 0
        %4394 = vmatmul.mubr.bf16.gmra.mrb[0].mxu0 %v4320
        %v4395 = vpop.f32.mrb[0].mxu0
        %v4396 = vadd.f32 %v4288, %v4395
        %v4397 = vpop.f32.mrb[0].mxu0
        %v4398 = vpop.f32.mrb[0].mxu0
        %v4399 = vadd.f32 %v4288, %v4398
        %v4400 = vpop.f32.mrb[0].mxu0
        %4401 = vmatprep.mubr.bf16.mxu0 0
        %4402 = vmatmul.mubr.bf16.gmra.mrb[0].mxu0 %v4323
        %v4403 = vpop.f32.mrb[0].mxu0
        %v4404 = vadd.f32 %v4288, %v4403
        %v4405 = vpop.f32.mrb[0].mxu0
        %v4406 = vpop.f32.mrb[0].mxu0
        %v4407 = vadd.f32 %v4288, %v4406
        %v4408 = vpop.f32.mrb[0].mxu0
        %4409 = vmatprep.mubr.bf16.mxu0 0
        %4410 = vmatmul.mubr.bf16.gmra.mrb[0].mxu0 %v4326
        %v4411 = vpop.f32.mrb[0].mxu0
        %v4412 = vadd.f32 %v4288, %v4411
        %v4413 = vpop.f32.mrb[0].mxu0
        %v4414 = vpop.f32.mrb[0].mxu0
        %v4415 = vadd.f32 %v4288, %v4414
        %v4416 = vpop.f32.mrb[0].mxu0
        %4417 = vmatprep.mubr.bf16.mxu0 0
        %4418 = vmatmul.mubr.bf16.gmra.mrb[0].mxu0 %v4329
        %v4419 = vpop.f32.mrb[0].mxu0
        %v4420 = vadd.f32 %v4288, %v4419
        %v4421 = vpop.f32.mrb[0].mxu0
        %v4422 = vpop.f32.mrb[0].mxu0
        %v4423 = vadd.f32 %v4288, %v4422
        %v4424 = vpop.f32.mrb[0].mxu0
        %4425 = vmatprep.mubr.bf16.mxu0 0
        %4426 = vmatmul.mubr.bf16.gmra.mrb[0].mxu0 %v4332
        %v4427 = vpop.f32.mrb[0].mxu0
        %v4428 = vadd.f32 %v4288, %v4427
        %v4429 = vpop.f32.mrb[0].mxu0
        %v4430 = vpop.f32.mrb[0].mxu0
        %v4431 = vadd.f32 %v4288, %v4430
        %v4432 = vpop.f32.mrb[0].mxu0
        %4433 = vdwg.mxu0
        %v4434 = vtanh.pop %v4372
        %v4435 = vtanh.pop %v4375
        %v4436 = vtanh.pop %v4380
        %v4437 = vtanh.pop %v4383
        %v4438 = vtanh.pop %v4388
        %v4439 = vtanh.pop %v4391
        %v4440 = vtanh.pop %v4396
        %v4441 = vtanh.pop %v4399
        %v4442 = vtanh.pop %v4404
        %v4443 = vtanh.pop %v4407
        %v4444 = vtanh.pop %v4412
        %v4445 = vtanh.pop %v4415
        %v4446 = vtanh.pop %v4420
        %v4447 = vtanh.pop %v4423
        %v4448 = vtanh.pop %v4428
        %v4449 = vtanh.pop %v4431
        %v4450 = vpack.c.bf16 %v4435, %v4434
        %v4451 = vpack.c.bf16 %v4437, %v4436
        %v4452 = vpack.c.bf16 %v4439, %v4438
        %v4453 = vpack.c.bf16 %v4441, %v4440
        %v4454 = vpack.c.bf16 %v4443, %v4442
        %v4455 = vpack.c.bf16 %v4445, %v4444
        %v4456 = vpack.c.bf16 %v4447, %v4446
        %v4457 = vpack.c.bf16 %v4449, %v4448
        %v4458 = vld [vmem:[%s2 + $0xc0] sm:$0xf]
        %v4459 = vld [vmem:[%s2 + $0xc4] sm:$0xf]
        %v4460 = vld [vmem:[%s2 + $0xc8] sm:$0xf]
        %v4461 = vld [vmem:[%s2 + $0xcc] sm:$0x1]
        %v4462 = vld [vmem:[%s2 + $0xd0] sm:$0x1]
        %v4463 = vunpack.c.l.bf16 %v4462
        %v4464 = vlaneseq
        %v4465 = vshrl.u32 %v4464, 7
        %v4466 = vsub.s32 0, %v4465
        %v4467 = vrot.slane %v4463, %v4466
        %v4472 = vunpack.c.l.b16 %v4458
        %v4473 = vunpack.c.l.b16 %v4459
        %v4474 = vunpack.c.l.b16 %v4460
        %v4475 = vunpack.c.l.b16 %v4461
        %v4476 = vpack.c.b16 %v4473, %v4472
        %v4477 = vpack.c.b16 %v4475, %v4474
        %vm4479 = vcmask 203776
        %v4481 = vsel %vm4479, %v4450, 0
        %v4484 = vsel %vm4479, %v4451, 0
        %v4487 = vsel %vm4479, %v4452, 0
        %v4490 = vsel %vm4479, %v4453, 0
        %v4493 = vsel %vm4479, %v4454, 0
        %v4496 = vsel %vm4479, %v4455, 0
        %v4499 = vsel %vm4479, %v4456, 0
        %v4502 = vsel %vm4479, %v4457, 0
        %vm4504 = vcmask 1043456
        %v4505 = vsel %vm4504, 4294967295, 65535
        %v4506 = vsel %vm1165, %v4505, 0
        %v4508 = vand.u32 %v4477, %v4506
        %4510 = vmatprep.subr.bf16.mxu0 0
        %4511 = vmatpush1.bf16.msra.mxu0 %v4476
        %4512 = vmatprep.subr.bf16.mxu0 0
        %4513 = vmatpush1.bf16.msra.mxu0 %v4508
        %4514 = vmatprep.subr.bf16.mxu0 0
        %4515 = vmatpush1.bf16.msra.mxu0 0
        %4516 = vmatprep.subr.bf16.mxu0 0
        %4517 = vmatpush1.bf16.msra.mxu0 0
        %4518 = vmatprep.subr.bf16.mxu0 0
        %4519 = vmatpush1.bf16.msra.mxu0 0
        %4520 = vmatprep.subr.bf16.mxu0 0
        %4521 = vmatpush1.bf16.msra.mxu0 0
        %4522 = vmatprep.subr.bf16.mxu0 0
        %4523 = vmatpush1.bf16.msra.mxu0 0
        %4524 = vmatprep.subr.bf16.mxu0 0
        %4525 = vmatpush1.bf16.msra.mxu0 0
        %4526 = vmatprep.subr.bf16.mxu0 0
        %4527 = vmatpush1.bf16.msra.mxu0 0
        %4528 = vmatprep.subr.bf16.mxu0 0
        %4529 = vmatpush1.bf16.msra.mxu0 0
        %4530 = vmatprep.subr.bf16.mxu0 0
        %4531 = vmatpush1.bf16.msra.mxu0 0
        %4532 = vmatprep.subr.bf16.mxu0 0
        %4533 = vmatpush1.bf16.msra.mxu0 0
        %4534 = vmatprep.subr.bf16.mxu0 0
        %4535 = vmatpush1.bf16.msra.mxu0 0
        %4536 = vmatprep.subr.bf16.mxu0 0
        %4537 = vmatpush1.bf16.msra.mxu0 0
        %4538 = vmatprep.subr.bf16.mxu0 0
        %4539 = vmatpush1.bf16.msra.mxu0 0
        %4540 = vmatprep.subr.bf16.mxu0 0
        %4541 = vmatpush1.bf16.msra.mxu0 0
        %4542 = vmatprep.mubr.bf16.mxu0 0
        %4543 = vmatmul.mubr.bf16.gmra.mrb[0].mxu0 %v4481
        %v4544 = vpop.f32.mrb[0].mxu0
        %v4545 = vadd.f32 %v4467, %v4544
        %v4546 = vpop.f32.mrb[0].mxu0
        %v4547 = vpop.f32.mrb[0].mxu0
        %v4548 = vadd.f32 %v4467, %v4547
        %v4549 = vpop.f32.mrb[0].mxu0
        %4550 = vmatprep.mubr.bf16.mxu0 0
        %4551 = vmatmul.mubr.bf16.gmra.mrb[0].mxu0 %v4484
        %v4552 = vpop.f32.mrb[0].mxu0
        %v4553 = vadd.f32 %v4467, %v4552
        %v4554 = vpop.f32.mrb[0].mxu0
        %v4555 = vpop.f32.mrb[0].mxu0
        %v4556 = vadd.f32 %v4467, %v4555
        %v4557 = vpop.f32.mrb[0].mxu0
        %4558 = vmatprep.mubr.bf16.mxu0 0
        %4559 = vmatmul.mubr.bf16.gmra.mrb[0].mxu0 %v4487
        %v4560 = vpop.f32.mrb[0].mxu0
        %v4561 = vadd.f32 %v4467, %v4560
        %v4562 = vpop.f32.mrb[0].mxu0
        %v4563 = vpop.f32.mrb[0].mxu0
        %v4564 = vadd.f32 %v4467, %v4563
        %v4565 = vpop.f32.mrb[0].mxu0
        %4566 = vmatprep.mubr.bf16.mxu0 0
        %4567 = vmatmul.mubr.bf16.gmra.mrb[0].mxu0 %v4490
        %v4568 = vpop.f32.mrb[0].mxu0
        %v4569 = vadd.f32 %v4467, %v4568
        %v4570 = vpop.f32.mrb[0].mxu0
        %v4571 = vpop.f32.mrb[0].mxu0
        %v4572 = vadd.f32 %v4467, %v4571
        %v4573 = vpop.f32.mrb[0].mxu0
        %4574 = vmatprep.mubr.bf16.mxu0 0
        %4575 = vmatmul.mubr.bf16.gmra.mrb[0].mxu0 %v4493
        %v4576 = vpop.f32.mrb[0].mxu0
        %v4577 = vadd.f32 %v4467, %v4576
        %v4578 = vpop.f32.mrb[0].mxu0
        %v4579 = vpop.f32.mrb[0].mxu0
        %v4580 = vadd.f32 %v4467, %v4579
        %v4581 = vpop.f32.mrb[0].mxu0
        %4582 = vmatprep.mubr.bf16.mxu0 0
        %4583 = vmatmul.mubr.bf16.gmra.mrb[0].mxu0 %v4496
        %v4584 = vpop.f32.mrb[0].mxu0
        %v4585 = vadd.f32 %v4467, %v4584
        %v4586 = vpop.f32.mrb[0].mxu0
        %v4587 = vpop.f32.mrb[0].mxu0
        %v4588 = vadd.f32 %v4467, %v4587
        %v4589 = vpop.f32.mrb[0].mxu0
        %4590 = vmatprep.mubr.bf16.mxu0 0
        %4591 = vmatmul.mubr.bf16.gmra.mrb[0].mxu0 %v4499
        %v4592 = vpop.f32.mrb[0].mxu0
        %v4593 = vadd.f32 %v4467, %v4592
        %v4594 = vpop.f32.mrb[0].mxu0
        %v4595 = vpop.f32.mrb[0].mxu0
        %v4596 = vadd.f32 %v4467, %v4595
        %v4597 = vpop.f32.mrb[0].mxu0
        %4598 = vmatprep.mubr.bf16.mxu0 0
        %4599 = vmatmul.mubr.bf16.gmra.mrb[0].mxu0 %v4502
        %v4600 = vpop.f32.mrb[0].mxu0
        %v4601 = vadd.f32 %v4467, %v4600
        %v4602 = vpop.f32.mrb[0].mxu0
        %v4603 = vpop.f32.mrb[0].mxu0
        %v4604 = vadd.f32 %v4467, %v4603
        %v4605 = vpop.f32.mrb[0].mxu0
        %4606 = vdwg.mxu0
        %4607 = vst [vmem:[%s615] sm:$0xff] %v4545
        %4608 = vst [vmem:[%s615 + $0x8] sm:$0xff] %v4548
        %4609 = vst [vmem:[%s615 + $0x10] sm:$0xff] %v4553
        %4610 = vst [vmem:[%s615 + $0x18] sm:$0xff] %v4556
        %4611 = vst [vmem:[%s615 + $0x20] sm:$0xff] %v4561
        %4612 = vst [vmem:[%s615 + $0x28] sm:$0xff] %v4564
        %4613 = vst [vmem:[%s615 + $0x30] sm:$0xff] %v4569
        %4614 = vst [vmem:[%s615 + $0x38] sm:$0xff] %v4572
        %4615 = vst [vmem:[%s615 + $0x40] sm:$0xff] %v4577
        %4616 = vst [vmem:[%s615 + $0x48] sm:$0xff] %v4580
        %4617 = vst [vmem:[%s615 + $0x50] sm:$0xff] %v4585
        %4618 = vst [vmem:[%s615 + $0x58] sm:$0xff] %v4588
        %4619 = vst [vmem:[%s615 + $0x60] sm:$0xff] %v4593
        %4620 = vst [vmem:[%s615 + $0x68] sm:$0xff] %v4596
        %4621 = vst [vmem:[%s615 + $0x70] sm:$0xff] %v4601
        %4622 = vst [vmem:[%s615 + $0x78] sm:$0xff] %v4604
        %s4623 = smul.u32 16, %s14
        %p4624 = scmp.lt.s32.totalorder %s4623, 31
        %s4625 = scalar_select %p4624, %s4623, 31
        %s4626 = smul.addr %s4625, 8
        %s4627 = scalar_lea.vmem %s3, %s4626
        // Predicated region
        $region74: #{calc_action_batched.1} parent=68 // pred_check
          %p4628 = pneg %p105
        $region75: #{calc_action_batched.1} parent=68 // pred_check_branch
          %4630 = sbr.rel (%p4628) target = $region77
        $region76: #{calc_action_batched.1} parent=68 // pred_region
          %s4631 = smul.u32 16, %s14
        $region77: #{calc_action_batched.1} parent=68 // pred_fallthru
          _
      $region69: #{calc_action_batched.1} parent=5 // pred_fallthru
        _
      %p4632 = scmp.le.s32.totalorder 2, %s9
      // Predicated region
      $region78: #{calc_action_batched.1} parent=5 // pred_check
        %p4633 = pneg %p4632
      $region79: #{calc_action_batched.1} parent=5 // pred_check_branch
        %4635 = sbr.rel (%p4633) target = $region81
      $region80: #{calc_action_batched.1} parent=5 // pred_region
        %s4636 = ssub.s32 %s9, 2
        // Predicated region
        $region82: #{calc_action_batched.1} parent=80 // pred_check
          %p4637 = pneg %p111
        $region83: #{calc_action_batched.1} parent=80 // pred_check_branch
          %4639 = sbr.rel (%p4637) target = $region85
        $region84: #{calc_action_batched.1} parent=80 // pred_region
          %s4640 = smul.u32 16, %s15
          %p4641 = scmp.lt.s32.totalorder %s4640, 31
          %s4642 = scalar_select %p4641, %s4640, 31
          %s4643 = smul.addr %s4642, 8
          %s4644 = scalar_lea.vmem %s3, %s4643
        $region85: #{calc_action_batched.1} parent=80 // pred_fallthru
          _
      $region81: #{calc_action_batched.1} parent=5 // pred_fallthru
        _
    $region6: #{calc_action_batched.1} parent=1 // loop_footer
      %s13 = sadd.s32 1, %s9
    $region7: #{calc_action_batched.1} parent=1 // loop_footer_branch
      %8 = sbr.rel target = $region3
    $region8: #{calc_action_batched.1} parent=1 // loop_exit
      _

</llo_original>
